<compile_context>
chip_gen: v7x
topology: tpu7x:2x2x1
jax: 0.10.0
libtpu: 0.0.40
codegen_flags: <defaults>
</compile_context>

<pallas_src>
import jax
import jax.numpy as jnp
from jax.experimental import pallas as pl
from jax.experimental.pallas import tpu as pltpu

EPS = 1e-5  # PyTorch BatchNorm2d default


def cnn_block_kernel(xp_ref, w_ref, gamma_ref, beta_ref, out_ref,
                     conv_sc, sum_sc, sq_sc, scale_sc, shift_sc):
    # xp_ref    : (1, H+2, W+2, Cin)   one padded image (auto-pipelined over the image grid axis)
    # w_ref     : (9*Cin, Cout)        im2col-ordered conv weights (resident)
    # gamma/beta: (1, Cout)            BN affine params (resident)
    # out_ref   : (1, Ho, Wo, Cout)    per-image output block (written in phase 1)
    # conv_sc   : (N, H*W, Cout) f32   per-image conv results, persist across grid iterations
    # sum_sc/sq_sc     : (1, Cout) f32 running per-channel sum / sum-of-squares
    # scale_sc/shift_sc: (1, Cout) f32 finalized BN scale / shift (computed once at p==1, n==0)
    p = pl.program_id(0)          # 0: conv + batch-stat accumulation, 1: BN + ReLU + pool + store
    n = pl.program_id(1)          # image index within the batch
    _, Hp, Wp, Cin = xp_ref.shape
    H, W = Hp - 2, Wp - 2
    _, Ho, Wo, Cout = out_ref.shape
    N = conv_sc.shape[0]

    # ---------------- phase 0: Conv 3x3 (stride 1, pre-padded input) + batch statistics --------
    @pl.when(p == 0)
    def _conv_and_stats():
        x = xp_ref[0]                                                          # (Hp, Wp, Cin)
        rows = [jnp.concatenate([x[kh:kh + H, kw:kw + W, :] for kw in range(3)], axis=-1)
                for kh in range(3)]                                            # each (H, W, 3*Cin)
        patch = jnp.concatenate(rows, axis=-1).reshape(H * W, 9 * Cin)         # (H*W, 9*Cin)
        conv = jnp.dot(patch, w_ref[...], preferred_element_type=jnp.float32)  # (H*W, Cout)
        conv_sc[n] = conv
        # NOTE: conv bias intentionally omitted -- a per-channel constant cancels exactly under
        # training-mode BatchNorm's batch-mean subtraction.

        @pl.when(n == 0)
        def _():
            sum_sc[...] = jnp.zeros_like(sum_sc)
            sq_sc[...] = jnp.zeros_like(sq_sc)

        sum_sc[...] += jnp.sum(conv, axis=0, keepdims=True)
        sq_sc[...] += jnp.sum(conv * conv, axis=0, keepdims=True)

    # ---------------- phase 1: finalize BN once, then fused BN + ReLU + 2x2 max-pool per image --
    @pl.when(p == 1)
    def _bn_relu_pool():
        @pl.when(n == 0)
        def _():
            inv_cnt = jnp.float32(1.0 / (N * H * W))           # static, no runtime divide
            mean = sum_sc[...] * inv_cnt                       # (1, Cout)
            var = sq_sc[...] * inv_cnt - mean * mean           # biased batch variance
            scale = gamma_ref[...] * jax.lax.rsqrt(var + EPS)  # (1, Cout)
            scale_sc[...] = scale
            shift_sc[...] = beta_ref[...] - mean * scale

        y = jnp.maximum(conv_sc[n] * scale_sc[...] + shift_sc[...], 0.0)   # BN + ReLU, (H*W, Cout)
        y = jnp.max(y.reshape(H * Wo, 2, Cout), axis=1)        # pool along W (adjacent pairs)
        y = jnp.max(y.reshape(Ho, 2, Wo, Cout), axis=1)        # pool along H
        out_ref[0] = y.astype(out_ref.dtype)                   # single store per image


def cnn_block(x_nchw, w_hwio, b, gamma, beta):
    """Forward pass of CNNBlock. x_nchw: (N, Cin, H, W). Returns (N, Cout, H//2, W//2)."""
    x = jnp.transpose(x_nchw, (0, 2, 3, 1)).astype(jnp.float32)     # NHWC
    xp = jnp.pad(x, ((0, 0), (1, 1), (1, 1), (0, 0)))               # conv padding = 1
    N, Hp, Wp, Cin = xp.shape
    H, W = Hp - 2, Wp - 2
    assert H % 2 == 0 and W % 2 == 0, "MaxPool2d(2,2) expects even H and W"
    Cout = w_hwio.shape[-1]
    Ho, Wo = H // 2, W // 2

    # (KH, KW, Cin, Cout) -> (9*Cin, Cout); row order matches the in-kernel im2col concat order.
    w_flat = w_hwio.reshape(9 * Cin, Cout).astype(jnp.float32)
    g2 = gamma.reshape(1, Cout).astype(jnp.float32)
    be2 = beta.reshape(1, Cout).astype(jnp.float32)
    del b  # cancels exactly under training-mode BatchNorm (see kernel note)

    out_nhwc = pl.pallas_call(
        cnn_block_kernel,
        out_shape=jax.ShapeDtypeStruct((N, Ho, Wo, Cout), jnp.float32),
        grid=(2, N),                                                 # (phase, image)
        in_specs=[
            # per-image padded input; pinned to the last block during phase 1 -> no extra DMAs
            pl.BlockSpec((1, Hp, Wp, Cin),
                         lambda p, n: ((1 - p) * n + p * (N - 1), 0, 0, 0)),
            pl.BlockSpec((9 * Cin, Cout), lambda p, n: (0, 0)),      # weights resident
            pl.BlockSpec((1, Cout), lambda p, n: (0, 0)),
            pl.BlockSpec((1, Cout), lambda p, n: (0, 0)),
        ],
        # per-image output block; p*n keeps it at block 0 through phase 0 (no writeback of junk),
        # then advances one image per phase-1 step -> exactly one pipelined writeback per image.
        out_specs=pl.BlockSpec((1, Ho, Wo, Cout), lambda p, n: (p * n, 0, 0, 0)),
        scratch_shapes=[
            pltpu.VMEM((N, H * W, Cout), jnp.float32),   # cached conv results
            pltpu.VMEM((1, Cout), jnp.float32),          # running sum
            pltpu.VMEM((1, Cout), jnp.float32),          # running sum of squares
            pltpu.VMEM((1, Cout), jnp.float32),          # finalized BN scale
            pltpu.VMEM((1, Cout), jnp.float32),          # finalized BN shift
        ],
        compiler_params=pltpu.CompilerParams(
            dimension_semantics=("arbitrary", "arbitrary"),   # both axes carry the BN-stat dependency
        ),
    )(xp, w_flat, g2, be2)
    return jnp.transpose(out_nhwc, (0, 3, 1, 2))                    # back to NCHW


def reference(x_nchw, w_hwio, b, gamma, beta):
    """Pure-JAX reference mirroring the PyTorch module (training-mode BatchNorm)."""
    x = jnp.transpose(x_nchw, (0, 2, 3, 1)).astype(jnp.float32)
    y = jax.lax.conv_general_dilated(
        x, w_hwio.astype(jnp.float32), window_strides=(1, 1),
        padding=((1, 1), (1, 1)), dimension_numbers=("NHWC", "HWIO", "NHWC"),
        precision=jax.lax.Precision.HIGHEST) + b.reshape(1, 1, 1, -1)
    mean = jnp.mean(y, axis=(0, 1, 2), keepdims=True)
    var = jnp.mean((y - mean) ** 2, axis=(0, 1, 2), keepdims=True)
    y = (y - mean) * jax.lax.rsqrt(var + EPS) * gamma.reshape(1, 1, 1, -1) + beta.reshape(1, 1, 1, -1)
    y = jnp.maximum(y, 0.0)
    y = jax.lax.reduce_window(y, -jnp.inf, jax.lax.max, (1, 2, 2, 1), (1, 2, 2, 1), "VALID")
    return jnp.transpose(y, (0, 3, 1, 2))


if __name__ == "__main__":
    # Small shapes consistent with the module: N=2, Cin=4, Cout=8, H=W=16.
    key = jax.random.PRNGKey(0)
    kx, kw, kb, kg, kbe = jax.random.split(key, 5)
    N, Cin, Cout, H, W = 2, 4, 8, 16, 16

    x = jax.random.normal(kx, (N, Cin, H, W), dtype=jnp.float32)
    w = jax.random.normal(kw, (3, 3, Cin, Cout), dtype=jnp.float32) * 0.1   # HWIO
    b = jax.random.normal(kb, (Cout,), dtype=jnp.float32) * 0.1
    gamma = 1.0 + 0.1 * jax.random.normal(kg, (Cout,), dtype=jnp.float32)
    beta = 0.1 * jax.random.normal(kbe, (Cout,), dtype=jnp.float32)
    # TODO(synk): BatchNorm running-stat buffer updates (training-time side effect) are not
    # modeled; output semantics match PyTorch's default train()-mode batch-statistic normalization.

    out = jax.block_until_ready(cnn_block(x, w, b, gamma, beta))
    ref = jax.block_until_ready(reference(x, w, b, gamma, beta))

    assert out.shape == (N, Cout, H // 2, W // 2), out.shape
    max_err = float(jnp.max(jnp.abs(out - ref)))
    assert jnp.allclose(out, ref, rtol=1e-2, atol=1e-2), max_err
    print("KERNEL_OK")
</pallas_src>

<mosaic_0001>
module attributes {stable_mosaic.version = 11 : i64} {
  func.func @cnn_block_kernel(%arg0: i32, %arg1: i32, %arg2: memref<1x18x18x4xf32, #tpu.memory_space<vmem>>, %arg3: memref<36x8xf32, #tpu.memory_space<vmem>>, %arg4: memref<1x8xf32, #tpu.memory_space<vmem>>, %arg5: memref<1x8xf32, #tpu.memory_space<vmem>>, %arg6: memref<1x8x8x8xf32, #tpu.memory_space<vmem>>, %arg7: memref<2x256x8xf32, #tpu.memory_space<vmem>>, %arg8: memref<1x8xf32, #tpu.memory_space<vmem>>, %arg9: memref<1x8xf32, #tpu.memory_space<vmem>>, %arg10: memref<1x8xf32, #tpu.memory_space<vmem>>, %arg11: memref<1x8xf32, #tpu.memory_space<vmem>>) attributes {dimension_semantics = [#tpu.dimension_semantics<arbitrary>, #tpu.dimension_semantics<arbitrary>], iteration_bounds = array<i64: 2, 2>, scalar_prefetch = 0 : i64, scratch_operands = 5 : i64, tpu.core_type = #tpu.core_type<tc>, window_params = [{transform_indices = @transform_0, window_bounds = array<i64: 1, 18, 18, 4>}, {pipeline_mode = #tpu.pipeline_mode<synchronous>, transform_indices = @transform_1, window_bounds = array<i64: 36, 8>}, {pipeline_mode = #tpu.pipeline_mode<synchronous>, transform_indices = @transform_2, window_bounds = array<i64: 1, 8>}, {pipeline_mode = #tpu.pipeline_mode<synchronous>, transform_indices = @transform_3, window_bounds = array<i64: 1, 8>}, {transform_indices = @transform_4, window_bounds = array<i64: 1, 8, 8, 8>}]} {
    %c0_i32 = arith.constant 0 : i32
    %0 = arith.cmpi eq, %arg0, %c0_i32 : i32
    %1 = arith.extui %0 : i1 to i32
    %c0_i32_0 = arith.constant 0 : i32
    %2 = arith.cmpi ne, %1, %c0_i32_0 : i32
    scf.if %2 {
      %c0 = arith.constant 0 : index
      %c0_2 = arith.constant 0 : index
      %c0_3 = arith.constant 0 : index
      %c0_4 = arith.constant 0 : index
      %6 = vector.load %arg2[%c0, %c0_2, %c0_3, %c0_4] : memref<1x18x18x4xf32, #tpu.memory_space<vmem>>, vector<1x18x18x4xf32>
      %7 = vector.shape_cast %6 : vector<1x18x18x4xf32> to vector<18x18x4xf32>
      %8 = vector.extract_strided_slice %7 {offsets = [0, 0, 0], sizes = [16, 16, 4], strides = [1, 1, 1]} : vector<18x18x4xf32> to vector<16x16x4xf32>
      %9 = vector.extract_strided_slice %7 {offsets = [0, 1, 0], sizes = [16, 16, 4], strides = [1, 1, 1]} : vector<18x18x4xf32> to vector<16x16x4xf32>
      %10 = vector.extract_strided_slice %7 {offsets = [0, 2, 0], sizes = [16, 16, 4], strides = [1, 1, 1]} : vector<18x18x4xf32> to vector<16x16x4xf32>
      %11 = tpu.concatenate %8, %9, %10 in 2 : vector<16x16x4xf32>, vector<16x16x4xf32>, vector<16x16x4xf32> -> vector<16x16x12xf32>
      %12 = vector.extract_strided_slice %7 {offsets = [1, 0, 0], sizes = [16, 16, 4], strides = [1, 1, 1]} : vector<18x18x4xf32> to vector<16x16x4xf32>
      %13 = vector.extract_strided_slice %7 {offsets = [1, 1, 0], sizes = [16, 16, 4], strides = [1, 1, 1]} : vector<18x18x4xf32> to vector<16x16x4xf32>
      %14 = vector.extract_strided_slice %7 {offsets = [1, 2, 0], sizes = [16, 16, 4], strides = [1, 1, 1]} : vector<18x18x4xf32> to vector<16x16x4xf32>
      %15 = tpu.concatenate %12, %13, %14 in 2 : vector<16x16x4xf32>, vector<16x16x4xf32>, vector<16x16x4xf32> -> vector<16x16x12xf32>
      %16 = vector.extract_strided_slice %7 {offsets = [2, 0, 0], sizes = [16, 16, 4], strides = [1, 1, 1]} : vector<18x18x4xf32> to vector<16x16x4xf32>
      %17 = vector.extract_strided_slice %7 {offsets = [2, 1, 0], sizes = [16, 16, 4], strides = [1, 1, 1]} : vector<18x18x4xf32> to vector<16x16x4xf32>
      %18 = vector.extract_strided_slice %7 {offsets = [2, 2, 0], sizes = [16, 16, 4], strides = [1, 1, 1]} : vector<18x18x4xf32> to vector<16x16x4xf32>
      %19 = tpu.concatenate %16, %17, %18 in 2 : vector<16x16x4xf32>, vector<16x16x4xf32>, vector<16x16x4xf32> -> vector<16x16x12xf32>
      %20 = tpu.concatenate %11, %15, %19 in 2 : vector<16x16x12xf32>, vector<16x16x12xf32>, vector<16x16x12xf32> -> vector<16x16x36xf32>
      %21 = vector.shape_cast %20 : vector<16x16x36xf32> to vector<256x36xf32>
      %c0_5 = arith.constant 0 : index
      %c0_6 = arith.constant 0 : index
      %22 = vector.load %arg3[%c0_5, %c0_6] : memref<36x8xf32, #tpu.memory_space<vmem>>, vector<36x8xf32>
      %cst = arith.constant dense<0.000000e+00> : vector<256x8xf32>
      %23 = tpu.matmul %21, %22, %cst {dimension_numbers = #tpu.dot_dimension_numbers<[1], [0], [0], [1], [0, 0, 1, 1], [], []>} : vector<256x36xf32>, vector<36x8xf32>, vector<256x8xf32> -> vector<256x8xf32>
      %24 = arith.index_cast %arg1 : i32 to index
      %c0_7 = arith.constant 0 : index
      %c0_8 = arith.constant 0 : index
      %25 = vector.load %arg7[%24, %c0_7, %c0_8] : memref<2x256x8xf32, #tpu.memory_space<vmem>>, vector<1x256x8xf32>
      %26 = vector.shape_cast %25 : vector<1x256x8xf32> to vector<256x8xf32>
      %27 = vector.shape_cast %23 : vector<256x8xf32> to vector<1x256x8xf32>
      tpu.vector_store %arg7[%24, %c0_7, %c0_8], %27 {strides = array<i32>} : memref<2x256x8xf32, #tpu.memory_space<vmem>>, vector<1x256x8xf32>,
      %c0_i32_9 = arith.constant 0 : i32
      %28 = arith.cmpi eq, %arg1, %c0_i32_9 : i32
      %29 = arith.extui %28 : i1 to i32
      %c0_i32_10 = arith.constant 0 : i32
      %30 = arith.cmpi ne, %29, %c0_i32_10 : i32
      scf.if %30 {
        %cst_21 = arith.constant 0.000000e+00 : f32
        %42 = vector.broadcast %cst_21 : f32 to vector<1x8xf32>
        %c0_22 = arith.constant 0 : index
        %c0_23 = arith.constant 0 : index
        %43 = vector.load %arg8[%c0_22, %c0_23] : memref<1x8xf32, #tpu.memory_space<vmem>>, vector<1x8xf32>
        tpu.vector_store %arg8[%c0_22, %c0_23], %42 {strides = array<i32>} : memref<1x8xf32, #tpu.memory_space<vmem>>, vector<1x8xf32>,
        %cst_24 = arith.constant 0.000000e+00 : f32
        %44 = vector.broadcast %cst_24 : f32 to vector<1x8xf32>
        %c0_25 = arith.constant 0 : index
        %c0_26 = arith.constant 0 : index
        %45 = vector.load %arg9[%c0_25, %c0_26] : memref<1x8xf32, #tpu.memory_space<vmem>>, vector<1x8xf32>
        tpu.vector_store %arg9[%c0_25, %c0_26], %44 {strides = array<i32>} : memref<1x8xf32, #tpu.memory_space<vmem>>, vector<1x8xf32>,
      } else {
      }
      %c0_11 = arith.constant 0 : index
      %c0_12 = arith.constant 0 : index
      %31 = vector.load %arg8[%c0_11, %c0_12] : memref<1x8xf32, #tpu.memory_space<vmem>>, vector<1x8xf32>
      %cst_13 = arith.constant dense<0.000000e+00> : vector<8xf32>
      %32 = vector.multi_reduction <add>, %23, %cst_13 [0] : vector<256x8xf32> to vector<8xf32>
      %33 = vector.shape_cast %32 : vector<8xf32> to vector<1x8xf32>
      %34 = arith.addf %31, %33 : vector<1x8xf32>
      %c0_14 = arith.constant 0 : index
      %c0_15 = arith.constant 0 : index
      %35 = vector.load %arg8[%c0_14, %c0_15] : memref<1x8xf32, #tpu.memory_space<vmem>>, vector<1x8xf32>
      tpu.vector_store %arg8[%c0_14, %c0_15], %34 {strides = array<i32>} : memref<1x8xf32, #tpu.memory_space<vmem>>, vector<1x8xf32>,
      %c0_16 = arith.constant 0 : index
      %c0_17 = arith.constant 0 : index
      %36 = vector.load %arg9[%c0_16, %c0_17] : memref<1x8xf32, #tpu.memory_space<vmem>>, vector<1x8xf32>
      %37 = arith.mulf %23, %23 : vector<256x8xf32>
      %cst_18 = arith.constant dense<0.000000e+00> : vector<8xf32>
      %38 = vector.multi_reduction <add>, %37, %cst_18 [0] : vector<256x8xf32> to vector<8xf32>
      %39 = vector.shape_cast %38 : vector<8xf32> to vector<1x8xf32>
      %40 = arith.addf %36, %39 : vector<1x8xf32>
      %c0_19 = arith.constant 0 : index
      %c0_20 = arith.constant 0 : index
      %41 = vector.load %arg9[%c0_19, %c0_20] : memref<1x8xf32, #tpu.memory_space<vmem>>, vector<1x8xf32>
      tpu.vector_store %arg9[%c0_19, %c0_20], %40 {strides = array<i32>} : memref<1x8xf32, #tpu.memory_space<vmem>>, vector<1x8xf32>,
    } else {
    }
    %c1_i32 = arith.constant 1 : i32
    %3 = arith.cmpi eq, %arg0, %c1_i32 : i32
    %4 = arith.extui %3 : i1 to i32
    %c0_i32_1 = arith.constant 0 : i32
    %5 = arith.cmpi ne, %4, %c0_i32_1 : i32
    scf.if %5 {
      %c0_i32_2 = arith.constant 0 : i32
      %6 = arith.cmpi eq, %arg1, %c0_i32_2 : i32
      %7 = arith.extui %6 : i1 to i32
      %c0_i32_3 = arith.constant 0 : i32
      %8 = arith.cmpi ne, %7, %c0_i32_3 : i32
      scf.if %8 {
        %c0_15 = arith.constant 0 : index
        %c0_16 = arith.constant 0 : index
        %27 = vector.load %arg8[%c0_15, %c0_16] : memref<1x8xf32, #tpu.memory_space<vmem>>, vector<1x8xf32>
        %cst_17 = arith.constant 0.001953125 : f32
        %28 = vector.broadcast %cst_17 : f32 to vector<1x8xf32>
        %29 = arith.mulf %27, %28 : vector<1x8xf32>
        %c0_18 = arith.constant 0 : index
        %c0_19 = arith.constant 0 : index
        %30 = vector.load %arg9[%c0_18, %c0_19] : memref<1x8xf32, #tpu.memory_space<vmem>>, vector<1x8xf32>
        %cst_20 = arith.constant 0.001953125 : f32
        %31 = vector.broadcast %cst_20 : f32 to vector<1x8xf32>
        %32 = arith.mulf %30, %31 : vector<1x8xf32>
        %33 = arith.mulf %29, %29 : vector<1x8xf32>
        %34 = arith.subf %32, %33 : vector<1x8xf32>
        %c0_21 = arith.constant 0 : index
        %c0_22 = arith.constant 0 : index
        %35 = vector.load %arg4[%c0_21, %c0_22] : memref<1x8xf32, #tpu.memory_space<vmem>>, vector<1x8xf32>
        %cst_23 = arith.constant 9.99999974E-6 : f32
        %36 = vector.broadcast %cst_23 : f32 to vector<1x8xf32>
        %37 = arith.addf %34, %36 : vector<1x8xf32>
        %38 = math.rsqrt %37 : vector<1x8xf32>
        %39 = arith.mulf %35, %38 : vector<1x8xf32>
        %c0_24 = arith.constant 0 : index
        %c0_25 = arith.constant 0 : index
        %40 = vector.load %arg10[%c0_24, %c0_25] : memref<1x8xf32, #tpu.memory_space<vmem>>, vector<1x8xf32>
        tpu.vector_store %arg10[%c0_24, %c0_25], %39 {strides = array<i32>} : memref<1x8xf32, #tpu.memory_space<vmem>>, vector<1x8xf32>,
        %c0_26 = arith.constant 0 : index
        %c0_27 = arith.constant 0 : index
        %41 = vector.load %arg5[%c0_26, %c0_27] : memref<1x8xf32, #tpu.memory_space<vmem>>, vector<1x8xf32>
        %42 = arith.mulf %29, %39 : vector<1x8xf32>
        %43 = arith.subf %41, %42 : vector<1x8xf32>
        %c0_28 = arith.constant 0 : index
        %c0_29 = arith.constant 0 : index
        %44 = vector.load %arg11[%c0_28, %c0_29] : memref<1x8xf32, #tpu.memory_space<vmem>>, vector<1x8xf32>
        tpu.vector_store %arg11[%c0_28, %c0_29], %43 {strides = array<i32>} : memref<1x8xf32, #tpu.memory_space<vmem>>, vector<1x8xf32>,
      } else {
      }
      %9 = arith.index_cast %arg1 : i32 to index
      %c0 = arith.constant 0 : index
      %c0_4 = arith.constant 0 : index
      %10 = vector.load %arg7[%9, %c0, %c0_4] : memref<2x256x8xf32, #tpu.memory_space<vmem>>, vector<1x256x8xf32>
      %11 = vector.shape_cast %10 : vector<1x256x8xf32> to vector<256x8xf32>
      %c0_5 = arith.constant 0 : index
      %c0_6 = arith.constant 0 : index
      %12 = vector.load %arg10[%c0_5, %c0_6] : memref<1x8xf32, #tpu.memory_space<vmem>>, vector<1x8xf32>
      %13 = vector.broadcast %12 : vector<1x8xf32> to vector<256x8xf32>
      %14 = arith.mulf %11, %13 : vector<256x8xf32>
      %c0_7 = arith.constant 0 : index
      %c0_8 = arith.constant 0 : index
      %15 = vector.load %arg11[%c0_7, %c0_8] : memref<1x8xf32, #tpu.memory_space<vmem>>, vector<1x8xf32>
      %16 = vector.broadcast %15 : vector<1x8xf32> to vector<256x8xf32>
      %17 = arith.addf %14, %16 : vector<256x8xf32>
      %cst = arith.constant 0.000000e+00 : f32
      %18 = vector.broadcast %cst : f32 to vector<256x8xf32>
      %19 = arith.maximumf %17, %18 : vector<256x8xf32>
      %20 = vector.shape_cast %19 : vector<256x8xf32> to vector<128x2x8xf32>
      %cst_9 = arith.constant dense<0xFF800000> : vector<128x8xf32>
      %21 = vector.multi_reduction <maximumf>, %20, %cst_9 [1] : vector<128x2x8xf32> to vector<128x8xf32>
      %22 = vector.shape_cast %21 : vector<128x8xf32> to vector<8x2x8x8xf32>
      %cst_10 = arith.constant dense<0xFF800000> : vector<8x8x8xf32>
      %23 = vector.multi_reduction <maximumf>, %22, %cst_10 [1] : vector<8x2x8x8xf32> to vector<8x8x8xf32>
      %c0_11 = arith.constant 0 : index
      %c0_12 = arith.constant 0 : index
      %c0_13 = arith.constant 0 : index
      %c0_14 = arith.constant 0 : index
      %24 = vector.load %arg6[%c0_11, %c0_12, %c0_13, %c0_14] : memref<1x8x8x8xf32, #tpu.memory_space<vmem>>, vector<1x8x8x8xf32>
      %25 = vector.shape_cast %24 : vector<1x8x8x8xf32> to vector<8x8x8xf32>
      %26 = vector.shape_cast %23 : vector<8x8x8xf32> to vector<1x8x8x8xf32>
      tpu.vector_store %arg6[%c0_11, %c0_12, %c0_13, %c0_14], %26 {strides = array<i32>} : memref<1x8x8x8xf32, #tpu.memory_space<vmem>>, vector<1x8x8x8xf32>,
    } else {
    }
    return
  }
  func.func @transform_0(%arg0: i32, %arg1: i32) -> (i32, i32, i32, i32) {
    %c1_i32 = arith.constant 1 : i32
    %0 = arith.subi %c1_i32, %arg0 : i32
    %1 = arith.muli %0, %arg1 : i32
    %c1_i32_0 = arith.constant 1 : i32
    %2 = arith.muli %arg0, %c1_i32_0 : i32
    %3 = arith.addi %1, %2 : i32
    %c0_i32 = arith.constant 0 : i32
    %c0_i32_1 = arith.constant 0 : i32
    %c0_i32_2 = arith.constant 0 : i32
    %c0_i32_3 = arith.constant 0 : i32
    return %3, %c0_i32, %c0_i32_1, %c0_i32_2 : i32, i32, i32, i32
  }
  func.func @transform_1(%arg0: i32, %arg1: i32) -> (i32, i32) {
    %c0_i32 = arith.constant 0 : i32
    %c0_i32_0 = arith.constant 0 : i32
    %c0_i32_1 = arith.constant 0 : i32
    return %c0_i32, %c0_i32_0 : i32, i32
  }
  func.func @transform_2(%arg0: i32, %arg1: i32) -> (i32, i32) {
    %c0_i32 = arith.constant 0 : i32
    %c0_i32_0 = arith.constant 0 : i32
    %c0_i32_1 = arith.constant 0 : i32
    return %c0_i32, %c0_i32_0 : i32, i32
  }
  func.func @transform_3(%arg0: i32, %arg1: i32) -> (i32, i32) {
    %c0_i32 = arith.constant 0 : i32
    %c0_i32_0 = arith.constant 0 : i32
    %c0_i32_1 = arith.constant 0 : i32
    return %c0_i32, %c0_i32_0 : i32, i32
  }
  func.func @transform_4(%arg0: i32, %arg1: i32) -> (i32, i32, i32, i32) {
    %0 = arith.muli %arg0, %arg1 : i32
    %c0_i32 = arith.constant 0 : i32
    %c0_i32_0 = arith.constant 0 : i32
    %c0_i32_1 = arith.constant 0 : i32
    %c0_i32_2 = arith.constant 0 : i32
    return %0, %c0_i32, %c0_i32_0, %c0_i32_1 : i32, i32, i32, i32
  }
}

</mosaic_0001>

<llo_original>
// kernel: tpu_custom_call.1
$region0: #{tpu_custom_call.1}
  #allocation0 [shape = 'u32[]', space=smem, size = 0x4, offset = 0x4, fixed_abs, tag = 'smem constant byte address 0x4 - core index']
  #allocation1 [shape = 'u32[144,128]{1,0:T(1,128)}', space=vmem, size = 0x12000, scoped, tag = 'internal scratch']
  #allocation2 [shape = 'f32[2,256,8]{2,1,0:T(8,128)}', space=vmem, size = 0x40000, scoped, tag = 'scratch operand']
  #allocation3 [shape = 'f32[1,8]{1,0:T(1,128)}', space=vmem, size = 0x200, scoped, tag = 'scratch operand']
  #allocation4 [shape = 'f32[1,8]{1,0:T(1,128)}', space=vmem, size = 0x200, scoped, tag = 'scratch operand']
  #allocation5 [shape = 'f32[1,8]{1,0:T(1,128)}', space=vmem, size = 0x200, scoped, tag = 'scratch operand']
  #allocation6 [shape = 'f32[1,8]{1,0:T(1,128)}', space=vmem, size = 0x200, scoped, tag = 'scratch operand']
  %s0 = inlined_call_operand.vmem [shape: f32[2,18,18,4], index: 0, kind: input, shape index: {}]
  %s1 = inlined_call_operand.vmem [shape: f32[36,8], index: 1, kind: input, shape index: {}]
  %s2 = inlined_call_operand.vmem [shape: f32[1,8], index: 2, kind: input, shape index: {}]
  %s3 = inlined_call_operand.vmem [shape: f32[1,8], index: 3, kind: input, shape index: {}]
  %s4 = inlined_call_operand.hbm [shape: f32[2,8,8,8], index: 4, kind: output, shape index: {}]
  %s5 = sld [smem:[#allocation0]]
  $region65: #{tpu_custom_call.1} parent=0
    _
  %s7 = ssub.s32 1, %s5
  %s8 = scalar_select 0, %s7, %s5
  $region1: #{tpu_custom_call.1} parent=0
    #allocation7 [shape = 'u8[65536]{0}', space=vmem, size = 0x10000, scoped, tag = 'output window, operand 0']
    #allocation8 [shape = 's32[2]{0}', space=sflag, size = 0x8, scoped, tag = 'scoped memory for tpu_custom_call.1']
    %9 = vsyncpa [#allocation8], 0
    %s10 = scalar_lea.sflag [#allocation8], 1
    %11 = vsyncpa %s10, 0
    loop: start=0, step=1, limit=6
    $region2: #{tpu_custom_call.1} parent=1 // loop_pre_header
      _
    $region3: #{tpu_custom_call.1} parent=1 // loop_header
      %s13 = sphi 0, %s17
      %p14 = scmp.ge.s32.totalorder %s13, 6
      %s20 = sphi 0, %s32
      %s21 = sphi 0, %s28
      %s22 = sphi 0, %s20
      %s23 = sphi 0, %s21
      %s24 = sphi 0, %s22
      %s25 = sphi 0, %s23
      %s41 = sphi 0, %s43
      %s44 = sphi 0, %s41
      %s45 = sphi 0, %s44
      %s61 = sphi 0, %s45
      %s65 = sphi 0, %s65
      %s67 = sphi 0, %s65
      %s68 = sphi 0, %s67
      %s82 = sphi 0, %s68
      %s86 = sphi 0, %s86
      %s88 = sphi 0, %s86
      %s89 = sphi 0, %s88
      %s103 = sphi 0, %s89
      %s107 = sphi 0, %s107
      %s109 = sphi 0, %s107
      %s110 = sphi 0, %s109
      %s124 = sphi 0, %s110
      %s132 = sphi 0, %s134
      %s135 = sphi 0, %s132
      %s136 = sphi 0, %s135
      %s152 = sphi 0, %s136
    $region4: #{tpu_custom_call.1} parent=1 // loop_header_branch
      %16 = sbr.rel (%p14) target = $region8
    $region5: #{tpu_custom_call.1} parent=1 // loop_body
      %s18 = ssub.s32 %s13, 1
      %s19 = ssub.s32 %s13, 2
      %s26 = sadd.s32 1, %s21
      %p27 = scmp.ge.s32.totalorder %s26, 2
      %s28 = scalar_select %p27, 0, %s26
      %s29 = sadd.s32 1, %s20
      %s30 = scalar_select %p27, %s29, %s20
      %p31 = scmp.ge.s32.totalorder %s30, 2
      %s32 = scalar_select %p31, 0, %s30
      %s33 = ssub.s32 1, %s20
      %s34 = smul.u32 %s33, %s21
      %s35 = sadd.s32 %s34, %s20
      %s36 = ssub.s32 1, %s32
      %s37 = smul.u32 %s36, %s28
      %s38 = sadd.s32 %s37, %s32
      %s39 = ssub.s32 %s35, %s38
      %p40 = scmp.eq.s32.totalorder %s39, 0
      %s42 = sadd.s32 %s41, 1
      %s43 = scalar_select %p40, %s41, %s42
      %p46 = pneg %p40
      %p47 = scmp.eq.s32.totalorder %s13, 3
      %p48 = por %p46, %p47
      %p49 = scmp.ne.s32.totalorder %s41, %s44
      %p50 = scmp.eq.s32.totalorder %s13, 0
      %p51 = por %p49, %p50
      %p52 = scmp.ne.s32.totalorder %s41, %s44
      %p53 = scmp.eq.s32.totalorder %s18, 3
      %p54 = por %p52, %p53
      %p55 = scmp.ne.s32.totalorder %s44, %s45
      %p56 = scmp.eq.s32.totalorder %s18, 0
      %p57 = por %p55, %p56
      %p58 = scmp.ne.s32.totalorder %s44, %s45
      %p59 = scmp.eq.s32.totalorder %s19, 3
      %p60 = por %p58, %p59
      %p62 = scmp.ne.s32.totalorder %s45, %s61
      %p63 = scmp.eq.s32.totalorder %s19, 0
      %p64 = por %p62, %p63
      %s66 = sadd.s32 %s65, 1
      %p69 = scmp.eq.s32.totalorder %s13, 3
      %p70 = scmp.ne.s32.totalorder %s65, %s67
      %p71 = scmp.eq.s32.totalorder %s13, 0
      %p72 = por %p70, %p71
      %p73 = scmp.ne.s32.totalorder %s65, %s67
      %p74 = scmp.eq.s32.totalorder %s18, 3
      %p75 = por %p73, %p74
      %p76 = scmp.ne.s32.totalorder %s67, %s68
      %p77 = scmp.eq.s32.totalorder %s18, 0
      %p78 = por %p76, %p77
      %p79 = scmp.ne.s32.totalorder %s67, %s68
      %p80 = scmp.eq.s32.totalorder %s19, 3
      %p81 = por %p79, %p80
      %p83 = scmp.ne.s32.totalorder %s68, %s82
      %p84 = scmp.eq.s32.totalorder %s19, 0
      %p85 = por %p83, %p84
      %s87 = sadd.s32 %s86, 1
      %p90 = scmp.eq.s32.totalorder %s13, 3
      %p91 = scmp.ne.s32.totalorder %s86, %s88
      %p92 = scmp.eq.s32.totalorder %s13, 0
      %p93 = por %p91, %p92
      %p94 = scmp.ne.s32.totalorder %s86, %s88
      %p95 = scmp.eq.s32.totalorder %s18, 3
      %p96 = por %p94, %p95
      %p97 = scmp.ne.s32.totalorder %s88, %s89
      %p98 = scmp.eq.s32.totalorder %s18, 0
      %p99 = por %p97, %p98
      %p100 = scmp.ne.s32.totalorder %s88, %s89
      %p101 = scmp.eq.s32.totalorder %s19, 3
      %p102 = por %p100, %p101
      %p104 = scmp.ne.s32.totalorder %s89, %s103
      %p105 = scmp.eq.s32.totalorder %s19, 0
      %p106 = por %p104, %p105
      %s108 = sadd.s32 %s107, 1
      %p111 = scmp.eq.s32.totalorder %s13, 3
      %p112 = scmp.ne.s32.totalorder %s107, %s109
      %p113 = scmp.eq.s32.totalorder %s13, 0
      %p114 = por %p112, %p113
      %p115 = scmp.ne.s32.totalorder %s107, %s109
      %p116 = scmp.eq.s32.totalorder %s18, 3
      %p117 = por %p115, %p116
      %p118 = scmp.ne.s32.totalorder %s109, %s110
      %p119 = scmp.eq.s32.totalorder %s18, 0
      %p120 = por %p118, %p119
      %p121 = scmp.ne.s32.totalorder %s109, %s110
      %p122 = scmp.eq.s32.totalorder %s19, 3
      %p123 = por %p121, %p122
      %p125 = scmp.ne.s32.totalorder %s110, %s124
      %p126 = scmp.eq.s32.totalorder %s19, 0
      %p127 = por %p125, %p126
      %s128 = smul.u32 %s20, %s21
      %s129 = smul.u32 %s32, %s28
      %s130 = ssub.s32 %s128, %s129
      %p131 = scmp.eq.s32.totalorder %s130, 0
      %s133 = sadd.s32 %s132, 1
      %s134 = scalar_select %p131, %s132, %s133
      %p137 = pneg %p131
      %p138 = scmp.eq.s32.totalorder %s13, 3
      %p139 = por %p137, %p138
      %p140 = scmp.ne.s32.totalorder %s132, %s135
      %p141 = scmp.eq.s32.totalorder %s13, 0
      %p142 = por %p140, %p141
      %p143 = scmp.ne.s32.totalorder %s132, %s135
      %p144 = scmp.eq.s32.totalorder %s18, 3
      %p145 = por %p143, %p144
      %p146 = scmp.ne.s32.totalorder %s135, %s136
      %p147 = scmp.eq.s32.totalorder %s18, 0
      %p148 = por %p146, %p147
      %p149 = scmp.ne.s32.totalorder %s135, %s136
      %p150 = scmp.eq.s32.totalorder %s19, 3
      %p151 = por %p149, %p150
      %p153 = scmp.ne.s32.totalorder %s136, %s152
      %p154 = scmp.eq.s32.totalorder %s19, 0
      %p155 = por %p153, %p154
      %p156 = scmp.le.s32.totalorder 1, %s13
      %p157 = scmp.lt.s32.totalorder %s13, 5
      %p158 = pnand %p156, %p157
      %p159 = pneg %p158
      // Predicated region
      $region9: #{tpu_custom_call.1} parent=5 // pred_check
        _
      $region10: #{tpu_custom_call.1} parent=5 // pred_check_branch
        %161 = sbr.rel (%p158) target = $region12
      $region11: #{tpu_custom_call.1} parent=5 // pred_region
        %s162 = ssub.s32 %s13, 1
        // Predicated region
        $region13: #{tpu_custom_call.1} parent=11 // pred_check
          %p163 = pneg %p78
        $region14: #{tpu_custom_call.1} parent=11 // pred_check_branch
          %165 = sbr.rel (%p163) target = $region16
        $region15: #{tpu_custom_call.1} parent=11 // pred_region
          _
        $region16: #{tpu_custom_call.1} parent=11 // pred_fallthru
          _
        // Predicated region
        $region17: #{tpu_custom_call.1} parent=11 // pred_check
          %p166 = pneg %p99
        $region18: #{tpu_custom_call.1} parent=11 // pred_check_branch
          %168 = sbr.rel (%p166) target = $region20
        $region19: #{tpu_custom_call.1} parent=11 // pred_region
          _
        $region20: #{tpu_custom_call.1} parent=11 // pred_fallthru
          _
        // Predicated region
        $region21: #{tpu_custom_call.1} parent=11 // pred_check
          %p169 = pneg %p120
        $region22: #{tpu_custom_call.1} parent=11 // pred_check_branch
          %171 = sbr.rel (%p169) target = $region24
        $region23: #{tpu_custom_call.1} parent=11 // pred_region
          _
        $region24: #{tpu_custom_call.1} parent=11 // pred_fallthru
          _
      $region12: #{tpu_custom_call.1} parent=5 // pred_fallthru
        _
      %p172 = scmp.lt.s32.totalorder %s13, 4
      // Predicated region
      $region25: #{tpu_custom_call.1} parent=5 // pred_check
        %p173 = pneg %p172
      $region26: #{tpu_custom_call.1} parent=5 // pred_check_branch
        %175 = sbr.rel (%p173) target = $region28
      $region27: #{tpu_custom_call.1} parent=5 // pred_region
        // Predicated region
        $region29: #{tpu_custom_call.1} parent=27 // pred_check
          %p176 = pneg %p51
        $region30: #{tpu_custom_call.1} parent=27 // pred_check_branch
          %178 = sbr.rel (%p176) target = $region32
        $region31: #{tpu_custom_call.1} parent=27 // pred_region
          %s179 = ssub.s32 1, %s20
          %s180 = smul.u32 %s179, %s21
          %s181 = sadd.s32 %s180, %s20
          %p182 = scmp.lt.s32.totalorder %s181, 1
          %s183 = scalar_select %p182, %s181, 1
          %s184 = smul.addr %s183, 54
          %s185 = smul.addr %s184, 8
          %s186 = scalar_lea.vmem %s0, %s185
          %s187 = ssub.s32 1, %s20
          %s188 = smul.u32 %s187, %s21
          %s189 = sadd.s32 %s188, %s20
        $region32: #{tpu_custom_call.1} parent=27 // pred_fallthru
          _
      $region28: #{tpu_custom_call.1} parent=5 // pred_fallthru
        _
      %p190 = scmp.le.s32.totalorder 1, %s13
      %p191 = scmp.lt.s32.totalorder %s13, 5
      %p192 = pnand %p190, %p191
      %p193 = pneg %p192
      // Predicated region
      $region33: #{tpu_custom_call.1} parent=5 // pred_check
        _
      $region34: #{tpu_custom_call.1} parent=5 // pred_check_branch
        %195 = sbr.rel (%p192) target = $region36
      $region35: #{tpu_custom_call.1} parent=5 // pred_region
        %s196 = ssub.s32 %s13, 1
        %s197 = ssub.s32 1, %s22
        %s198 = smul.u32 %s197, %s23
        %s199 = sadd.s32 %s198, %s22
        %p200 = scmp.lt.s32.totalorder %s199, 1
        %s201 = scalar_select %p200, %s199, 1
        %s202 = smul.addr %s201, 54
        %s203 = smul.addr %s202, 8
        %s204 = scalar_lea.vmem %s0, %s203
        %p205 = pneg %p57
        %p206 = pneg %p54
        %p207 = pneg %p78
        %p208 = pneg %p75
        %p209 = pneg %p99
        %p210 = pneg %p96
        %p211 = pneg %p120
        %p212 = pneg %p117
        %p213 = pneg %p148
        %p214 = pneg %p145
        %s215 = sand.u32 %s135, 1
        %s216 = scalar_lea.sflag [#allocation8], %s215
        %s217 = sand.u32 %s135, 1
        %s218 = smul.addr %s217, 64
        %s219 = scalar_lea.vmem [#allocation7], %s218
        %s220 = ssub.s32 1, %s22
        %s221 = smul.u32 %s220, %s23
        %s222 = sadd.s32 %s221, %s22
        %p223 = scmp.lt.s32.totalorder %s222, 1
        %s224 = scalar_select %p223, %s222, 1
        %s225 = smul.addr %s224, 54
        %s226 = smul.addr %s225, 8
        %s227 = scalar_lea.vmem %s0, %s226
        %s228 = ssub.s32 1, %s22
        %s229 = smul.u32 %s228, %s23
        %s230 = sadd.s32 %s229, %s22
        %s231 = smul.u32 %s22, %s23
        %p232 = scmp.eq.s32.totalorder %s22, 0
        // Predicated region
        $region37: #{tpu_custom_call.1} parent=35 // pred_check
          %p233 = pneg %p232
        $region38: #{tpu_custom_call.1} parent=35 // pred_check_branch
          %235 = sbr.rel (%p233) target = $region40
        $region39: #{tpu_custom_call.1} parent=35 // pred_region
          %v236 = vld [vmem:[%s227] sm:$0xff]
          %v237 = vld [vmem:[%s227 + $0x8] sm:$0xff]
          %v238 = vld [vmem:[%s227 + $0x10] sm:$0x3]
          %v239 = vld [vmem:[%s227 + $0x18] sm:$0xff]
          %v240 = vld [vmem:[%s227 + $0x20] sm:$0xff]
          %v241 = vld [vmem:[%s227 + $0x28] sm:$0x3]
          %v242 = vld [vmem:[%s227 + $0x30] sm:$0xff]
          %v243 = vld [vmem:[%s227 + $0x38] sm:$0xff]
          %v244 = vld [vmem:[%s227 + $0x40] sm:$0x3]
          %v245 = vld [vmem:[%s227 + $0x48] sm:$0xff]
          %v246 = vld [vmem:[%s227 + $0x50] sm:$0xff]
          %v247 = vld [vmem:[%s227 + $0x58] sm:$0x3]
          %v248 = vld [vmem:[%s227 + $0x60] sm:$0xff]
          %v249 = vld [vmem:[%s227 + $0x68] sm:$0xff]
          %v250 = vld [vmem:[%s227 + $0x70] sm:$0x3]
          %v251 = vld [vmem:[%s227 + $0x78] sm:$0xff]
          %v252 = vld [vmem:[%s227 + $0x80] sm:$0xff]
          %v253 = vld [vmem:[%s227 + $0x88] sm:$0x3]
          %v254 = vld [vmem:[%s227 + $0x90] sm:$0xff]
          %v255 = vld [vmem:[%s227 + $0x98] sm:$0xff]
          %v256 = vld [vmem:[%s227 + $0xa0] sm:$0x3]
          %v257 = vld [vmem:[%s227 + $0xa8] sm:$0xff]
          %v258 = vld [vmem:[%s227 + $0xb0] sm:$0xff]
          %v259 = vld [vmem:[%s227 + $0xb8] sm:$0x3]
          %v260 = vld [vmem:[%s227 + $0xc0] sm:$0xff]
          %v261 = vld [vmem:[%s227 + $0xc8] sm:$0xff]
          %v262 = vld [vmem:[%s227 + $0xd0] sm:$0x3]
          %v263 = vld [vmem:[%s227 + $0xd8] sm:$0xff]
          %v264 = vld [vmem:[%s227 + $0xe0] sm:$0xff]
          %v265 = vld [vmem:[%s227 + $0xe8] sm:$0x3]
          %v266 = vld [vmem:[%s227 + $0xf0] sm:$0xff]
          %v267 = vld [vmem:[%s227 + $0xf8] sm:$0xff]
          %v268 = vld [vmem:[%s227 + $0x100] sm:$0x3]
          %v269 = vld [vmem:[%s227 + $0x108] sm:$0xff]
          %v270 = vld [vmem:[%s227 + $0x110] sm:$0xff]
          %v271 = vld [vmem:[%s227 + $0x118] sm:$0x3]
          %v272 = vld [vmem:[%s227 + $0x120] sm:$0xff]
          %v273 = vld [vmem:[%s227 + $0x128] sm:$0xff]
          %v274 = vld [vmem:[%s227 + $0x130] sm:$0x3]
          %v275 = vld [vmem:[%s227 + $0x138] sm:$0xff]
          %v276 = vld [vmem:[%s227 + $0x140] sm:$0xff]
          %v277 = vld [vmem:[%s227 + $0x148] sm:$0x3]
          %v278 = vld [vmem:[%s227 + $0x150] sm:$0xff]
          %v279 = vld [vmem:[%s227 + $0x158] sm:$0xff]
          %v280 = vld [vmem:[%s227 + $0x160] sm:$0x3]
          %v281 = vld [vmem:[%s227 + $0x168] sm:$0xff]
          %v282 = vld [vmem:[%s227 + $0x170] sm:$0xff]
          %v283 = vld [vmem:[%s227 + $0x178] sm:$0x3]
          %v284 = vld [vmem:[%s227 + $0x180] sm:$0xff]
          %v285 = vld [vmem:[%s227 + $0x188] sm:$0xff]
          %v286 = vld [vmem:[%s227 + $0x190] sm:$0x3]
          %v287 = vld [vmem:[%s227 + $0x198] sm:$0xff]
          %v288 = vld [vmem:[%s227 + $0x1a0] sm:$0xff]
          %v289 = vld [vmem:[%s227 + $0x1a8] sm:$0x3]
          %vm338 = vcmask 1046528
          %v339 = vrot.slane %v236, 1
          %v340 = vrot.slane %v237, 1
          %v341 = vsel %vm338, %v339, %v340
          %v342 = vrot.slane %v238, 1
          %v343 = vsel %vm338, %v340, %v342
          %v344 = vrot.slane %v239, 1
          %v345 = vrot.slane %v240, 1
          %v346 = vsel %vm338, %v344, %v345
          %v347 = vrot.slane %v241, 1
          %v348 = vsel %vm338, %v345, %v347
          %v349 = vrot.slane %v242, 1
          %v350 = vrot.slane %v243, 1
          %v351 = vsel %vm338, %v349, %v350
          %v352 = vrot.slane %v244, 1
          %v353 = vsel %vm338, %v350, %v352
          %v354 = vrot.slane %v245, 1
          %v355 = vrot.slane %v246, 1
          %v356 = vsel %vm338, %v354, %v355
          %v357 = vrot.slane %v247, 1
          %v358 = vsel %vm338, %v355, %v357
          %v359 = vrot.slane %v248, 1
          %v360 = vrot.slane %v249, 1
          %v361 = vsel %vm338, %v359, %v360
          %v362 = vrot.slane %v250, 1
          %v363 = vsel %vm338, %v360, %v362
          %v364 = vrot.slane %v251, 1
          %v365 = vrot.slane %v252, 1
          %v366 = vsel %vm338, %v364, %v365
          %v367 = vrot.slane %v253, 1
          %v368 = vsel %vm338, %v365, %v367
          %v369 = vrot.slane %v254, 1
          %v370 = vrot.slane %v255, 1
          %v371 = vsel %vm338, %v369, %v370
          %v372 = vrot.slane %v256, 1
          %v373 = vsel %vm338, %v370, %v372
          %v374 = vrot.slane %v257, 1
          %v375 = vrot.slane %v258, 1
          %v376 = vsel %vm338, %v374, %v375
          %v377 = vrot.slane %v259, 1
          %v378 = vsel %vm338, %v375, %v377
          %v379 = vrot.slane %v260, 1
          %v380 = vrot.slane %v261, 1
          %v381 = vsel %vm338, %v379, %v380
          %v382 = vrot.slane %v262, 1
          %v383 = vsel %vm338, %v380, %v382
          %v384 = vrot.slane %v263, 1
          %v385 = vrot.slane %v264, 1
          %v386 = vsel %vm338, %v384, %v385
          %v387 = vrot.slane %v265, 1
          %v388 = vsel %vm338, %v385, %v387
          %v389 = vrot.slane %v266, 1
          %v390 = vrot.slane %v267, 1
          %v391 = vsel %vm338, %v389, %v390
          %v392 = vrot.slane %v268, 1
          %v393 = vsel %vm338, %v390, %v392
          %v394 = vrot.slane %v269, 1
          %v395 = vrot.slane %v270, 1
          %v396 = vsel %vm338, %v394, %v395
          %v397 = vrot.slane %v271, 1
          %v398 = vsel %vm338, %v395, %v397
          %v399 = vrot.slane %v272, 1
          %v400 = vrot.slane %v273, 1
          %v401 = vsel %vm338, %v399, %v400
          %v402 = vrot.slane %v274, 1
          %v403 = vsel %vm338, %v400, %v402
          %v404 = vrot.slane %v275, 1
          %v405 = vrot.slane %v276, 1
          %v406 = vsel %vm338, %v404, %v405
          %v407 = vrot.slane %v277, 1
          %v408 = vsel %vm338, %v405, %v407
          %v409 = vrot.slane %v278, 1
          %v410 = vrot.slane %v279, 1
          %v411 = vsel %vm338, %v409, %v410
          %v412 = vrot.slane %v280, 1
          %v413 = vsel %vm338, %v410, %v412
          %v414 = vrot.slane %v281, 1
          %v415 = vrot.slane %v282, 1
          %v416 = vsel %vm338, %v414, %v415
          %v417 = vrot.slane %v283, 1
          %v418 = vsel %vm338, %v415, %v417
          %419 = vrot.lane.b32.xlu0 %v341, 4
          %v420 = vpop.permute.xlu0 %419
          %421 = vrot.lane.b32.xlu0 %v343, 4
          %v422 = vpop.permute.xlu0 %421
          %423 = vrot.lane.b32.xlu0 %v346, 4
          %v424 = vpop.permute.xlu0 %423
          %425 = vrot.lane.b32.xlu0 %v348, 4
          %v426 = vpop.permute.xlu0 %425
          %427 = vrot.lane.b32.xlu0 %v351, 4
          %v428 = vpop.permute.xlu0 %427
          %429 = vrot.lane.b32.xlu0 %v353, 4
          %v430 = vpop.permute.xlu0 %429
          %431 = vrot.lane.b32.xlu0 %v356, 4
          %v432 = vpop.permute.xlu0 %431
          %433 = vrot.lane.b32.xlu0 %v358, 4
          %v434 = vpop.permute.xlu0 %433
          %435 = vrot.lane.b32.xlu0 %v361, 4
          %v436 = vpop.permute.xlu0 %435
          %437 = vrot.lane.b32.xlu0 %v363, 4
          %v438 = vpop.permute.xlu0 %437
          %439 = vrot.lane.b32.xlu0 %v366, 4
          %v440 = vpop.permute.xlu0 %439
          %441 = vrot.lane.b32.xlu0 %v368, 4
          %v442 = vpop.permute.xlu0 %441
          %443 = vrot.lane.b32.xlu0 %v371, 4
          %v444 = vpop.permute.xlu0 %443
          %445 = vrot.lane.b32.xlu0 %v373, 4
          %v446 = vpop.permute.xlu0 %445
          %447 = vrot.lane.b32.xlu0 %v376, 4
          %v448 = vpop.permute.xlu0 %447
          %449 = vrot.lane.b32.xlu0 %v378, 4
          %v450 = vpop.permute.xlu0 %449
          %451 = vrot.lane.b32.xlu0 %v381, 4
          %v452 = vpop.permute.xlu0 %451
          %453 = vrot.lane.b32.xlu0 %v383, 4
          %v454 = vpop.permute.xlu0 %453
          %455 = vrot.lane.b32.xlu0 %v386, 4
          %v456 = vpop.permute.xlu0 %455
          %457 = vrot.lane.b32.xlu0 %v388, 4
          %v458 = vpop.permute.xlu0 %457
          %459 = vrot.lane.b32.xlu0 %v391, 4
          %v460 = vpop.permute.xlu0 %459
          %461 = vrot.lane.b32.xlu0 %v393, 4
          %v462 = vpop.permute.xlu0 %461
          %463 = vrot.lane.b32.xlu0 %v396, 4
          %v464 = vpop.permute.xlu0 %463
          %465 = vrot.lane.b32.xlu0 %v398, 4
          %v466 = vpop.permute.xlu0 %465
          %467 = vrot.lane.b32.xlu0 %v401, 4
          %v468 = vpop.permute.xlu0 %467
          %469 = vrot.lane.b32.xlu0 %v403, 4
          %v470 = vpop.permute.xlu0 %469
          %471 = vrot.lane.b32.xlu0 %v406, 4
          %v472 = vpop.permute.xlu0 %471
          %473 = vrot.lane.b32.xlu0 %v408, 4
          %v474 = vpop.permute.xlu0 %473
          %475 = vrot.lane.b32.xlu0 %v411, 4
          %v476 = vpop.permute.xlu0 %475
          %477 = vrot.lane.b32.xlu0 %v413, 4
          %v478 = vpop.permute.xlu0 %477
          %479 = vrot.lane.b32.xlu0 %v416, 4
          %v480 = vpop.permute.xlu0 %479
          %481 = vrot.lane.b32.xlu0 %v418, 4
          %v482 = vpop.permute.xlu0 %481
          %vm515 = vcmask 1045504
          %v516 = vrot.slane %v236, 2
          %v517 = vrot.slane %v237, 2
          %v518 = vsel %vm515, %v516, %v517
          %v519 = vrot.slane %v238, 2
          %v520 = vsel %vm515, %v517, %v519
          %v521 = vrot.slane %v239, 2
          %v522 = vrot.slane %v240, 2
          %v523 = vsel %vm515, %v521, %v522
          %v524 = vrot.slane %v241, 2
          %v525 = vsel %vm515, %v522, %v524
          %v526 = vrot.slane %v242, 2
          %v527 = vrot.slane %v243, 2
          %v528 = vsel %vm515, %v526, %v527
          %v529 = vrot.slane %v244, 2
          %v530 = vsel %vm515, %v527, %v529
          %v531 = vrot.slane %v245, 2
          %v532 = vrot.slane %v246, 2
          %v533 = vsel %vm515, %v531, %v532
          %v534 = vrot.slane %v247, 2
          %v535 = vsel %vm515, %v532, %v534
          %v536 = vrot.slane %v248, 2
          %v537 = vrot.slane %v249, 2
          %v538 = vsel %vm515, %v536, %v537
          %v539 = vrot.slane %v250, 2
          %v540 = vsel %vm515, %v537, %v539
          %v541 = vrot.slane %v251, 2
          %v542 = vrot.slane %v252, 2
          %v543 = vsel %vm515, %v541, %v542
          %v544 = vrot.slane %v253, 2
          %v545 = vsel %vm515, %v542, %v544
          %v546 = vrot.slane %v254, 2
          %v547 = vrot.slane %v255, 2
          %v548 = vsel %vm515, %v546, %v547
          %v549 = vrot.slane %v256, 2
          %v550 = vsel %vm515, %v547, %v549
          %v551 = vrot.slane %v257, 2
          %v552 = vrot.slane %v258, 2
          %v553 = vsel %vm515, %v551, %v552
          %v554 = vrot.slane %v259, 2
          %v555 = vsel %vm515, %v552, %v554
          %v556 = vrot.slane %v260, 2
          %v557 = vrot.slane %v261, 2
          %v558 = vsel %vm515, %v556, %v557
          %v559 = vrot.slane %v262, 2
          %v560 = vsel %vm515, %v557, %v559
          %v561 = vrot.slane %v263, 2
          %v562 = vrot.slane %v264, 2
          %v563 = vsel %vm515, %v561, %v562
          %v564 = vrot.slane %v265, 2
          %v565 = vsel %vm515, %v562, %v564
          %v566 = vrot.slane %v266, 2
          %v567 = vrot.slane %v267, 2
          %v568 = vsel %vm515, %v566, %v567
          %v569 = vrot.slane %v268, 2
          %v570 = vsel %vm515, %v567, %v569
          %v571 = vrot.slane %v269, 2
          %v572 = vrot.slane %v270, 2
          %v573 = vsel %vm515, %v571, %v572
          %v574 = vrot.slane %v271, 2
          %v575 = vsel %vm515, %v572, %v574
          %v576 = vrot.slane %v272, 2
          %v577 = vrot.slane %v273, 2
          %v578 = vsel %vm515, %v576, %v577
          %v579 = vrot.slane %v274, 2
          %v580 = vsel %vm515, %v577, %v579
          %v581 = vrot.slane %v275, 2
          %v582 = vrot.slane %v276, 2
          %v583 = vsel %vm515, %v581, %v582
          %v584 = vrot.slane %v277, 2
          %v585 = vsel %vm515, %v582, %v584
          %v586 = vrot.slane %v278, 2
          %v587 = vrot.slane %v279, 2
          %v588 = vsel %vm515, %v586, %v587
          %v589 = vrot.slane %v280, 2
          %v590 = vsel %vm515, %v587, %v589
          %v591 = vrot.slane %v281, 2
          %v592 = vrot.slane %v282, 2
          %v593 = vsel %vm515, %v591, %v592
          %v594 = vrot.slane %v283, 2
          %v595 = vsel %vm515, %v592, %v594
          %596 = vrot.lane.b32.xlu0 %v518, 8
          %v597 = vpop.permute.xlu0 %596
          %598 = vrot.lane.b32.xlu0 %v520, 8
          %v599 = vpop.permute.xlu0 %598
          %600 = vrot.lane.b32.xlu0 %v523, 8
          %v601 = vpop.permute.xlu0 %600
          %602 = vrot.lane.b32.xlu0 %v525, 8
          %v603 = vpop.permute.xlu0 %602
          %604 = vrot.lane.b32.xlu0 %v528, 8
          %v605 = vpop.permute.xlu0 %604
          %606 = vrot.lane.b32.xlu0 %v530, 8
          %v607 = vpop.permute.xlu0 %606
          %608 = vrot.lane.b32.xlu0 %v533, 8
          %v609 = vpop.permute.xlu0 %608
          %610 = vrot.lane.b32.xlu0 %v535, 8
          %v611 = vpop.permute.xlu0 %610
          %612 = vrot.lane.b32.xlu0 %v538, 8
          %v613 = vpop.permute.xlu0 %612
          %614 = vrot.lane.b32.xlu0 %v540, 8
          %v615 = vpop.permute.xlu0 %614
          %616 = vrot.lane.b32.xlu0 %v543, 8
          %v617 = vpop.permute.xlu0 %616
          %618 = vrot.lane.b32.xlu0 %v545, 8
          %v619 = vpop.permute.xlu0 %618
          %620 = vrot.lane.b32.xlu0 %v548, 8
          %v621 = vpop.permute.xlu0 %620
          %622 = vrot.lane.b32.xlu0 %v550, 8
          %v623 = vpop.permute.xlu0 %622
          %624 = vrot.lane.b32.xlu0 %v553, 8
          %v625 = vpop.permute.xlu0 %624
          %626 = vrot.lane.b32.xlu0 %v555, 8
          %v627 = vpop.permute.xlu0 %626
          %628 = vrot.lane.b32.xlu0 %v558, 8
          %v629 = vpop.permute.xlu0 %628
          %630 = vrot.lane.b32.xlu0 %v560, 8
          %v631 = vpop.permute.xlu0 %630
          %632 = vrot.lane.b32.xlu0 %v563, 8
          %v633 = vpop.permute.xlu0 %632
          %634 = vrot.lane.b32.xlu0 %v565, 8
          %v635 = vpop.permute.xlu0 %634
          %636 = vrot.lane.b32.xlu0 %v568, 8
          %v637 = vpop.permute.xlu0 %636
          %638 = vrot.lane.b32.xlu0 %v570, 8
          %v639 = vpop.permute.xlu0 %638
          %640 = vrot.lane.b32.xlu0 %v573, 8
          %v641 = vpop.permute.xlu0 %640
          %642 = vrot.lane.b32.xlu0 %v575, 8
          %v643 = vpop.permute.xlu0 %642
          %644 = vrot.lane.b32.xlu0 %v578, 8
          %v645 = vpop.permute.xlu0 %644
          %646 = vrot.lane.b32.xlu0 %v580, 8
          %v647 = vpop.permute.xlu0 %646
          %648 = vrot.lane.b32.xlu0 %v583, 8
          %v649 = vpop.permute.xlu0 %648
          %650 = vrot.lane.b32.xlu0 %v585, 8
          %v651 = vpop.permute.xlu0 %650
          %652 = vrot.lane.b32.xlu0 %v588, 8
          %v653 = vpop.permute.xlu0 %652
          %654 = vrot.lane.b32.xlu0 %v590, 8
          %v655 = vpop.permute.xlu0 %654
          %656 = vrot.lane.b32.xlu0 %v593, 8
          %v657 = vpop.permute.xlu0 %656
          %658 = vrot.lane.b32.xlu0 %v595, 8
          %v659 = vpop.permute.xlu0 %658
          %vm692 = vcmask 31744
          %v693 = vsel %vm692, %v236, %v420
          %v694 = vsel %vm692, %v237, %v422
          %v695 = vsel %vm692, %v239, %v424
          %v696 = vsel %vm692, %v240, %v426
          %v697 = vsel %vm692, %v242, %v428
          %v698 = vsel %vm692, %v243, %v430
          %v699 = vsel %vm692, %v245, %v432
          %v700 = vsel %vm692, %v246, %v434
          %v701 = vsel %vm692, %v248, %v436
          %v702 = vsel %vm692, %v249, %v438
          %v703 = vsel %vm692, %v251, %v440
          %v704 = vsel %vm692, %v252, %v442
          %v705 = vsel %vm692, %v254, %v444
          %v706 = vsel %vm692, %v255, %v446
          %v707 = vsel %vm692, %v257, %v448
          %v708 = vsel %vm692, %v258, %v450
          %v709 = vsel %vm692, %v260, %v452
          %v710 = vsel %vm692, %v261, %v454
          %v711 = vsel %vm692, %v263, %v456
          %v712 = vsel %vm692, %v264, %v458
          %v713 = vsel %vm692, %v266, %v460
          %v714 = vsel %vm692, %v267, %v462
          %v715 = vsel %vm692, %v269, %v464
          %v716 = vsel %vm692, %v270, %v466
          %v717 = vsel %vm692, %v272, %v468
          %v718 = vsel %vm692, %v273, %v470
          %v719 = vsel %vm692, %v275, %v472
          %v720 = vsel %vm692, %v276, %v474
          %v721 = vsel %vm692, %v278, %v476
          %v722 = vsel %vm692, %v279, %v478
          %v723 = vsel %vm692, %v281, %v480
          %v724 = vsel %vm692, %v282, %v482
          %vm725 = vcmask 64512
          %v726 = vsel %vm725, %v693, %v597
          %v727 = vsel %vm725, %v694, %v599
          %v728 = vsel %vm725, %v695, %v601
          %v729 = vsel %vm725, %v696, %v603
          %v730 = vsel %vm725, %v697, %v605
          %v731 = vsel %vm725, %v698, %v607
          %v732 = vsel %vm725, %v699, %v609
          %v733 = vsel %vm725, %v700, %v611
          %v734 = vsel %vm725, %v701, %v613
          %v735 = vsel %vm725, %v702, %v615
          %v736 = vsel %vm725, %v703, %v617
          %v737 = vsel %vm725, %v704, %v619
          %v738 = vsel %vm725, %v705, %v621
          %v739 = vsel %vm725, %v706, %v623
          %v740 = vsel %vm725, %v707, %v625
          %v741 = vsel %vm725, %v708, %v627
          %v742 = vsel %vm725, %v709, %v629
          %v743 = vsel %vm725, %v710, %v631
          %v744 = vsel %vm725, %v711, %v633
          %v745 = vsel %vm725, %v712, %v635
          %v746 = vsel %vm725, %v713, %v637
          %v747 = vsel %vm725, %v714, %v639
          %v748 = vsel %vm725, %v715, %v641
          %v749 = vsel %vm725, %v716, %v643
          %v750 = vsel %vm725, %v717, %v645
          %v751 = vsel %vm725, %v718, %v647
          %v752 = vsel %vm725, %v719, %v649
          %v753 = vsel %vm725, %v720, %v651
          %v754 = vsel %vm725, %v721, %v653
          %v755 = vsel %vm725, %v722, %v655
          %v756 = vsel %vm725, %v723, %v657
          %v757 = vsel %vm725, %v724, %v659
          %v761 = vrot.slane %v284, 1
          %v762 = vrot.slane %v285, 1
          %v763 = vsel %vm338, %v761, %v762
          %v764 = vrot.slane %v286, 1
          %v765 = vsel %vm338, %v762, %v764
          %766 = vrot.lane.b32.xlu0 %v763, 4
          %v767 = vpop.permute.xlu0 %766
          %768 = vrot.lane.b32.xlu0 %v765, 4
          %v769 = vpop.permute.xlu0 %768
          %v772 = vrot.slane %v284, 2
          %v773 = vrot.slane %v285, 2
          %v774 = vsel %vm515, %v772, %v773
          %v775 = vrot.slane %v286, 2
          %v776 = vsel %vm515, %v773, %v775
          %777 = vrot.lane.b32.xlu0 %v774, 8
          %v778 = vpop.permute.xlu0 %777
          %779 = vrot.lane.b32.xlu0 %v776, 8
          %v780 = vpop.permute.xlu0 %779
          %v783 = vsel %vm692, %v284, %v767
          %v784 = vsel %vm692, %v285, %v769
          %v785 = vsel %vm725, %v783, %v778
          %v786 = vsel %vm725, %v784, %v780
          %v790 = vrot.slane %v287, 1
          %v791 = vrot.slane %v288, 1
          %v792 = vsel %vm338, %v790, %v791
          %v793 = vrot.slane %v289, 1
          %v794 = vsel %vm338, %v791, %v793
          %795 = vrot.lane.b32.xlu0 %v792, 4
          %v796 = vpop.permute.xlu0 %795
          %797 = vrot.lane.b32.xlu0 %v794, 4
          %v798 = vpop.permute.xlu0 %797
          %v801 = vrot.slane %v287, 2
          %v802 = vrot.slane %v288, 2
          %v803 = vsel %vm515, %v801, %v802
          %v804 = vrot.slane %v289, 2
          %v805 = vsel %vm515, %v802, %v804
          %806 = vrot.lane.b32.xlu0 %v803, 8
          %v807 = vpop.permute.xlu0 %806
          %808 = vrot.lane.b32.xlu0 %v805, 8
          %v809 = vpop.permute.xlu0 %808
          %v812 = vsel %vm692, %v287, %v796
          %v813 = vsel %vm692, %v288, %v798
          %v814 = vsel %vm725, %v812, %v807
          %v815 = vsel %vm725, %v813, %v809
          %848 = vrot.lane.b32.xlu0 %v728, 12
          %v849 = vpop.permute.xlu0 %848
          %850 = vrot.lane.b32.xlu0 %v729, 12
          %v851 = vpop.permute.xlu0 %850
          %852 = vrot.lane.b32.xlu0 %v730, 12
          %v853 = vpop.permute.xlu0 %852
          %854 = vrot.lane.b32.xlu0 %v731, 12
          %v855 = vpop.permute.xlu0 %854
          %856 = vrot.lane.b32.xlu0 %v732, 12
          %v857 = vpop.permute.xlu0 %856
          %858 = vrot.lane.b32.xlu0 %v733, 12
          %v859 = vpop.permute.xlu0 %858
          %860 = vrot.lane.b32.xlu0 %v734, 12
          %v861 = vpop.permute.xlu0 %860
          %862 = vrot.lane.b32.xlu0 %v735, 12
          %v863 = vpop.permute.xlu0 %862
          %864 = vrot.lane.b32.xlu0 %v736, 12
          %v865 = vpop.permute.xlu0 %864
          %866 = vrot.lane.b32.xlu0 %v737, 12
          %v867 = vpop.permute.xlu0 %866
          %868 = vrot.lane.b32.xlu0 %v738, 12
          %v869 = vpop.permute.xlu0 %868
          %870 = vrot.lane.b32.xlu0 %v739, 12
          %v871 = vpop.permute.xlu0 %870
          %872 = vrot.lane.b32.xlu0 %v740, 12
          %v873 = vpop.permute.xlu0 %872
          %874 = vrot.lane.b32.xlu0 %v741, 12
          %v875 = vpop.permute.xlu0 %874
          %876 = vrot.lane.b32.xlu0 %v742, 12
          %v877 = vpop.permute.xlu0 %876
          %878 = vrot.lane.b32.xlu0 %v743, 12
          %v879 = vpop.permute.xlu0 %878
          %880 = vrot.lane.b32.xlu0 %v744, 12
          %v881 = vpop.permute.xlu0 %880
          %882 = vrot.lane.b32.xlu0 %v745, 12
          %v883 = vpop.permute.xlu0 %882
          %884 = vrot.lane.b32.xlu0 %v746, 12
          %v885 = vpop.permute.xlu0 %884
          %886 = vrot.lane.b32.xlu0 %v747, 12
          %v887 = vpop.permute.xlu0 %886
          %888 = vrot.lane.b32.xlu0 %v748, 12
          %v889 = vpop.permute.xlu0 %888
          %890 = vrot.lane.b32.xlu0 %v749, 12
          %v891 = vpop.permute.xlu0 %890
          %892 = vrot.lane.b32.xlu0 %v750, 12
          %v893 = vpop.permute.xlu0 %892
          %894 = vrot.lane.b32.xlu0 %v751, 12
          %v895 = vpop.permute.xlu0 %894
          %896 = vrot.lane.b32.xlu0 %v752, 12
          %v897 = vpop.permute.xlu0 %896
          %898 = vrot.lane.b32.xlu0 %v753, 12
          %v899 = vpop.permute.xlu0 %898
          %900 = vrot.lane.b32.xlu0 %v754, 12
          %v901 = vpop.permute.xlu0 %900
          %902 = vrot.lane.b32.xlu0 %v755, 12
          %v903 = vpop.permute.xlu0 %902
          %904 = vrot.lane.b32.xlu0 %v756, 12
          %v905 = vpop.permute.xlu0 %904
          %906 = vrot.lane.b32.xlu0 %v757, 12
          %v907 = vpop.permute.xlu0 %906
          %908 = vrot.lane.b32.xlu0 %v785, 12
          %v909 = vpop.permute.xlu0 %908
          %910 = vrot.lane.b32.xlu0 %v786, 12
          %v911 = vpop.permute.xlu0 %910
          %946 = vrot.lane.b32.xlu0 %v730, 24
          %v947 = vpop.permute.xlu0 %946
          %948 = vrot.lane.b32.xlu0 %v731, 24
          %v949 = vpop.permute.xlu0 %948
          %950 = vrot.lane.b32.xlu0 %v732, 24
          %v951 = vpop.permute.xlu0 %950
          %952 = vrot.lane.b32.xlu0 %v733, 24
          %v953 = vpop.permute.xlu0 %952
          %954 = vrot.lane.b32.xlu0 %v734, 24
          %v955 = vpop.permute.xlu0 %954
          %956 = vrot.lane.b32.xlu0 %v735, 24
          %v957 = vpop.permute.xlu0 %956
          %958 = vrot.lane.b32.xlu0 %v736, 24
          %v959 = vpop.permute.xlu0 %958
          %960 = vrot.lane.b32.xlu0 %v737, 24
          %v961 = vpop.permute.xlu0 %960
          %962 = vrot.lane.b32.xlu0 %v738, 24
          %v963 = vpop.permute.xlu0 %962
          %964 = vrot.lane.b32.xlu0 %v739, 24
          %v965 = vpop.permute.xlu0 %964
          %966 = vrot.lane.b32.xlu0 %v740, 24
          %v967 = vpop.permute.xlu0 %966
          %968 = vrot.lane.b32.xlu0 %v741, 24
          %v969 = vpop.permute.xlu0 %968
          %970 = vrot.lane.b32.xlu0 %v742, 24
          %v971 = vpop.permute.xlu0 %970
          %972 = vrot.lane.b32.xlu0 %v743, 24
          %v973 = vpop.permute.xlu0 %972
          %974 = vrot.lane.b32.xlu0 %v744, 24
          %v975 = vpop.permute.xlu0 %974
          %976 = vrot.lane.b32.xlu0 %v745, 24
          %v977 = vpop.permute.xlu0 %976
          %978 = vrot.lane.b32.xlu0 %v746, 24
          %v979 = vpop.permute.xlu0 %978
          %980 = vrot.lane.b32.xlu0 %v747, 24
          %v981 = vpop.permute.xlu0 %980
          %982 = vrot.lane.b32.xlu0 %v748, 24
          %v983 = vpop.permute.xlu0 %982
          %984 = vrot.lane.b32.xlu0 %v749, 24
          %v985 = vpop.permute.xlu0 %984
          %986 = vrot.lane.b32.xlu0 %v750, 24
          %v987 = vpop.permute.xlu0 %986
          %988 = vrot.lane.b32.xlu0 %v751, 24
          %v989 = vpop.permute.xlu0 %988
          %990 = vrot.lane.b32.xlu0 %v752, 24
          %v991 = vpop.permute.xlu0 %990
          %992 = vrot.lane.b32.xlu0 %v753, 24
          %v993 = vpop.permute.xlu0 %992
          %994 = vrot.lane.b32.xlu0 %v754, 24
          %v995 = vpop.permute.xlu0 %994
          %996 = vrot.lane.b32.xlu0 %v755, 24
          %v997 = vpop.permute.xlu0 %996
          %998 = vrot.lane.b32.xlu0 %v756, 24
          %v999 = vpop.permute.xlu0 %998
          %1000 = vrot.lane.b32.xlu0 %v757, 24
          %v1001 = vpop.permute.xlu0 %1000
          %1002 = vrot.lane.b32.xlu0 %v785, 24
          %v1003 = vpop.permute.xlu0 %1002
          %1004 = vrot.lane.b32.xlu0 %v786, 24
          %v1005 = vpop.permute.xlu0 %1004
          %1006 = vrot.lane.b32.xlu0 %v814, 24
          %v1007 = vpop.permute.xlu0 %1006
          %1008 = vrot.lane.b32.xlu0 %v815, 24
          %v1009 = vpop.permute.xlu0 %1008
          %vm1042 = vcmask 97280
          %v1043 = vsel %vm1042, %v726, %v849
          %v1044 = vsel %vm1042, %v727, %v851
          %v1045 = vsel %vm1042, %v728, %v853
          %v1046 = vsel %vm1042, %v729, %v855
          %v1047 = vsel %vm1042, %v730, %v857
          %v1048 = vsel %vm1042, %v731, %v859
          %v1049 = vsel %vm1042, %v732, %v861
          %v1050 = vsel %vm1042, %v733, %v863
          %v1051 = vsel %vm1042, %v734, %v865
          %v1052 = vsel %vm1042, %v735, %v867
          %v1053 = vsel %vm1042, %v736, %v869
          %v1054 = vsel %vm1042, %v737, %v871
          %v1055 = vsel %vm1042, %v738, %v873
          %v1056 = vsel %vm1042, %v739, %v875
          %v1057 = vsel %vm1042, %v740, %v877
          %v1058 = vsel %vm1042, %v741, %v879
          %v1059 = vsel %vm1042, %v742, %v881
          %v1060 = vsel %vm1042, %v743, %v883
          %v1061 = vsel %vm1042, %v744, %v885
          %v1062 = vsel %vm1042, %v745, %v887
          %v1063 = vsel %vm1042, %v746, %v889
          %v1064 = vsel %vm1042, %v747, %v891
          %v1065 = vsel %vm1042, %v748, %v893
          %v1066 = vsel %vm1042, %v749, %v895
          %v1067 = vsel %vm1042, %v750, %v897
          %v1068 = vsel %vm1042, %v751, %v899
          %v1069 = vsel %vm1042, %v752, %v901
          %v1070 = vsel %vm1042, %v753, %v903
          %v1071 = vsel %vm1042, %v754, %v905
          %v1072 = vsel %vm1042, %v755, %v907
          %v1073 = vsel %vm1042, %v756, %v909
          %v1074 = vsel %vm1042, %v757, %v911
          %vm1075 = vcmask 195584
          %v1076 = vsel %vm1075, %v1043, %v947
          %v1077 = vsel %vm1075, %v1044, %v949
          %v1078 = vsel %vm1075, %v1045, %v951
          %v1079 = vsel %vm1075, %v1046, %v953
          %v1080 = vsel %vm1075, %v1047, %v955
          %v1081 = vsel %vm1075, %v1048, %v957
          %v1082 = vsel %vm1075, %v1049, %v959
          %v1083 = vsel %vm1075, %v1050, %v961
          %v1084 = vsel %vm1075, %v1051, %v963
          %v1085 = vsel %vm1075, %v1052, %v965
          %v1086 = vsel %vm1075, %v1053, %v967
          %v1087 = vsel %vm1075, %v1054, %v969
          %v1088 = vsel %vm1075, %v1055, %v971
          %v1089 = vsel %vm1075, %v1056, %v973
          %v1090 = vsel %vm1075, %v1057, %v975
          %v1091 = vsel %vm1075, %v1058, %v977
          %v1092 = vsel %vm1075, %v1059, %v979
          %v1093 = vsel %vm1075, %v1060, %v981
          %v1094 = vsel %vm1075, %v1061, %v983
          %v1095 = vsel %vm1075, %v1062, %v985
          %v1096 = vsel %vm1075, %v1063, %v987
          %v1097 = vsel %vm1075, %v1064, %v989
          %v1098 = vsel %vm1075, %v1065, %v991
          %v1099 = vsel %vm1075, %v1066, %v993
          %v1100 = vsel %vm1075, %v1067, %v995
          %v1101 = vsel %vm1075, %v1068, %v997
          %v1102 = vsel %vm1075, %v1069, %v999
          %v1103 = vsel %vm1075, %v1070, %v1001
          %v1104 = vsel %vm1075, %v1071, %v1003
          %v1105 = vsel %vm1075, %v1072, %v1005
          %v1106 = vsel %vm1075, %v1073, %v1007
          %v1107 = vsel %vm1075, %v1074, %v1009
          %v1108 = vld [vmem:[%s1] sm:$0xff]
          %v1109 = vld [vmem:[%s1 + $0x8] sm:$0xff]
          %v1110 = vld [vmem:[%s1 + $0x10] sm:$0xff]
          %v1111 = vld [vmem:[%s1 + $0x18] sm:$0xff]
          %v1112 = vld [vmem:[%s1 + $0x20] sm:$0xf]
          %vm1113 = vcmask 293888
          %v1115 = vsel %vm1113, %v1076, 0
          %v1118 = vsel %vm1113, %v1077, 0
          %v1121 = vsel %vm1113, %v1078, 0
          %v1124 = vsel %vm1113, %v1079, 0
          %v1127 = vsel %vm1113, %v1080, 0
          %v1130 = vsel %vm1113, %v1081, 0
          %v1133 = vsel %vm1113, %v1082, 0
          %v1136 = vsel %vm1113, %v1083, 0
          %v1139 = vsel %vm1113, %v1084, 0
          %v1142 = vsel %vm1113, %v1085, 0
          %v1145 = vsel %vm1113, %v1086, 0
          %v1148 = vsel %vm1113, %v1087, 0
          %v1151 = vsel %vm1113, %v1088, 0
          %v1154 = vsel %vm1113, %v1089, 0
          %v1157 = vsel %vm1113, %v1090, 0
          %v1160 = vsel %vm1113, %v1091, 0
          %v1163 = vsel %vm1113, %v1092, 0
          %v1166 = vsel %vm1113, %v1093, 0
          %v1169 = vsel %vm1113, %v1094, 0
          %v1172 = vsel %vm1113, %v1095, 0
          %v1175 = vsel %vm1113, %v1096, 0
          %v1178 = vsel %vm1113, %v1097, 0
          %v1181 = vsel %vm1113, %v1098, 0
          %v1184 = vsel %vm1113, %v1099, 0
          %v1187 = vsel %vm1113, %v1100, 0
          %v1190 = vsel %vm1113, %v1101, 0
          %v1193 = vsel %vm1113, %v1102, 0
          %v1196 = vsel %vm1113, %v1103, 0
          %v1199 = vsel %vm1113, %v1104, 0
          %v1202 = vsel %vm1113, %v1105, 0
          %v1205 = vsel %vm1113, %v1106, 0
          %v1208 = vsel %vm1113, %v1107, 0
          %vm1210 = vcmask 1043456
          %v1212 = vsel %vm1210, %v1112, 0
          %1214 = vmatprep.subr.mxu0 0.0
          %1215 = vmatpush1.msra.mxu0 %v1108
          %1216 = vmatprep.subr.mxu0 0.0
          %1217 = vmatpush1.msra.mxu0 %v1109
          %1218 = vmatprep.subr.mxu0 0.0
          %1219 = vmatpush1.msra.mxu0 %v1110
          %1220 = vmatprep.subr.mxu0 0.0
          %1221 = vmatpush1.msra.mxu0 %v1111
          %1222 = vmatprep.subr.mxu0 0.0
          %1223 = vmatpush1.msra.mxu0 %v1212
          %1224 = vmatprep.subr.mxu0 0.0
          %1225 = vmatpush1.msra.mxu0 0.0
          %1226 = vmatprep.subr.mxu0 0.0
          %1227 = vmatpush1.msra.mxu0 0.0
          %1228 = vmatprep.subr.mxu0 0.0
          %1229 = vmatpush1.msra.mxu0 0.0
          %1230 = vmatprep.subr.mxu0 0.0
          %1231 = vmatpush1.msra.mxu0 0.0
          %1232 = vmatprep.subr.mxu0 0.0
          %1233 = vmatpush1.msra.mxu0 0.0
          %1234 = vmatprep.subr.mxu0 0.0
          %1235 = vmatpush1.msra.mxu0 0.0
          %1236 = vmatprep.subr.mxu0 0.0
          %1237 = vmatpush1.msra.mxu0 0.0
          %1238 = vmatprep.subr.mxu0 0.0
          %1239 = vmatpush1.msra.mxu0 0.0
          %1240 = vmatprep.subr.mxu0 0.0
          %1241 = vmatpush1.msra.mxu0 0.0
          %1242 = vmatprep.subr.mxu0 0.0
          %1243 = vmatpush1.msra.mxu0 0.0
          %1244 = vmatprep.subr.mxu0 0.0
          %1245 = vmatpush1.msra.mxu0 0.0
          %1246 = vmatprep.subr.mxu0 0.0
          %1247 = vmatpush1.msra.mxu0 0.0
          %1248 = vmatprep.subr.mxu0 0.0
          %1249 = vmatpush1.msra.mxu0 0.0
          %1250 = vmatprep.subr.mxu0 0.0
          %1251 = vmatpush1.msra.mxu0 0.0
          %1252 = vmatprep.subr.mxu0 0.0
          %1253 = vmatpush1.msra.mxu0 0.0
          %1254 = vmatprep.subr.mxu0 0.0
          %1255 = vmatpush1.msra.mxu0 0.0
          %1256 = vmatprep.subr.mxu0 0.0
          %1257 = vmatpush1.msra.mxu0 0.0
          %1258 = vmatprep.subr.mxu0 0.0
          %1259 = vmatpush1.msra.mxu0 0.0
          %1260 = vmatprep.subr.mxu0 0.0
          %1261 = vmatpush1.msra.mxu0 0.0
          %1262 = vmatprep.subr.mxu0 0.0
          %1263 = vmatpush1.msra.mxu0 0.0
          %1264 = vmatprep.subr.mxu0 0.0
          %1265 = vmatpush1.msra.mxu0 0.0
          %1266 = vmatprep.subr.mxu0 0.0
          %1267 = vmatpush1.msra.mxu0 0.0
          %1268 = vmatprep.subr.mxu0 0.0
          %1269 = vmatpush1.msra.mxu0 0.0
          %1270 = vmatprep.subr.mxu0 0.0
          %1271 = vmatpush1.msra.mxu0 0.0
          %1272 = vmatprep.subr.mxu0 0.0
          %1273 = vmatpush1.msra.mxu0 0.0
          %1274 = vmatprep.subr.mxu0 0.0
          %1275 = vmatpush1.msra.mxu0 0.0
          %1276 = vmatprep.subr.mxu0 0.0
          %1277 = vmatpush1.msra.mxu0 0.0
          %1278 = vmatprep.mubr.f32.mxu0 0.0
          %1279 = vmatmul.mubr.f32.gmra.mrb[0].mxu0 %v1115
          %v1280 = vpop.f32.mrb[0].mxu0
          %v1281 = vadd.f32 0.0, %v1280
          %v1282 = vpop.f32.mrb[0].mxu0
          %1283 = vmatprep.mubr.f32.mxu0 0.0
          %1284 = vmatmul.mubr.f32.gmra.mrb[0].mxu0 %v1118
          %v1285 = vpop.f32.mrb[0].mxu0
          %v1286 = vadd.f32 0.0, %v1285
          %v1287 = vpop.f32.mrb[0].mxu0
          %1288 = vmatprep.mubr.f32.mxu0 0.0
          %1289 = vmatmul.mubr.f32.gmra.mrb[0].mxu0 %v1121
          %v1290 = vpop.f32.mrb[0].mxu0
          %v1291 = vadd.f32 0.0, %v1290
          %v1292 = vpop.f32.mrb[0].mxu0
          %1293 = vmatprep.mubr.f32.mxu0 0.0
          %1294 = vmatmul.mubr.f32.gmra.mrb[0].mxu0 %v1124
          %v1295 = vpop.f32.mrb[0].mxu0
          %v1296 = vadd.f32 0.0, %v1295
          %v1297 = vpop.f32.mrb[0].mxu0
          %1298 = vmatprep.mubr.f32.mxu0 0.0
          %1299 = vmatmul.mubr.f32.gmra.mrb[0].mxu0 %v1127
          %v1300 = vpop.f32.mrb[0].mxu0
          %v1301 = vadd.f32 0.0, %v1300
          %v1302 = vpop.f32.mrb[0].mxu0
          %1303 = vmatprep.mubr.f32.mxu0 0.0
          %1304 = vmatmul.mubr.f32.gmra.mrb[0].mxu0 %v1130
          %v1305 = vpop.f32.mrb[0].mxu0
          %v1306 = vadd.f32 0.0, %v1305
          %v1307 = vpop.f32.mrb[0].mxu0
          %1308 = vmatprep.mubr.f32.mxu0 0.0
          %1309 = vmatmul.mubr.f32.gmra.mrb[0].mxu0 %v1133
          %v1310 = vpop.f32.mrb[0].mxu0
          %v1311 = vadd.f32 0.0, %v1310
          %v1312 = vpop.f32.mrb[0].mxu0
          %1313 = vmatprep.mubr.f32.mxu0 0.0
          %1314 = vmatmul.mubr.f32.gmra.mrb[0].mxu0 %v1136
          %v1315 = vpop.f32.mrb[0].mxu0
          %v1316 = vadd.f32 0.0, %v1315
          %v1317 = vpop.f32.mrb[0].mxu0
          %1318 = vmatprep.mubr.f32.mxu0 0.0
          %1319 = vmatmul.mubr.f32.gmra.mrb[0].mxu0 %v1139
          %v1320 = vpop.f32.mrb[0].mxu0
          %v1321 = vadd.f32 0.0, %v1320
          %v1322 = vpop.f32.mrb[0].mxu0
          %1323 = vmatprep.mubr.f32.mxu0 0.0
          %1324 = vmatmul.mubr.f32.gmra.mrb[0].mxu0 %v1142
          %v1325 = vpop.f32.mrb[0].mxu0
          %v1326 = vadd.f32 0.0, %v1325
          %v1327 = vpop.f32.mrb[0].mxu0
          %1328 = vmatprep.mubr.f32.mxu0 0.0
          %1329 = vmatmul.mubr.f32.gmra.mrb[0].mxu0 %v1145
          %v1330 = vpop.f32.mrb[0].mxu0
          %v1331 = vadd.f32 0.0, %v1330
          %v1332 = vpop.f32.mrb[0].mxu0
          %1333 = vmatprep.mubr.f32.mxu0 0.0
          %1334 = vmatmul.mubr.f32.gmra.mrb[0].mxu0 %v1148
          %v1335 = vpop.f32.mrb[0].mxu0
          %v1336 = vadd.f32 0.0, %v1335
          %v1337 = vpop.f32.mrb[0].mxu0
          %1338 = vmatprep.mubr.f32.mxu0 0.0
          %1339 = vmatmul.mubr.f32.gmra.mrb[0].mxu0 %v1151
          %v1340 = vpop.f32.mrb[0].mxu0
          %v1341 = vadd.f32 0.0, %v1340
          %v1342 = vpop.f32.mrb[0].mxu0
          %1343 = vmatprep.mubr.f32.mxu0 0.0
          %1344 = vmatmul.mubr.f32.gmra.mrb[0].mxu0 %v1154
          %v1345 = vpop.f32.mrb[0].mxu0
          %v1346 = vadd.f32 0.0, %v1345
          %v1347 = vpop.f32.mrb[0].mxu0
          %1348 = vmatprep.mubr.f32.mxu0 0.0
          %1349 = vmatmul.mubr.f32.gmra.mrb[0].mxu0 %v1157
          %v1350 = vpop.f32.mrb[0].mxu0
          %v1351 = vadd.f32 0.0, %v1350
          %v1352 = vpop.f32.mrb[0].mxu0
          %1353 = vmatprep.mubr.f32.mxu0 0.0
          %1354 = vmatmul.mubr.f32.gmra.mrb[0].mxu0 %v1160
          %v1355 = vpop.f32.mrb[0].mxu0
          %v1356 = vadd.f32 0.0, %v1355
          %v1357 = vpop.f32.mrb[0].mxu0
          %1358 = vmatprep.mubr.f32.mxu0 0.0
          %1359 = vmatmul.mubr.f32.gmra.mrb[0].mxu0 %v1163
          %v1360 = vpop.f32.mrb[0].mxu0
          %v1361 = vadd.f32 0.0, %v1360
          %v1362 = vpop.f32.mrb[0].mxu0
          %1363 = vmatprep.mubr.f32.mxu0 0.0
          %1364 = vmatmul.mubr.f32.gmra.mrb[0].mxu0 %v1166
          %v1365 = vpop.f32.mrb[0].mxu0
          %v1366 = vadd.f32 0.0, %v1365
          %v1367 = vpop.f32.mrb[0].mxu0
          %1368 = vmatprep.mubr.f32.mxu0 0.0
          %1369 = vmatmul.mubr.f32.gmra.mrb[0].mxu0 %v1169
          %v1370 = vpop.f32.mrb[0].mxu0
          %v1371 = vadd.f32 0.0, %v1370
          %v1372 = vpop.f32.mrb[0].mxu0
          %1373 = vmatprep.mubr.f32.mxu0 0.0
          %1374 = vmatmul.mubr.f32.gmra.mrb[0].mxu0 %v1172
          %v1375 = vpop.f32.mrb[0].mxu0
          %v1376 = vadd.f32 0.0, %v1375
          %v1377 = vpop.f32.mrb[0].mxu0
          %1378 = vmatprep.mubr.f32.mxu0 0.0
          %1379 = vmatmul.mubr.f32.gmra.mrb[0].mxu0 %v1175
          %v1380 = vpop.f32.mrb[0].mxu0
          %v1381 = vadd.f32 0.0, %v1380
          %v1382 = vpop.f32.mrb[0].mxu0
          %1383 = vmatprep.mubr.f32.mxu0 0.0
          %1384 = vmatmul.mubr.f32.gmra.mrb[0].mxu0 %v1178
          %v1385 = vpop.f32.mrb[0].mxu0
          %v1386 = vadd.f32 0.0, %v1385
          %v1387 = vpop.f32.mrb[0].mxu0
          %1388 = vmatprep.mubr.f32.mxu0 0.0
          %1389 = vmatmul.mubr.f32.gmra.mrb[0].mxu0 %v1181
          %v1390 = vpop.f32.mrb[0].mxu0
          %v1391 = vadd.f32 0.0, %v1390
          %v1392 = vpop.f32.mrb[0].mxu0
          %1393 = vmatprep.mubr.f32.mxu0 0.0
          %1394 = vmatmul.mubr.f32.gmra.mrb[0].mxu0 %v1184
          %v1395 = vpop.f32.mrb[0].mxu0
          %v1396 = vadd.f32 0.0, %v1395
          %v1397 = vpop.f32.mrb[0].mxu0
          %1398 = vmatprep.mubr.f32.mxu0 0.0
          %1399 = vmatmul.mubr.f32.gmra.mrb[0].mxu0 %v1187
          %v1400 = vpop.f32.mrb[0].mxu0
          %v1401 = vadd.f32 0.0, %v1400
          %v1402 = vpop.f32.mrb[0].mxu0
          %1403 = vmatprep.mubr.f32.mxu0 0.0
          %1404 = vmatmul.mubr.f32.gmra.mrb[0].mxu0 %v1190
          %v1405 = vpop.f32.mrb[0].mxu0
          %v1406 = vadd.f32 0.0, %v1405
          %v1407 = vpop.f32.mrb[0].mxu0
          %1408 = vmatprep.mubr.f32.mxu0 0.0
          %1409 = vmatmul.mubr.f32.gmra.mrb[0].mxu0 %v1193
          %v1410 = vpop.f32.mrb[0].mxu0
          %v1411 = vadd.f32 0.0, %v1410
          %v1412 = vpop.f32.mrb[0].mxu0
          %1413 = vmatprep.mubr.f32.mxu0 0.0
          %1414 = vmatmul.mubr.f32.gmra.mrb[0].mxu0 %v1196
          %v1415 = vpop.f32.mrb[0].mxu0
          %v1416 = vadd.f32 0.0, %v1415
          %v1417 = vpop.f32.mrb[0].mxu0
          %1418 = vmatprep.mubr.f32.mxu0 0.0
          %1419 = vmatmul.mubr.f32.gmra.mrb[0].mxu0 %v1199
          %v1420 = vpop.f32.mrb[0].mxu0
          %v1421 = vadd.f32 0.0, %v1420
          %v1422 = vpop.f32.mrb[0].mxu0
          %1423 = vmatprep.mubr.f32.mxu0 0.0
          %1424 = vmatmul.mubr.f32.gmra.mrb[0].mxu0 %v1202
          %v1425 = vpop.f32.mrb[0].mxu0
          %v1426 = vadd.f32 0.0, %v1425
          %v1427 = vpop.f32.mrb[0].mxu0
          %1428 = vmatprep.mubr.f32.mxu0 0.0
          %1429 = vmatmul.mubr.f32.gmra.mrb[0].mxu0 %v1205
          %v1430 = vpop.f32.mrb[0].mxu0
          %v1431 = vadd.f32 0.0, %v1430
          %v1432 = vpop.f32.mrb[0].mxu0
          %1433 = vmatprep.mubr.f32.mxu0 0.0
          %1434 = vmatmul.mubr.f32.gmra.mrb[0].mxu0 %v1208
          %v1435 = vpop.f32.mrb[0].mxu0
          %v1436 = vadd.f32 0.0, %v1435
          %v1437 = vpop.f32.mrb[0].mxu0
          %1438 = vdwg.mxu0
          %s1439 = smul.u32 %s23, 256
          %s1440 = scalar_lea.vmem [#allocation2], %s1439
          %1441 = vst.msk [vmem:[%s1440] sm:$0xff] %vm725, %v1281
          %1442 = vst.msk [vmem:[%s1440 + $0x8] sm:$0xff] %vm725, %v1286
          %1443 = vst.msk [vmem:[%s1440 + $0x10] sm:$0xff] %vm725, %v1291
          %1444 = vst.msk [vmem:[%s1440 + $0x18] sm:$0xff] %vm725, %v1296
          %1445 = vst.msk [vmem:[%s1440 + $0x20] sm:$0xff] %vm725, %v1301
          %1446 = vst.msk [vmem:[%s1440 + $0x28] sm:$0xff] %vm725, %v1306
          %1447 = vst.msk [vmem:[%s1440 + $0x30] sm:$0xff] %vm725, %v1311
          %1448 = vst.msk [vmem:[%s1440 + $0x38] sm:$0xff] %vm725, %v1316
          %1449 = vst.msk [vmem:[%s1440 + $0x40] sm:$0xff] %vm725, %v1321
          %1450 = vst.msk [vmem:[%s1440 + $0x48] sm:$0xff] %vm725, %v1326
          %1451 = vst.msk [vmem:[%s1440 + $0x50] sm:$0xff] %vm725, %v1331
          %1452 = vst.msk [vmem:[%s1440 + $0x58] sm:$0xff] %vm725, %v1336
          %1453 = vst.msk [vmem:[%s1440 + $0x60] sm:$0xff] %vm725, %v1341
          %1454 = vst.msk [vmem:[%s1440 + $0x68] sm:$0xff] %vm725, %v1346
          %1455 = vst.msk [vmem:[%s1440 + $0x70] sm:$0xff] %vm725, %v1351
          %1456 = vst.msk [vmem:[%s1440 + $0x78] sm:$0xff] %vm725, %v1356
          %1457 = vst.msk [vmem:[%s1440 + $0x80] sm:$0xff] %vm725, %v1361
          %1458 = vst.msk [vmem:[%s1440 + $0x88] sm:$0xff] %vm725, %v1366
          %1459 = vst.msk [vmem:[%s1440 + $0x90] sm:$0xff] %vm725, %v1371
          %1460 = vst.msk [vmem:[%s1440 + $0x98] sm:$0xff] %vm725, %v1376
          %1461 = vst.msk [vmem:[%s1440 + $0xa0] sm:$0xff] %vm725, %v1381
          %1462 = vst.msk [vmem:[%s1440 + $0xa8] sm:$0xff] %vm725, %v1386
          %1463 = vst.msk [vmem:[%s1440 + $0xb0] sm:$0xff] %vm725, %v1391
          %1464 = vst.msk [vmem:[%s1440 + $0xb8] sm:$0xff] %vm725, %v1396
          %1465 = vst.msk [vmem:[%s1440 + $0xc0] sm:$0xff] %vm725, %v1401
          %1466 = vst.msk [vmem:[%s1440 + $0xc8] sm:$0xff] %vm725, %v1406
          %1467 = vst.msk [vmem:[%s1440 + $0xd0] sm:$0xff] %vm725, %v1411
          %1468 = vst.msk [vmem:[%s1440 + $0xd8] sm:$0xff] %vm725, %v1416
          %1469 = vst.msk [vmem:[%s1440 + $0xe0] sm:$0xff] %vm725, %v1421
          %1470 = vst.msk [vmem:[%s1440 + $0xe8] sm:$0xff] %vm725, %v1426
          %1471 = vst.msk [vmem:[%s1440 + $0xf0] sm:$0xff] %vm725, %v1431
          %1472 = vst.msk [vmem:[%s1440 + $0xf8] sm:$0xff] %vm725, %v1436
          %p1473 = scmp.eq.s32.totalorder %s23, 0
          // Predicated region
          $region41: #{tpu_custom_call.1} parent=39 // pred_check
            %p1474 = pneg %p1473
          $region42: #{tpu_custom_call.1} parent=39 // pred_check_branch
            %1476 = sbr.rel (%p1474) target = $region44
          $region43: #{tpu_custom_call.1} parent=39 // pred_region
            %vm1477 = vcmask 57344
            %1478 = vst.msk [vmem:[#allocation3] sm:$0x1] %vm1477, 0.0
            %1479 = vst.msk [vmem:[#allocation4] sm:$0x1] %vm1477, 0.0
          $region44: #{tpu_custom_call.1} parent=39 // pred_fallthru
            _
          %v1480 = vld [vmem:[#allocation3] sm:$0x1]
          %v1481 = vsel %vm725, %v1281, 0.0
          %v1482 = vsel %vm725, %v1286, 0.0
          %v1483 = vadd.f32 %v1481, %v1482
          %v1484 = vsel %vm725, %v1291, 0.0
          %v1485 = vadd.f32 %v1483, %v1484
          %v1486 = vsel %vm725, %v1296, 0.0
          %v1487 = vadd.f32 %v1485, %v1486
          %v1488 = vsel %vm725, %v1301, 0.0
          %v1489 = vadd.f32 %v1487, %v1488
          %v1490 = vsel %vm725, %v1306, 0.0
          %v1491 = vadd.f32 %v1489, %v1490
          %v1492 = vsel %vm725, %v1311, 0.0
          %v1493 = vadd.f32 %v1491, %v1492
          %v1494 = vsel %vm725, %v1316, 0.0
          %v1495 = vadd.f32 %v1493, %v1494
          %v1496 = vsel %vm725, %v1321, 0.0
          %v1497 = vadd.f32 %v1495, %v1496
          %v1498 = vsel %vm725, %v1326, 0.0
          %v1499 = vadd.f32 %v1497, %v1498
          %v1500 = vsel %vm725, %v1331, 0.0
          %v1501 = vadd.f32 %v1499, %v1500
          %v1502 = vsel %vm725, %v1336, 0.0
          %v1503 = vadd.f32 %v1501, %v1502
          %v1504 = vsel %vm725, %v1341, 0.0
          %v1505 = vadd.f32 %v1503, %v1504
          %v1506 = vsel %vm725, %v1346, 0.0
          %v1507 = vadd.f32 %v1505, %v1506
          %v1508 = vsel %vm725, %v1351, 0.0
          %v1509 = vadd.f32 %v1507, %v1508
          %v1510 = vsel %vm725, %v1356, 0.0
          %v1511 = vadd.f32 %v1509, %v1510
          %v1512 = vsel %vm725, %v1361, 0.0
          %v1513 = vadd.f32 %v1511, %v1512
          %v1514 = vsel %vm725, %v1366, 0.0
          %v1515 = vadd.f32 %v1513, %v1514
          %v1516 = vsel %vm725, %v1371, 0.0
          %v1517 = vadd.f32 %v1515, %v1516
          %v1518 = vsel %vm725, %v1376, 0.0
          %v1519 = vadd.f32 %v1517, %v1518
          %v1520 = vsel %vm725, %v1381, 0.0
          %v1521 = vadd.f32 %v1519, %v1520
          %v1522 = vsel %vm725, %v1386, 0.0
          %v1523 = vadd.f32 %v1521, %v1522
          %v1524 = vsel %vm725, %v1391, 0.0
          %v1525 = vadd.f32 %v1523, %v1524
          %v1526 = vsel %vm725, %v1396, 0.0
          %v1527 = vadd.f32 %v1525, %v1526
          %v1528 = vsel %vm725, %v1401, 0.0
          %v1529 = vadd.f32 %v1527, %v1528
          %v1530 = vsel %vm725, %v1406, 0.0
          %v1531 = vadd.f32 %v1529, %v1530
          %v1532 = vsel %vm725, %v1411, 0.0
          %v1533 = vadd.f32 %v1531, %v1532
          %v1534 = vsel %vm725, %v1416, 0.0
          %v1535 = vadd.f32 %v1533, %v1534
          %v1536 = vsel %vm725, %v1421, 0.0
          %v1537 = vadd.f32 %v1535, %v1536
          %v1538 = vsel %vm725, %v1426, 0.0
          %v1539 = vadd.f32 %v1537, %v1538
          %v1540 = vsel %vm725, %v1431, 0.0
          %v1541 = vadd.f32 %v1539, %v1540
          %v1542 = vsel %vm725, %v1436, 0.0
          %v1543 = vadd.f32 %v1541, %v1542
          %v1544 = vrot.slane %v1543, 4
          %v1545 = vadd.f32 %v1543, %v1544
          %v1546 = vrot.slane %v1545, 2
          %v1547 = vadd.f32 %v1545, %v1546
          %v1548 = vrot.slane %v1547, 1
          %v1549 = vadd.f32 %v1547, %v1548
          %v1550 = vadd.f32 %v1480, %v1549
          %vm1551 = vcmask 57344
          %1552 = vst.msk [vmem:[#allocation3] sm:$0x1] %vm1551, %v1550
          %v1553 = vld [vmem:[#allocation4] sm:$0x1]
          %v1554 = vmul.f32 %v1281, %v1281
          %v1555 = vmul.f32 %v1286, %v1286
          %v1556 = vmul.f32 %v1291, %v1291
          %v1557 = vmul.f32 %v1296, %v1296
          %v1558 = vmul.f32 %v1301, %v1301
          %v1559 = vmul.f32 %v1306, %v1306
          %v1560 = vmul.f32 %v1311, %v1311
          %v1561 = vmul.f32 %v1316, %v1316
          %v1562 = vmul.f32 %v1321, %v1321
          %v1563 = vmul.f32 %v1326, %v1326
          %v1564 = vmul.f32 %v1331, %v1331
          %v1565 = vmul.f32 %v1336, %v1336
          %v1566 = vmul.f32 %v1341, %v1341
          %v1567 = vmul.f32 %v1346, %v1346
          %v1568 = vmul.f32 %v1351, %v1351
          %v1569 = vmul.f32 %v1356, %v1356
          %v1570 = vmul.f32 %v1361, %v1361
          %v1571 = vmul.f32 %v1366, %v1366
          %v1572 = vmul.f32 %v1371, %v1371
          %v1573 = vmul.f32 %v1376, %v1376
          %v1574 = vmul.f32 %v1381, %v1381
          %v1575 = vmul.f32 %v1386, %v1386
          %v1576 = vmul.f32 %v1391, %v1391
          %v1577 = vmul.f32 %v1396, %v1396
          %v1578 = vmul.f32 %v1401, %v1401
          %v1579 = vmul.f32 %v1406, %v1406
          %v1580 = vmul.f32 %v1411, %v1411
          %v1581 = vmul.f32 %v1416, %v1416
          %v1582 = vmul.f32 %v1421, %v1421
          %v1583 = vmul.f32 %v1426, %v1426
          %v1584 = vmul.f32 %v1431, %v1431
          %v1585 = vmul.f32 %v1436, %v1436
          %v1586 = vsel %vm725, %v1554, 0.0
          %v1587 = vsel %vm725, %v1555, 0.0
          %v1588 = vadd.f32 %v1586, %v1587
          %v1589 = vsel %vm725, %v1556, 0.0
          %v1590 = vadd.f32 %v1588, %v1589
          %v1591 = vsel %vm725, %v1557, 0.0
          %v1592 = vadd.f32 %v1590, %v1591
          %v1593 = vsel %vm725, %v1558, 0.0
          %v1594 = vadd.f32 %v1592, %v1593
          %v1595 = vsel %vm725, %v1559, 0.0
          %v1596 = vadd.f32 %v1594, %v1595
          %v1597 = vsel %vm725, %v1560, 0.0
          %v1598 = vadd.f32 %v1596, %v1597
          %v1599 = vsel %vm725, %v1561, 0.0
          %v1600 = vadd.f32 %v1598, %v1599
          %v1601 = vsel %vm725, %v1562, 0.0
          %v1602 = vadd.f32 %v1600, %v1601
          %v1603 = vsel %vm725, %v1563, 0.0
          %v1604 = vadd.f32 %v1602, %v1603
          %v1605 = vsel %vm725, %v1564, 0.0
          %v1606 = vadd.f32 %v1604, %v1605
          %v1607 = vsel %vm725, %v1565, 0.0
          %v1608 = vadd.f32 %v1606, %v1607
          %v1609 = vsel %vm725, %v1566, 0.0
          %v1610 = vadd.f32 %v1608, %v1609
          %v1611 = vsel %vm725, %v1567, 0.0
          %v1612 = vadd.f32 %v1610, %v1611
          %v1613 = vsel %vm725, %v1568, 0.0
          %v1614 = vadd.f32 %v1612, %v1613
          %v1615 = vsel %vm725, %v1569, 0.0
          %v1616 = vadd.f32 %v1614, %v1615
          %v1617 = vsel %vm725, %v1570, 0.0
          %v1618 = vadd.f32 %v1616, %v1617
          %v1619 = vsel %vm725, %v1571, 0.0
          %v1620 = vadd.f32 %v1618, %v1619
          %v1621 = vsel %vm725, %v1572, 0.0
          %v1622 = vadd.f32 %v1620, %v1621
          %v1623 = vsel %vm725, %v1573, 0.0
          %v1624 = vadd.f32 %v1622, %v1623
          %v1625 = vsel %vm725, %v1574, 0.0
          %v1626 = vadd.f32 %v1624, %v1625
          %v1627 = vsel %vm725, %v1575, 0.0
          %v1628 = vadd.f32 %v1626, %v1627
          %v1629 = vsel %vm725, %v1576, 0.0
          %v1630 = vadd.f32 %v1628, %v1629
          %v1631 = vsel %vm725, %v1577, 0.0
          %v1632 = vadd.f32 %v1630, %v1631
          %v1633 = vsel %vm725, %v1578, 0.0
          %v1634 = vadd.f32 %v1632, %v1633
          %v1635 = vsel %vm725, %v1579, 0.0
          %v1636 = vadd.f32 %v1634, %v1635
          %v1637 = vsel %vm725, %v1580, 0.0
          %v1638 = vadd.f32 %v1636, %v1637
          %v1639 = vsel %vm725, %v1581, 0.0
          %v1640 = vadd.f32 %v1638, %v1639
          %v1641 = vsel %vm725, %v1582, 0.0
          %v1642 = vadd.f32 %v1640, %v1641
          %v1643 = vsel %vm725, %v1583, 0.0
          %v1644 = vadd.f32 %v1642, %v1643
          %v1645 = vsel %vm725, %v1584, 0.0
          %v1646 = vadd.f32 %v1644, %v1645
          %v1647 = vsel %vm725, %v1585, 0.0
          %v1648 = vadd.f32 %v1646, %v1647
          %v1649 = vrot.slane %v1648, 4
          %v1650 = vadd.f32 %v1648, %v1649
          %v1651 = vrot.slane %v1650, 2
          %v1652 = vadd.f32 %v1650, %v1651
          %v1653 = vrot.slane %v1652, 1
          %v1654 = vadd.f32 %v1652, %v1653
          %v1655 = vadd.f32 %v1553, %v1654
          %1656 = vst.msk [vmem:[#allocation4] sm:$0x1] %vm1551, %v1655
        $region40: #{tpu_custom_call.1} parent=35 // pred_fallthru
          _
        %p1657 = scmp.eq.s32.totalorder %s22, 1
        // Predicated region
        $region45: #{tpu_custom_call.1} parent=35 // pred_check
          %p1658 = pneg %p1657
        $region46: #{tpu_custom_call.1} parent=35 // pred_check_branch
          %1660 = sbr.rel (%p1658) target = $region48
        $region47: #{tpu_custom_call.1} parent=35 // pred_region
          %p1661 = scmp.eq.s32.totalorder %s23, 0
          // Predicated region
          $region49: #{tpu_custom_call.1} parent=47 // pred_check
            %p1662 = pneg %p1661
          $region50: #{tpu_custom_call.1} parent=47 // pred_check_branch
            %1664 = sbr.rel (%p1662) target = $region52
          $region51: #{tpu_custom_call.1} parent=47 // pred_region
            %v1665 = vld [vmem:[#allocation3] sm:$0x1]
            %v1666 = vmul.f32 %v1665, 0.001953125
            %v1667 = vld [vmem:[#allocation4] sm:$0x1]
            %v1668 = vmul.f32 %v1667, 0.001953125
            %v1669 = vmul.f32 %v1666, %v1666
            %v1670 = vsub.f32 %v1668, %v1669
            %v1671 = vld [vmem:[%s2] sm:$0x1]
            %v1672 = vadd.f32 %v1670, 1e-05
            %v1673 = vrsqrt.pop %v1672
            %v1674 = vmul.f32 %v1671, %v1673
            %vm1675 = vcmask 57344
            %1676 = vst.msk [vmem:[#allocation5] sm:$0x1] %vm1675, %v1674
            %v1677 = vld [vmem:[%s3] sm:$0x1]
            %v1678 = vmul.f32 %v1666, %v1674
            %v1679 = vsub.f32 %v1677, %v1678
            %1680 = vst.msk [vmem:[#allocation6] sm:$0x1] %vm1675, %v1679
          $region52: #{tpu_custom_call.1} parent=47 // pred_fallthru
            _
          %s1681 = smul.u32 %s23, 256
          %s1682 = scalar_lea.vmem [#allocation2], %s1681
          %v1683 = vld [vmem:[%s1682] sm:$0xff]
          %v1684 = vld [vmem:[%s1682 + $0x8] sm:$0xff]
          %v1685 = vld [vmem:[%s1682 + $0x10] sm:$0xff]
          %v1686 = vld [vmem:[%s1682 + $0x18] sm:$0xff]
          %v1687 = vld [vmem:[%s1682 + $0x20] sm:$0xff]
          %v1688 = vld [vmem:[%s1682 + $0x28] sm:$0xff]
          %v1689 = vld [vmem:[%s1682 + $0x30] sm:$0xff]
          %v1690 = vld [vmem:[%s1682 + $0x38] sm:$0xff]
          %v1691 = vld [vmem:[%s1682 + $0x40] sm:$0xff]
          %v1692 = vld [vmem:[%s1682 + $0x48] sm:$0xff]
          %v1693 = vld [vmem:[%s1682 + $0x50] sm:$0xff]
          %v1694 = vld [vmem:[%s1682 + $0x58] sm:$0xff]
          %v1695 = vld [vmem:[%s1682 + $0x60] sm:$0xff]
          %v1696 = vld [vmem:[%s1682 + $0x68] sm:$0xff]
          %v1697 = vld [vmem:[%s1682 + $0x70] sm:$0xff]
          %v1698 = vld [vmem:[%s1682 + $0x78] sm:$0xff]
          %v1699 = vld [vmem:[%s1682 + $0x80] sm:$0xff]
          %v1700 = vld [vmem:[%s1682 + $0x88] sm:$0xff]
          %v1701 = vld [vmem:[%s1682 + $0x90] sm:$0xff]
          %v1702 = vld [vmem:[%s1682 + $0x98] sm:$0xff]
          %v1703 = vld [vmem:[%s1682 + $0xa0] sm:$0xff]
          %v1704 = vld [vmem:[%s1682 + $0xa8] sm:$0xff]
          %v1705 = vld [vmem:[%s1682 + $0xb0] sm:$0xff]
          %v1706 = vld [vmem:[%s1682 + $0xb8] sm:$0xff]
          %v1707 = vld [vmem:[%s1682 + $0xc0] sm:$0xff]
          %v1708 = vld [vmem:[%s1682 + $0xc8] sm:$0xff]
          %v1709 = vld [vmem:[%s1682 + $0xd0] sm:$0xff]
          %v1710 = vld [vmem:[%s1682 + $0xd8] sm:$0xff]
          %v1711 = vld [vmem:[%s1682 + $0xe0] sm:$0xff]
          %v1712 = vld [vmem:[%s1682 + $0xe8] sm:$0xff]
          %v1713 = vld [vmem:[%s1682 + $0xf0] sm:$0xff]
          %v1714 = vld [vmem:[%s1682 + $0xf8] sm:$0xff]
          %v1715 = vld [vmem:[#allocation5] sm:$0x1]
          %v1717 = vlaneseq
          %v1718 = vshrl.u32 %v1717, 7
          %v1719 = vsub.s32 0, %v1718
          %v1720 = vrot.slane %v1715, %v1719
          %v1722 = vmul.f32 %v1683, %v1720
          %v1723 = vmul.f32 %v1684, %v1720
          %v1724 = vmul.f32 %v1685, %v1720
          %v1725 = vmul.f32 %v1686, %v1720
          %v1726 = vmul.f32 %v1687, %v1720
          %v1727 = vmul.f32 %v1688, %v1720
          %v1728 = vmul.f32 %v1689, %v1720
          %v1729 = vmul.f32 %v1690, %v1720
          %v1730 = vmul.f32 %v1691, %v1720
          %v1731 = vmul.f32 %v1692, %v1720
          %v1732 = vmul.f32 %v1693, %v1720
          %v1733 = vmul.f32 %v1694, %v1720
          %v1734 = vmul.f32 %v1695, %v1720
          %v1735 = vmul.f32 %v1696, %v1720
          %v1736 = vmul.f32 %v1697, %v1720
          %v1737 = vmul.f32 %v1698, %v1720
          %v1738 = vmul.f32 %v1699, %v1720
          %v1739 = vmul.f32 %v1700, %v1720
          %v1740 = vmul.f32 %v1701, %v1720
          %v1741 = vmul.f32 %v1702, %v1720
          %v1742 = vmul.f32 %v1703, %v1720
          %v1743 = vmul.f32 %v1704, %v1720
          %v1744 = vmul.f32 %v1705, %v1720
          %v1745 = vmul.f32 %v1706, %v1720
          %v1746 = vmul.f32 %v1707, %v1720
          %v1747 = vmul.f32 %v1708, %v1720
          %v1748 = vmul.f32 %v1709, %v1720
          %v1749 = vmul.f32 %v1710, %v1720
          %v1750 = vmul.f32 %v1711, %v1720
          %v1751 = vmul.f32 %v1712, %v1720
          %v1752 = vmul.f32 %v1713, %v1720
          %v1753 = vmul.f32 %v1714, %v1720
          %v1754 = vld [vmem:[#allocation6] sm:$0x1]
          %v1756 = vlaneseq
          %v1757 = vshrl.u32 %v1756, 7
          %v1758 = vsub.s32 0, %v1757
          %v1759 = vrot.slane %v1754, %v1758
          %v1761 = vadd.f32 %v1722, %v1759
          %v1762 = vadd.f32 %v1723, %v1759
          %v1763 = vadd.f32 %v1724, %v1759
          %v1764 = vadd.f32 %v1725, %v1759
          %v1765 = vadd.f32 %v1726, %v1759
          %v1766 = vadd.f32 %v1727, %v1759
          %v1767 = vadd.f32 %v1728, %v1759
          %v1768 = vadd.f32 %v1729, %v1759
          %v1769 = vadd.f32 %v1730, %v1759
          %v1770 = vadd.f32 %v1731, %v1759
          %v1771 = vadd.f32 %v1732, %v1759
          %v1772 = vadd.f32 %v1733, %v1759
          %v1773 = vadd.f32 %v1734, %v1759
          %v1774 = vadd.f32 %v1735, %v1759
          %v1775 = vadd.f32 %v1736, %v1759
          %v1776 = vadd.f32 %v1737, %v1759
          %v1777 = vadd.f32 %v1738, %v1759
          %v1778 = vadd.f32 %v1739, %v1759
          %v1779 = vadd.f32 %v1740, %v1759
          %v1780 = vadd.f32 %v1741, %v1759
          %v1781 = vadd.f32 %v1742, %v1759
          %v1782 = vadd.f32 %v1743, %v1759
          %v1783 = vadd.f32 %v1744, %v1759
          %v1784 = vadd.f32 %v1745, %v1759
          %v1785 = vadd.f32 %v1746, %v1759
          %v1786 = vadd.f32 %v1747, %v1759
          %v1787 = vadd.f32 %v1748, %v1759
          %v1788 = vadd.f32 %v1749, %v1759
          %v1789 = vadd.f32 %v1750, %v1759
          %v1790 = vadd.f32 %v1751, %v1759
          %v1791 = vadd.f32 %v1752, %v1759
          %v1792 = vadd.f32 %v1753, %v1759
          %v1793 = vmax.f32 %v1761, 0.0
          %v1794 = vmax.f32 %v1762, 0.0
          %v1795 = vmax.f32 %v1763, 0.0
          %v1796 = vmax.f32 %v1764, 0.0
          %v1797 = vmax.f32 %v1765, 0.0
          %v1798 = vmax.f32 %v1766, 0.0
          %v1799 = vmax.f32 %v1767, 0.0
          %v1800 = vmax.f32 %v1768, 0.0
          %v1801 = vmax.f32 %v1769, 0.0
          %v1802 = vmax.f32 %v1770, 0.0
          %v1803 = vmax.f32 %v1771, 0.0
          %v1804 = vmax.f32 %v1772, 0.0
          %v1805 = vmax.f32 %v1773, 0.0
          %v1806 = vmax.f32 %v1774, 0.0
          %v1807 = vmax.f32 %v1775, 0.0
          %v1808 = vmax.f32 %v1776, 0.0
          %v1809 = vmax.f32 %v1777, 0.0
          %v1810 = vmax.f32 %v1778, 0.0
          %v1811 = vmax.f32 %v1779, 0.0
          %v1812 = vmax.f32 %v1780, 0.0
          %v1813 = vmax.f32 %v1781, 0.0
          %v1814 = vmax.f32 %v1782, 0.0
          %v1815 = vmax.f32 %v1783, 0.0
          %v1816 = vmax.f32 %v1784, 0.0
          %v1817 = vmax.f32 %v1785, 0.0
          %v1818 = vmax.f32 %v1786, 0.0
          %v1819 = vmax.f32 %v1787, 0.0
          %v1820 = vmax.f32 %v1788, 0.0
          %v1821 = vmax.f32 %v1789, 0.0
          %v1822 = vmax.f32 %v1790, 0.0
          %v1823 = vmax.f32 %v1791, 0.0
          %v1824 = vmax.f32 %v1792, 0.0
          %v1857 = vcombine.high %v1793, %v1793
          %v1859 = vunpack.c.l.s4 1983009808
          %v1860 = vunpack.c.0.s8 %v1859
          %v1861 = vlaneseq
          %v1862 = vshrl.u32 %v1861, 7
          %v1863 = vsub.s32 %v1860, %v1862
          %v1864 = vrot.slane %v1793, %v1863
          %v1866 = vunpack.c.l.s4 1983009808
          %v1867 = vunpack.c.0.s8 %v1866
          %v1868 = vlaneseq
          %v1869 = vshrl.u32 %v1868, 7
          %v1870 = vsub.s32 %v1867, %v1869
          %v1871 = vrot.slane %v1857, %v1870
          %v1872 = vcombine.high %v1864, %v1864
          %v1873 = vcombine.high %v1871, %v1871
          %v1874 = vcombine.high %v1794, %v1794
          %v1876 = vunpack.c.l.s4 1983009808
          %v1877 = vunpack.c.0.s8 %v1876
          %v1878 = vlaneseq
          %v1879 = vshrl.u32 %v1878, 7
          %v1880 = vsub.s32 %v1877, %v1879
          %v1881 = vrot.slane %v1794, %v1880
          %v1883 = vunpack.c.l.s4 1983009808
          %v1884 = vunpack.c.0.s8 %v1883
          %v1885 = vlaneseq
          %v1886 = vshrl.u32 %v1885, 7
          %v1887 = vsub.s32 %v1884, %v1886
          %v1888 = vrot.slane %v1874, %v1887
          %v1889 = vcombine.high %v1881, %v1881
          %v1890 = vcombine.high %v1888, %v1888
          %v1891 = vcombine.high %v1795, %v1795
          %v1893 = vunpack.c.l.s4 1983009808
          %v1894 = vunpack.c.0.s8 %v1893
          %v1895 = vlaneseq
          %v1896 = vshrl.u32 %v1895, 7
          %v1897 = vsub.s32 %v1894, %v1896
          %v1898 = vrot.slane %v1795, %v1897
          %v1900 = vunpack.c.l.s4 1983009808
          %v1901 = vunpack.c.0.s8 %v1900
          %v1902 = vlaneseq
          %v1903 = vshrl.u32 %v1902, 7
          %v1904 = vsub.s32 %v1901, %v1903
          %v1905 = vrot.slane %v1891, %v1904
          %v1906 = vcombine.high %v1898, %v1898
          %v1907 = vcombine.high %v1905, %v1905
          %v1908 = vcombine.high %v1796, %v1796
          %v1910 = vunpack.c.l.s4 1983009808
          %v1911 = vunpack.c.0.s8 %v1910
          %v1912 = vlaneseq
          %v1913 = vshrl.u32 %v1912, 7
          %v1914 = vsub.s32 %v1911, %v1913
          %v1915 = vrot.slane %v1796, %v1914
          %v1917 = vunpack.c.l.s4 1983009808
          %v1918 = vunpack.c.0.s8 %v1917
          %v1919 = vlaneseq
          %v1920 = vshrl.u32 %v1919, 7
          %v1921 = vsub.s32 %v1918, %v1920
          %v1922 = vrot.slane %v1908, %v1921
          %v1923 = vcombine.high %v1915, %v1915
          %v1924 = vcombine.high %v1922, %v1922
          %v1925 = vcombine.high %v1797, %v1797
          %v1927 = vunpack.c.l.s4 1983009808
          %v1928 = vunpack.c.0.s8 %v1927
          %v1929 = vlaneseq
          %v1930 = vshrl.u32 %v1929, 7
          %v1931 = vsub.s32 %v1928, %v1930
          %v1932 = vrot.slane %v1797, %v1931
          %v1934 = vunpack.c.l.s4 1983009808
          %v1935 = vunpack.c.0.s8 %v1934
          %v1936 = vlaneseq
          %v1937 = vshrl.u32 %v1936, 7
          %v1938 = vsub.s32 %v1935, %v1937
          %v1939 = vrot.slane %v1925, %v1938
          %v1940 = vcombine.high %v1932, %v1932
          %v1941 = vcombine.high %v1939, %v1939
          %v1942 = vcombine.high %v1798, %v1798
          %v1944 = vunpack.c.l.s4 1983009808
          %v1945 = vunpack.c.0.s8 %v1944
          %v1946 = vlaneseq
          %v1947 = vshrl.u32 %v1946, 7
          %v1948 = vsub.s32 %v1945, %v1947
          %v1949 = vrot.slane %v1798, %v1948
          %v1951 = vunpack.c.l.s4 1983009808
          %v1952 = vunpack.c.0.s8 %v1951
          %v1953 = vlaneseq
          %v1954 = vshrl.u32 %v1953, 7
          %v1955 = vsub.s32 %v1952, %v1954
          %v1956 = vrot.slane %v1942, %v1955
          %v1957 = vcombine.high %v1949, %v1949
          %v1958 = vcombine.high %v1956, %v1956
          %v1959 = vcombine.high %v1799, %v1799
          %v1961 = vunpack.c.l.s4 1983009808
          %v1962 = vunpack.c.0.s8 %v1961
          %v1963 = vlaneseq
          %v1964 = vshrl.u32 %v1963, 7
          %v1965 = vsub.s32 %v1962, %v1964
          %v1966 = vrot.slane %v1799, %v1965
          %v1968 = vunpack.c.l.s4 1983009808
          %v1969 = vunpack.c.0.s8 %v1968
          %v1970 = vlaneseq
          %v1971 = vshrl.u32 %v1970, 7
          %v1972 = vsub.s32 %v1969, %v1971
          %v1973 = vrot.slane %v1959, %v1972
          %v1974 = vcombine.high %v1966, %v1966
          %v1975 = vcombine.high %v1973, %v1973
          %v1976 = vcombine.high %v1800, %v1800
          %v1978 = vunpack.c.l.s4 1983009808
          %v1979 = vunpack.c.0.s8 %v1978
          %v1980 = vlaneseq
          %v1981 = vshrl.u32 %v1980, 7
          %v1982 = vsub.s32 %v1979, %v1981
          %v1983 = vrot.slane %v1800, %v1982
          %v1985 = vunpack.c.l.s4 1983009808
          %v1986 = vunpack.c.0.s8 %v1985
          %v1987 = vlaneseq
          %v1988 = vshrl.u32 %v1987, 7
          %v1989 = vsub.s32 %v1986, %v1988
          %v1990 = vrot.slane %v1976, %v1989
          %v1991 = vcombine.high %v1983, %v1983
          %v1992 = vcombine.high %v1990, %v1990
          %v1993 = vcombine.high %v1801, %v1801
          %v1995 = vunpack.c.l.s4 1983009808
          %v1996 = vunpack.c.0.s8 %v1995
          %v1997 = vlaneseq
          %v1998 = vshrl.u32 %v1997, 7
          %v1999 = vsub.s32 %v1996, %v1998
          %v2000 = vrot.slane %v1801, %v1999
          %v2002 = vunpack.c.l.s4 1983009808
          %v2003 = vunpack.c.0.s8 %v2002
          %v2004 = vlaneseq
          %v2005 = vshrl.u32 %v2004, 7
          %v2006 = vsub.s32 %v2003, %v2005
          %v2007 = vrot.slane %v1993, %v2006
          %v2008 = vcombine.high %v2000, %v2000
          %v2009 = vcombine.high %v2007, %v2007
          %v2010 = vcombine.high %v1802, %v1802
          %v2012 = vunpack.c.l.s4 1983009808
          %v2013 = vunpack.c.0.s8 %v2012
          %v2014 = vlaneseq
          %v2015 = vshrl.u32 %v2014, 7
          %v2016 = vsub.s32 %v2013, %v2015
          %v2017 = vrot.slane %v1802, %v2016
          %v2019 = vunpack.c.l.s4 1983009808
          %v2020 = vunpack.c.0.s8 %v2019
          %v2021 = vlaneseq
          %v2022 = vshrl.u32 %v2021, 7
          %v2023 = vsub.s32 %v2020, %v2022
          %v2024 = vrot.slane %v2010, %v2023
          %v2025 = vcombine.high %v2017, %v2017
          %v2026 = vcombine.high %v2024, %v2024
          %v2027 = vcombine.high %v1803, %v1803
          %v2029 = vunpack.c.l.s4 1983009808
          %v2030 = vunpack.c.0.s8 %v2029
          %v2031 = vlaneseq
          %v2032 = vshrl.u32 %v2031, 7
          %v2033 = vsub.s32 %v2030, %v2032
          %v2034 = vrot.slane %v1803, %v2033
          %v2036 = vunpack.c.l.s4 1983009808
          %v2037 = vunpack.c.0.s8 %v2036
          %v2038 = vlaneseq
          %v2039 = vshrl.u32 %v2038, 7
          %v2040 = vsub.s32 %v2037, %v2039
          %v2041 = vrot.slane %v2027, %v2040
          %v2042 = vcombine.high %v2034, %v2034
          %v2043 = vcombine.high %v2041, %v2041
          %v2044 = vcombine.high %v1804, %v1804
          %v2046 = vunpack.c.l.s4 1983009808
          %v2047 = vunpack.c.0.s8 %v2046
          %v2048 = vlaneseq
          %v2049 = vshrl.u32 %v2048, 7
          %v2050 = vsub.s32 %v2047, %v2049
          %v2051 = vrot.slane %v1804, %v2050
          %v2053 = vunpack.c.l.s4 1983009808
          %v2054 = vunpack.c.0.s8 %v2053
          %v2055 = vlaneseq
          %v2056 = vshrl.u32 %v2055, 7
          %v2057 = vsub.s32 %v2054, %v2056
          %v2058 = vrot.slane %v2044, %v2057
          %v2059 = vcombine.high %v2051, %v2051
          %v2060 = vcombine.high %v2058, %v2058
          %v2061 = vcombine.high %v1805, %v1805
          %v2063 = vunpack.c.l.s4 1983009808
          %v2064 = vunpack.c.0.s8 %v2063
          %v2065 = vlaneseq
          %v2066 = vshrl.u32 %v2065, 7
          %v2067 = vsub.s32 %v2064, %v2066
          %v2068 = vrot.slane %v1805, %v2067
          %v2070 = vunpack.c.l.s4 1983009808
          %v2071 = vunpack.c.0.s8 %v2070
          %v2072 = vlaneseq
          %v2073 = vshrl.u32 %v2072, 7
          %v2074 = vsub.s32 %v2071, %v2073
          %v2075 = vrot.slane %v2061, %v2074
          %v2076 = vcombine.high %v2068, %v2068
          %v2077 = vcombine.high %v2075, %v2075
          %v2078 = vcombine.high %v1806, %v1806
          %v2080 = vunpack.c.l.s4 1983009808
          %v2081 = vunpack.c.0.s8 %v2080
          %v2082 = vlaneseq
          %v2083 = vshrl.u32 %v2082, 7
          %v2084 = vsub.s32 %v2081, %v2083
          %v2085 = vrot.slane %v1806, %v2084
          %v2087 = vunpack.c.l.s4 1983009808
          %v2088 = vunpack.c.0.s8 %v2087
          %v2089 = vlaneseq
          %v2090 = vshrl.u32 %v2089, 7
          %v2091 = vsub.s32 %v2088, %v2090
          %v2092 = vrot.slane %v2078, %v2091
          %v2093 = vcombine.high %v2085, %v2085
          %v2094 = vcombine.high %v2092, %v2092
          %v2095 = vcombine.high %v1807, %v1807
          %v2097 = vunpack.c.l.s4 1983009808
          %v2098 = vunpack.c.0.s8 %v2097
          %v2099 = vlaneseq
          %v2100 = vshrl.u32 %v2099, 7
          %v2101 = vsub.s32 %v2098, %v2100
          %v2102 = vrot.slane %v1807, %v2101
          %v2104 = vunpack.c.l.s4 1983009808
          %v2105 = vunpack.c.0.s8 %v2104
          %v2106 = vlaneseq
          %v2107 = vshrl.u32 %v2106, 7
          %v2108 = vsub.s32 %v2105, %v2107
          %v2109 = vrot.slane %v2095, %v2108
          %v2110 = vcombine.high %v2102, %v2102
          %v2111 = vcombine.high %v2109, %v2109
          %v2112 = vcombine.high %v1808, %v1808
          %v2114 = vunpack.c.l.s4 1983009808
          %v2115 = vunpack.c.0.s8 %v2114
          %v2116 = vlaneseq
          %v2117 = vshrl.u32 %v2116, 7
          %v2118 = vsub.s32 %v2115, %v2117
          %v2119 = vrot.slane %v1808, %v2118
          %v2121 = vunpack.c.l.s4 1983009808
          %v2122 = vunpack.c.0.s8 %v2121
          %v2123 = vlaneseq
          %v2124 = vshrl.u32 %v2123, 7
          %v2125 = vsub.s32 %v2122, %v2124
          %v2126 = vrot.slane %v2112, %v2125
          %v2127 = vcombine.high %v2119, %v2119
          %v2128 = vcombine.high %v2126, %v2126
          %v2129 = vcombine.high %v1809, %v1809
          %v2131 = vunpack.c.l.s4 1983009808
          %v2132 = vunpack.c.0.s8 %v2131
          %v2133 = vlaneseq
          %v2134 = vshrl.u32 %v2133, 7
          %v2135 = vsub.s32 %v2132, %v2134
          %v2136 = vrot.slane %v1809, %v2135
          %v2138 = vunpack.c.l.s4 1983009808
          %v2139 = vunpack.c.0.s8 %v2138
          %v2140 = vlaneseq
          %v2141 = vshrl.u32 %v2140, 7
          %v2142 = vsub.s32 %v2139, %v2141
          %v2143 = vrot.slane %v2129, %v2142
          %v2144 = vcombine.high %v2136, %v2136
          %v2145 = vcombine.high %v2143, %v2143
          %v2146 = vcombine.high %v1810, %v1810
          %v2148 = vunpack.c.l.s4 1983009808
          %v2149 = vunpack.c.0.s8 %v2148
          %v2150 = vlaneseq
          %v2151 = vshrl.u32 %v2150, 7
          %v2152 = vsub.s32 %v2149, %v2151
          %v2153 = vrot.slane %v1810, %v2152
          %v2155 = vunpack.c.l.s4 1983009808
          %v2156 = vunpack.c.0.s8 %v2155
          %v2157 = vlaneseq
          %v2158 = vshrl.u32 %v2157, 7
          %v2159 = vsub.s32 %v2156, %v2158
          %v2160 = vrot.slane %v2146, %v2159
          %v2161 = vcombine.high %v2153, %v2153
          %v2162 = vcombine.high %v2160, %v2160
          %v2163 = vcombine.high %v1811, %v1811
          %v2165 = vunpack.c.l.s4 1983009808
          %v2166 = vunpack.c.0.s8 %v2165
          %v2167 = vlaneseq
          %v2168 = vshrl.u32 %v2167, 7
          %v2169 = vsub.s32 %v2166, %v2168
          %v2170 = vrot.slane %v1811, %v2169
          %v2172 = vunpack.c.l.s4 1983009808
          %v2173 = vunpack.c.0.s8 %v2172
          %v2174 = vlaneseq
          %v2175 = vshrl.u32 %v2174, 7
          %v2176 = vsub.s32 %v2173, %v2175
          %v2177 = vrot.slane %v2163, %v2176
          %v2178 = vcombine.high %v2170, %v2170
          %v2179 = vcombine.high %v2177, %v2177
          %v2180 = vcombine.high %v1812, %v1812
          %v2182 = vunpack.c.l.s4 1983009808
          %v2183 = vunpack.c.0.s8 %v2182
          %v2184 = vlaneseq
          %v2185 = vshrl.u32 %v2184, 7
          %v2186 = vsub.s32 %v2183, %v2185
          %v2187 = vrot.slane %v1812, %v2186
          %v2189 = vunpack.c.l.s4 1983009808
          %v2190 = vunpack.c.0.s8 %v2189
          %v2191 = vlaneseq
          %v2192 = vshrl.u32 %v2191, 7
          %v2193 = vsub.s32 %v2190, %v2192
          %v2194 = vrot.slane %v2180, %v2193
          %v2195 = vcombine.high %v2187, %v2187
          %v2196 = vcombine.high %v2194, %v2194
          %v2197 = vcombine.high %v1813, %v1813
          %v2199 = vunpack.c.l.s4 1983009808
          %v2200 = vunpack.c.0.s8 %v2199
          %v2201 = vlaneseq
          %v2202 = vshrl.u32 %v2201, 7
          %v2203 = vsub.s32 %v2200, %v2202
          %v2204 = vrot.slane %v1813, %v2203
          %v2206 = vunpack.c.l.s4 1983009808
          %v2207 = vunpack.c.0.s8 %v2206
          %v2208 = vlaneseq
          %v2209 = vshrl.u32 %v2208, 7
          %v2210 = vsub.s32 %v2207, %v2209
          %v2211 = vrot.slane %v2197, %v2210
          %v2212 = vcombine.high %v2204, %v2204
          %v2213 = vcombine.high %v2211, %v2211
          %v2214 = vcombine.high %v1814, %v1814
          %v2216 = vunpack.c.l.s4 1983009808
          %v2217 = vunpack.c.0.s8 %v2216
          %v2218 = vlaneseq
          %v2219 = vshrl.u32 %v2218, 7
          %v2220 = vsub.s32 %v2217, %v2219
          %v2221 = vrot.slane %v1814, %v2220
          %v2223 = vunpack.c.l.s4 1983009808
          %v2224 = vunpack.c.0.s8 %v2223
          %v2225 = vlaneseq
          %v2226 = vshrl.u32 %v2225, 7
          %v2227 = vsub.s32 %v2224, %v2226
          %v2228 = vrot.slane %v2214, %v2227
          %v2229 = vcombine.high %v2221, %v2221
          %v2230 = vcombine.high %v2228, %v2228
          %v2231 = vcombine.high %v1815, %v1815
          %v2233 = vunpack.c.l.s4 1983009808
          %v2234 = vunpack.c.0.s8 %v2233
          %v2235 = vlaneseq
          %v2236 = vshrl.u32 %v2235, 7
          %v2237 = vsub.s32 %v2234, %v2236
          %v2238 = vrot.slane %v1815, %v2237
          %v2240 = vunpack.c.l.s4 1983009808
          %v2241 = vunpack.c.0.s8 %v2240
          %v2242 = vlaneseq
          %v2243 = vshrl.u32 %v2242, 7
          %v2244 = vsub.s32 %v2241, %v2243
          %v2245 = vrot.slane %v2231, %v2244
          %v2246 = vcombine.high %v2238, %v2238
          %v2247 = vcombine.high %v2245, %v2245
          %v2248 = vcombine.high %v1816, %v1816
          %v2250 = vunpack.c.l.s4 1983009808
          %v2251 = vunpack.c.0.s8 %v2250
          %v2252 = vlaneseq
          %v2253 = vshrl.u32 %v2252, 7
          %v2254 = vsub.s32 %v2251, %v2253
          %v2255 = vrot.slane %v1816, %v2254
          %v2257 = vunpack.c.l.s4 1983009808
          %v2258 = vunpack.c.0.s8 %v2257
          %v2259 = vlaneseq
          %v2260 = vshrl.u32 %v2259, 7
          %v2261 = vsub.s32 %v2258, %v2260
          %v2262 = vrot.slane %v2248, %v2261
          %v2263 = vcombine.high %v2255, %v2255
          %v2264 = vcombine.high %v2262, %v2262
          %v2265 = vcombine.high %v1817, %v1817
          %v2267 = vunpack.c.l.s4 1983009808
          %v2268 = vunpack.c.0.s8 %v2267
          %v2269 = vlaneseq
          %v2270 = vshrl.u32 %v2269, 7
          %v2271 = vsub.s32 %v2268, %v2270
          %v2272 = vrot.slane %v1817, %v2271
          %v2274 = vunpack.c.l.s4 1983009808
          %v2275 = vunpack.c.0.s8 %v2274
          %v2276 = vlaneseq
          %v2277 = vshrl.u32 %v2276, 7
          %v2278 = vsub.s32 %v2275, %v2277
          %v2279 = vrot.slane %v2265, %v2278
          %v2280 = vcombine.high %v2272, %v2272
          %v2281 = vcombine.high %v2279, %v2279
          %v2282 = vcombine.high %v1818, %v1818
          %v2284 = vunpack.c.l.s4 1983009808
          %v2285 = vunpack.c.0.s8 %v2284
          %v2286 = vlaneseq
          %v2287 = vshrl.u32 %v2286, 7
          %v2288 = vsub.s32 %v2285, %v2287
          %v2289 = vrot.slane %v1818, %v2288
          %v2291 = vunpack.c.l.s4 1983009808
          %v2292 = vunpack.c.0.s8 %v2291
          %v2293 = vlaneseq
          %v2294 = vshrl.u32 %v2293, 7
          %v2295 = vsub.s32 %v2292, %v2294
          %v2296 = vrot.slane %v2282, %v2295
          %v2297 = vcombine.high %v2289, %v2289
          %v2298 = vcombine.high %v2296, %v2296
          %v2299 = vcombine.high %v1819, %v1819
          %v2301 = vunpack.c.l.s4 1983009808
          %v2302 = vunpack.c.0.s8 %v2301
          %v2303 = vlaneseq
          %v2304 = vshrl.u32 %v2303, 7
          %v2305 = vsub.s32 %v2302, %v2304
          %v2306 = vrot.slane %v1819, %v2305
          %v2308 = vunpack.c.l.s4 1983009808
          %v2309 = vunpack.c.0.s8 %v2308
          %v2310 = vlaneseq
          %v2311 = vshrl.u32 %v2310, 7
          %v2312 = vsub.s32 %v2309, %v2311
          %v2313 = vrot.slane %v2299, %v2312
          %v2314 = vcombine.high %v2306, %v2306
          %v2315 = vcombine.high %v2313, %v2313
          %v2316 = vcombine.high %v1820, %v1820
          %v2318 = vunpack.c.l.s4 1983009808
          %v2319 = vunpack.c.0.s8 %v2318
          %v2320 = vlaneseq
          %v2321 = vshrl.u32 %v2320, 7
          %v2322 = vsub.s32 %v2319, %v2321
          %v2323 = vrot.slane %v1820, %v2322
          %v2325 = vunpack.c.l.s4 1983009808
          %v2326 = vunpack.c.0.s8 %v2325
          %v2327 = vlaneseq
          %v2328 = vshrl.u32 %v2327, 7
          %v2329 = vsub.s32 %v2326, %v2328
          %v2330 = vrot.slane %v2316, %v2329
          %v2331 = vcombine.high %v2323, %v2323
          %v2332 = vcombine.high %v2330, %v2330
          %v2333 = vcombine.high %v1821, %v1821
          %v2335 = vunpack.c.l.s4 1983009808
          %v2336 = vunpack.c.0.s8 %v2335
          %v2337 = vlaneseq
          %v2338 = vshrl.u32 %v2337, 7
          %v2339 = vsub.s32 %v2336, %v2338
          %v2340 = vrot.slane %v1821, %v2339
          %v2342 = vunpack.c.l.s4 1983009808
          %v2343 = vunpack.c.0.s8 %v2342
          %v2344 = vlaneseq
          %v2345 = vshrl.u32 %v2344, 7
          %v2346 = vsub.s32 %v2343, %v2345
          %v2347 = vrot.slane %v2333, %v2346
          %v2348 = vcombine.high %v2340, %v2340
          %v2349 = vcombine.high %v2347, %v2347
          %v2350 = vcombine.high %v1822, %v1822
          %v2352 = vunpack.c.l.s4 1983009808
          %v2353 = vunpack.c.0.s8 %v2352
          %v2354 = vlaneseq
          %v2355 = vshrl.u32 %v2354, 7
          %v2356 = vsub.s32 %v2353, %v2355
          %v2357 = vrot.slane %v1822, %v2356
          %v2359 = vunpack.c.l.s4 1983009808
          %v2360 = vunpack.c.0.s8 %v2359
          %v2361 = vlaneseq
          %v2362 = vshrl.u32 %v2361, 7
          %v2363 = vsub.s32 %v2360, %v2362
          %v2364 = vrot.slane %v2350, %v2363
          %v2365 = vcombine.high %v2357, %v2357
          %v2366 = vcombine.high %v2364, %v2364
          %v2367 = vcombine.high %v1823, %v1823
          %v2369 = vunpack.c.l.s4 1983009808
          %v2370 = vunpack.c.0.s8 %v2369
          %v2371 = vlaneseq
          %v2372 = vshrl.u32 %v2371, 7
          %v2373 = vsub.s32 %v2370, %v2372
          %v2374 = vrot.slane %v1823, %v2373
          %v2376 = vunpack.c.l.s4 1983009808
          %v2377 = vunpack.c.0.s8 %v2376
          %v2378 = vlaneseq
          %v2379 = vshrl.u32 %v2378, 7
          %v2380 = vsub.s32 %v2377, %v2379
          %v2381 = vrot.slane %v2367, %v2380
          %v2382 = vcombine.high %v2374, %v2374
          %v2383 = vcombine.high %v2381, %v2381
          %v2384 = vcombine.high %v1824, %v1824
          %v2386 = vunpack.c.l.s4 1983009808
          %v2387 = vunpack.c.0.s8 %v2386
          %v2388 = vlaneseq
          %v2389 = vshrl.u32 %v2388, 7
          %v2390 = vsub.s32 %v2387, %v2389
          %v2391 = vrot.slane %v1824, %v2390
          %v2393 = vunpack.c.l.s4 1983009808
          %v2394 = vunpack.c.0.s8 %v2393
          %v2395 = vlaneseq
          %v2396 = vshrl.u32 %v2395, 7
          %v2397 = vsub.s32 %v2394, %v2396
          %v2398 = vrot.slane %v2384, %v2397
          %v2399 = vcombine.high %v2391, %v2391
          %v2400 = vcombine.high %v2398, %v2398
          %vm2529 = vcmask 58368
          %v2530 = vsel %vm2529, %v1864, -inf
          %v2531 = vrot.slane %v2530, 4
          %v2532 = vmax.f32 %v2530, %v2531
          %v2533 = vrot.slane %v2532, 2
          %v2534 = vmax.f32 %v2532, %v2533
          %v2535 = vrot.slane %v2534, 1
          %v2536 = vmax.f32 %v2534, %v2535
          %v2537 = vsel %vm2529, %v1872, -inf
          %v2538 = vrot.slane %v2537, 4
          %v2539 = vmax.f32 %v2537, %v2538
          %v2540 = vrot.slane %v2539, 2
          %v2541 = vmax.f32 %v2539, %v2540
          %v2542 = vrot.slane %v2541, 1
          %v2543 = vmax.f32 %v2541, %v2542
          %v2544 = vsel %vm2529, %v1871, -inf
          %v2545 = vrot.slane %v2544, 4
          %v2546 = vmax.f32 %v2544, %v2545
          %v2547 = vrot.slane %v2546, 2
          %v2548 = vmax.f32 %v2546, %v2547
          %v2549 = vrot.slane %v2548, 1
          %v2550 = vmax.f32 %v2548, %v2549
          %v2551 = vsel %vm2529, %v1873, -inf
          %v2552 = vrot.slane %v2551, 4
          %v2553 = vmax.f32 %v2551, %v2552
          %v2554 = vrot.slane %v2553, 2
          %v2555 = vmax.f32 %v2553, %v2554
          %v2556 = vrot.slane %v2555, 1
          %v2557 = vmax.f32 %v2555, %v2556
          %v2558 = vsel %vm2529, %v1881, -inf
          %v2559 = vrot.slane %v2558, 4
          %v2560 = vmax.f32 %v2558, %v2559
          %v2561 = vrot.slane %v2560, 2
          %v2562 = vmax.f32 %v2560, %v2561
          %v2563 = vrot.slane %v2562, 1
          %v2564 = vmax.f32 %v2562, %v2563
          %v2565 = vsel %vm2529, %v1889, -inf
          %v2566 = vrot.slane %v2565, 4
          %v2567 = vmax.f32 %v2565, %v2566
          %v2568 = vrot.slane %v2567, 2
          %v2569 = vmax.f32 %v2567, %v2568
          %v2570 = vrot.slane %v2569, 1
          %v2571 = vmax.f32 %v2569, %v2570
          %v2572 = vsel %vm2529, %v1888, -inf
          %v2573 = vrot.slane %v2572, 4
          %v2574 = vmax.f32 %v2572, %v2573
          %v2575 = vrot.slane %v2574, 2
          %v2576 = vmax.f32 %v2574, %v2575
          %v2577 = vrot.slane %v2576, 1
          %v2578 = vmax.f32 %v2576, %v2577
          %v2579 = vsel %vm2529, %v1890, -inf
          %v2580 = vrot.slane %v2579, 4
          %v2581 = vmax.f32 %v2579, %v2580
          %v2582 = vrot.slane %v2581, 2
          %v2583 = vmax.f32 %v2581, %v2582
          %v2584 = vrot.slane %v2583, 1
          %v2585 = vmax.f32 %v2583, %v2584
          %v2586 = vsel %vm2529, %v1898, -inf
          %v2587 = vrot.slane %v2586, 4
          %v2588 = vmax.f32 %v2586, %v2587
          %v2589 = vrot.slane %v2588, 2
          %v2590 = vmax.f32 %v2588, %v2589
          %v2591 = vrot.slane %v2590, 1
          %v2592 = vmax.f32 %v2590, %v2591
          %v2593 = vsel %vm2529, %v1906, -inf
          %v2594 = vrot.slane %v2593, 4
          %v2595 = vmax.f32 %v2593, %v2594
          %v2596 = vrot.slane %v2595, 2
          %v2597 = vmax.f32 %v2595, %v2596
          %v2598 = vrot.slane %v2597, 1
          %v2599 = vmax.f32 %v2597, %v2598
          %v2600 = vsel %vm2529, %v1905, -inf
          %v2601 = vrot.slane %v2600, 4
          %v2602 = vmax.f32 %v2600, %v2601
          %v2603 = vrot.slane %v2602, 2
          %v2604 = vmax.f32 %v2602, %v2603
          %v2605 = vrot.slane %v2604, 1
          %v2606 = vmax.f32 %v2604, %v2605
          %v2607 = vsel %vm2529, %v1907, -inf
          %v2608 = vrot.slane %v2607, 4
          %v2609 = vmax.f32 %v2607, %v2608
          %v2610 = vrot.slane %v2609, 2
          %v2611 = vmax.f32 %v2609, %v2610
          %v2612 = vrot.slane %v2611, 1
          %v2613 = vmax.f32 %v2611, %v2612
          %v2614 = vsel %vm2529, %v1915, -inf
          %v2615 = vrot.slane %v2614, 4
          %v2616 = vmax.f32 %v2614, %v2615
          %v2617 = vrot.slane %v2616, 2
          %v2618 = vmax.f32 %v2616, %v2617
          %v2619 = vrot.slane %v2618, 1
          %v2620 = vmax.f32 %v2618, %v2619
          %v2621 = vsel %vm2529, %v1923, -inf
          %v2622 = vrot.slane %v2621, 4
          %v2623 = vmax.f32 %v2621, %v2622
          %v2624 = vrot.slane %v2623, 2
          %v2625 = vmax.f32 %v2623, %v2624
          %v2626 = vrot.slane %v2625, 1
          %v2627 = vmax.f32 %v2625, %v2626
          %v2628 = vsel %vm2529, %v1922, -inf
          %v2629 = vrot.slane %v2628, 4
          %v2630 = vmax.f32 %v2628, %v2629
          %v2631 = vrot.slane %v2630, 2
          %v2632 = vmax.f32 %v2630, %v2631
          %v2633 = vrot.slane %v2632, 1
          %v2634 = vmax.f32 %v2632, %v2633
          %v2635 = vsel %vm2529, %v1924, -inf
          %v2636 = vrot.slane %v2635, 4
          %v2637 = vmax.f32 %v2635, %v2636
          %v2638 = vrot.slane %v2637, 2
          %v2639 = vmax.f32 %v2637, %v2638
          %v2640 = vrot.slane %v2639, 1
          %v2641 = vmax.f32 %v2639, %v2640
          %v2642 = vsel %vm2529, %v1932, -inf
          %v2643 = vrot.slane %v2642, 4
          %v2644 = vmax.f32 %v2642, %v2643
          %v2645 = vrot.slane %v2644, 2
          %v2646 = vmax.f32 %v2644, %v2645
          %v2647 = vrot.slane %v2646, 1
          %v2648 = vmax.f32 %v2646, %v2647
          %v2649 = vsel %vm2529, %v1940, -inf
          %v2650 = vrot.slane %v2649, 4
          %v2651 = vmax.f32 %v2649, %v2650
          %v2652 = vrot.slane %v2651, 2
          %v2653 = vmax.f32 %v2651, %v2652
          %v2654 = vrot.slane %v2653, 1
          %v2655 = vmax.f32 %v2653, %v2654
          %v2656 = vsel %vm2529, %v1939, -inf
          %v2657 = vrot.slane %v2656, 4
          %v2658 = vmax.f32 %v2656, %v2657
          %v2659 = vrot.slane %v2658, 2
          %v2660 = vmax.f32 %v2658, %v2659
          %v2661 = vrot.slane %v2660, 1
          %v2662 = vmax.f32 %v2660, %v2661
          %v2663 = vsel %vm2529, %v1941, -inf
          %v2664 = vrot.slane %v2663, 4
          %v2665 = vmax.f32 %v2663, %v2664
          %v2666 = vrot.slane %v2665, 2
          %v2667 = vmax.f32 %v2665, %v2666
          %v2668 = vrot.slane %v2667, 1
          %v2669 = vmax.f32 %v2667, %v2668
          %v2670 = vsel %vm2529, %v1949, -inf
          %v2671 = vrot.slane %v2670, 4
          %v2672 = vmax.f32 %v2670, %v2671
          %v2673 = vrot.slane %v2672, 2
          %v2674 = vmax.f32 %v2672, %v2673
          %v2675 = vrot.slane %v2674, 1
          %v2676 = vmax.f32 %v2674, %v2675
          %v2677 = vsel %vm2529, %v1957, -inf
          %v2678 = vrot.slane %v2677, 4
          %v2679 = vmax.f32 %v2677, %v2678
          %v2680 = vrot.slane %v2679, 2
          %v2681 = vmax.f32 %v2679, %v2680
          %v2682 = vrot.slane %v2681, 1
          %v2683 = vmax.f32 %v2681, %v2682
          %v2684 = vsel %vm2529, %v1956, -inf
          %v2685 = vrot.slane %v2684, 4
          %v2686 = vmax.f32 %v2684, %v2685
          %v2687 = vrot.slane %v2686, 2
          %v2688 = vmax.f32 %v2686, %v2687
          %v2689 = vrot.slane %v2688, 1
          %v2690 = vmax.f32 %v2688, %v2689
          %v2691 = vsel %vm2529, %v1958, -inf
          %v2692 = vrot.slane %v2691, 4
          %v2693 = vmax.f32 %v2691, %v2692
          %v2694 = vrot.slane %v2693, 2
          %v2695 = vmax.f32 %v2693, %v2694
          %v2696 = vrot.slane %v2695, 1
          %v2697 = vmax.f32 %v2695, %v2696
          %v2698 = vsel %vm2529, %v1966, -inf
          %v2699 = vrot.slane %v2698, 4
          %v2700 = vmax.f32 %v2698, %v2699
          %v2701 = vrot.slane %v2700, 2
          %v2702 = vmax.f32 %v2700, %v2701
          %v2703 = vrot.slane %v2702, 1
          %v2704 = vmax.f32 %v2702, %v2703
          %v2705 = vsel %vm2529, %v1974, -inf
          %v2706 = vrot.slane %v2705, 4
          %v2707 = vmax.f32 %v2705, %v2706
          %v2708 = vrot.slane %v2707, 2
          %v2709 = vmax.f32 %v2707, %v2708
          %v2710 = vrot.slane %v2709, 1
          %v2711 = vmax.f32 %v2709, %v2710
          %v2712 = vsel %vm2529, %v1973, -inf
          %v2713 = vrot.slane %v2712, 4
          %v2714 = vmax.f32 %v2712, %v2713
          %v2715 = vrot.slane %v2714, 2
          %v2716 = vmax.f32 %v2714, %v2715
          %v2717 = vrot.slane %v2716, 1
          %v2718 = vmax.f32 %v2716, %v2717
          %v2719 = vsel %vm2529, %v1975, -inf
          %v2720 = vrot.slane %v2719, 4
          %v2721 = vmax.f32 %v2719, %v2720
          %v2722 = vrot.slane %v2721, 2
          %v2723 = vmax.f32 %v2721, %v2722
          %v2724 = vrot.slane %v2723, 1
          %v2725 = vmax.f32 %v2723, %v2724
          %v2726 = vsel %vm2529, %v1983, -inf
          %v2727 = vrot.slane %v2726, 4
          %v2728 = vmax.f32 %v2726, %v2727
          %v2729 = vrot.slane %v2728, 2
          %v2730 = vmax.f32 %v2728, %v2729
          %v2731 = vrot.slane %v2730, 1
          %v2732 = vmax.f32 %v2730, %v2731
          %v2733 = vsel %vm2529, %v1991, -inf
          %v2734 = vrot.slane %v2733, 4
          %v2735 = vmax.f32 %v2733, %v2734
          %v2736 = vrot.slane %v2735, 2
          %v2737 = vmax.f32 %v2735, %v2736
          %v2738 = vrot.slane %v2737, 1
          %v2739 = vmax.f32 %v2737, %v2738
          %v2740 = vsel %vm2529, %v1990, -inf
          %v2741 = vrot.slane %v2740, 4
          %v2742 = vmax.f32 %v2740, %v2741
          %v2743 = vrot.slane %v2742, 2
          %v2744 = vmax.f32 %v2742, %v2743
          %v2745 = vrot.slane %v2744, 1
          %v2746 = vmax.f32 %v2744, %v2745
          %v2747 = vsel %vm2529, %v1992, -inf
          %v2748 = vrot.slane %v2747, 4
          %v2749 = vmax.f32 %v2747, %v2748
          %v2750 = vrot.slane %v2749, 2
          %v2751 = vmax.f32 %v2749, %v2750
          %v2752 = vrot.slane %v2751, 1
          %v2753 = vmax.f32 %v2751, %v2752
          %v2754 = vsel %vm2529, %v2000, -inf
          %v2755 = vrot.slane %v2754, 4
          %v2756 = vmax.f32 %v2754, %v2755
          %v2757 = vrot.slane %v2756, 2
          %v2758 = vmax.f32 %v2756, %v2757
          %v2759 = vrot.slane %v2758, 1
          %v2760 = vmax.f32 %v2758, %v2759
          %v2761 = vsel %vm2529, %v2008, -inf
          %v2762 = vrot.slane %v2761, 4
          %v2763 = vmax.f32 %v2761, %v2762
          %v2764 = vrot.slane %v2763, 2
          %v2765 = vmax.f32 %v2763, %v2764
          %v2766 = vrot.slane %v2765, 1
          %v2767 = vmax.f32 %v2765, %v2766
          %v2768 = vsel %vm2529, %v2007, -inf
          %v2769 = vrot.slane %v2768, 4
          %v2770 = vmax.f32 %v2768, %v2769
          %v2771 = vrot.slane %v2770, 2
          %v2772 = vmax.f32 %v2770, %v2771
          %v2773 = vrot.slane %v2772, 1
          %v2774 = vmax.f32 %v2772, %v2773
          %v2775 = vsel %vm2529, %v2009, -inf
          %v2776 = vrot.slane %v2775, 4
          %v2777 = vmax.f32 %v2775, %v2776
          %v2778 = vrot.slane %v2777, 2
          %v2779 = vmax.f32 %v2777, %v2778
          %v2780 = vrot.slane %v2779, 1
          %v2781 = vmax.f32 %v2779, %v2780
          %v2782 = vsel %vm2529, %v2017, -inf
          %v2783 = vrot.slane %v2782, 4
          %v2784 = vmax.f32 %v2782, %v2783
          %v2785 = vrot.slane %v2784, 2
          %v2786 = vmax.f32 %v2784, %v2785
          %v2787 = vrot.slane %v2786, 1
          %v2788 = vmax.f32 %v2786, %v2787
          %v2789 = vsel %vm2529, %v2025, -inf
          %v2790 = vrot.slane %v2789, 4
          %v2791 = vmax.f32 %v2789, %v2790
          %v2792 = vrot.slane %v2791, 2
          %v2793 = vmax.f32 %v2791, %v2792
          %v2794 = vrot.slane %v2793, 1
          %v2795 = vmax.f32 %v2793, %v2794
          %v2796 = vsel %vm2529, %v2024, -inf
          %v2797 = vrot.slane %v2796, 4
          %v2798 = vmax.f32 %v2796, %v2797
          %v2799 = vrot.slane %v2798, 2
          %v2800 = vmax.f32 %v2798, %v2799
          %v2801 = vrot.slane %v2800, 1
          %v2802 = vmax.f32 %v2800, %v2801
          %v2803 = vsel %vm2529, %v2026, -inf
          %v2804 = vrot.slane %v2803, 4
          %v2805 = vmax.f32 %v2803, %v2804
          %v2806 = vrot.slane %v2805, 2
          %v2807 = vmax.f32 %v2805, %v2806
          %v2808 = vrot.slane %v2807, 1
          %v2809 = vmax.f32 %v2807, %v2808
          %v2810 = vsel %vm2529, %v2034, -inf
          %v2811 = vrot.slane %v2810, 4
          %v2812 = vmax.f32 %v2810, %v2811
          %v2813 = vrot.slane %v2812, 2
          %v2814 = vmax.f32 %v2812, %v2813
          %v2815 = vrot.slane %v2814, 1
          %v2816 = vmax.f32 %v2814, %v2815
          %v2817 = vsel %vm2529, %v2042, -inf
          %v2818 = vrot.slane %v2817, 4
          %v2819 = vmax.f32 %v2817, %v2818
          %v2820 = vrot.slane %v2819, 2
          %v2821 = vmax.f32 %v2819, %v2820
          %v2822 = vrot.slane %v2821, 1
          %v2823 = vmax.f32 %v2821, %v2822
          %v2824 = vsel %vm2529, %v2041, -inf
          %v2825 = vrot.slane %v2824, 4
          %v2826 = vmax.f32 %v2824, %v2825
          %v2827 = vrot.slane %v2826, 2
          %v2828 = vmax.f32 %v2826, %v2827
          %v2829 = vrot.slane %v2828, 1
          %v2830 = vmax.f32 %v2828, %v2829
          %v2831 = vsel %vm2529, %v2043, -inf
          %v2832 = vrot.slane %v2831, 4
          %v2833 = vmax.f32 %v2831, %v2832
          %v2834 = vrot.slane %v2833, 2
          %v2835 = vmax.f32 %v2833, %v2834
          %v2836 = vrot.slane %v2835, 1
          %v2837 = vmax.f32 %v2835, %v2836
          %v2838 = vsel %vm2529, %v2051, -inf
          %v2839 = vrot.slane %v2838, 4
          %v2840 = vmax.f32 %v2838, %v2839
          %v2841 = vrot.slane %v2840, 2
          %v2842 = vmax.f32 %v2840, %v2841
          %v2843 = vrot.slane %v2842, 1
          %v2844 = vmax.f32 %v2842, %v2843
          %v2845 = vsel %vm2529, %v2059, -inf
          %v2846 = vrot.slane %v2845, 4
          %v2847 = vmax.f32 %v2845, %v2846
          %v2848 = vrot.slane %v2847, 2
          %v2849 = vmax.f32 %v2847, %v2848
          %v2850 = vrot.slane %v2849, 1
          %v2851 = vmax.f32 %v2849, %v2850
          %v2852 = vsel %vm2529, %v2058, -inf
          %v2853 = vrot.slane %v2852, 4
          %v2854 = vmax.f32 %v2852, %v2853
          %v2855 = vrot.slane %v2854, 2
          %v2856 = vmax.f32 %v2854, %v2855
          %v2857 = vrot.slane %v2856, 1
          %v2858 = vmax.f32 %v2856, %v2857
          %v2859 = vsel %vm2529, %v2060, -inf
          %v2860 = vrot.slane %v2859, 4
          %v2861 = vmax.f32 %v2859, %v2860
          %v2862 = vrot.slane %v2861, 2
          %v2863 = vmax.f32 %v2861, %v2862
          %v2864 = vrot.slane %v2863, 1
          %v2865 = vmax.f32 %v2863, %v2864
          %v2866 = vsel %vm2529, %v2068, -inf
          %v2867 = vrot.slane %v2866, 4
          %v2868 = vmax.f32 %v2866, %v2867
          %v2869 = vrot.slane %v2868, 2
          %v2870 = vmax.f32 %v2868, %v2869
          %v2871 = vrot.slane %v2870, 1
          %v2872 = vmax.f32 %v2870, %v2871
          %v2873 = vsel %vm2529, %v2076, -inf
          %v2874 = vrot.slane %v2873, 4
          %v2875 = vmax.f32 %v2873, %v2874
          %v2876 = vrot.slane %v2875, 2
          %v2877 = vmax.f32 %v2875, %v2876
          %v2878 = vrot.slane %v2877, 1
          %v2879 = vmax.f32 %v2877, %v2878
          %v2880 = vsel %vm2529, %v2075, -inf
          %v2881 = vrot.slane %v2880, 4
          %v2882 = vmax.f32 %v2880, %v2881
          %v2883 = vrot.slane %v2882, 2
          %v2884 = vmax.f32 %v2882, %v2883
          %v2885 = vrot.slane %v2884, 1
          %v2886 = vmax.f32 %v2884, %v2885
          %v2887 = vsel %vm2529, %v2077, -inf
          %v2888 = vrot.slane %v2887, 4
          %v2889 = vmax.f32 %v2887, %v2888
          %v2890 = vrot.slane %v2889, 2
          %v2891 = vmax.f32 %v2889, %v2890
          %v2892 = vrot.slane %v2891, 1
          %v2893 = vmax.f32 %v2891, %v2892
          %v2894 = vsel %vm2529, %v2085, -inf
          %v2895 = vrot.slane %v2894, 4
          %v2896 = vmax.f32 %v2894, %v2895
          %v2897 = vrot.slane %v2896, 2
          %v2898 = vmax.f32 %v2896, %v2897
          %v2899 = vrot.slane %v2898, 1
          %v2900 = vmax.f32 %v2898, %v2899
          %v2901 = vsel %vm2529, %v2093, -inf
          %v2902 = vrot.slane %v2901, 4
          %v2903 = vmax.f32 %v2901, %v2902
          %v2904 = vrot.slane %v2903, 2
          %v2905 = vmax.f32 %v2903, %v2904
          %v2906 = vrot.slane %v2905, 1
          %v2907 = vmax.f32 %v2905, %v2906
          %v2908 = vsel %vm2529, %v2092, -inf
          %v2909 = vrot.slane %v2908, 4
          %v2910 = vmax.f32 %v2908, %v2909
          %v2911 = vrot.slane %v2910, 2
          %v2912 = vmax.f32 %v2910, %v2911
          %v2913 = vrot.slane %v2912, 1
          %v2914 = vmax.f32 %v2912, %v2913
          %v2915 = vsel %vm2529, %v2094, -inf
          %v2916 = vrot.slane %v2915, 4
          %v2917 = vmax.f32 %v2915, %v2916
          %v2918 = vrot.slane %v2917, 2
          %v2919 = vmax.f32 %v2917, %v2918
          %v2920 = vrot.slane %v2919, 1
          %v2921 = vmax.f32 %v2919, %v2920
          %v2922 = vsel %vm2529, %v2102, -inf
          %v2923 = vrot.slane %v2922, 4
          %v2924 = vmax.f32 %v2922, %v2923
          %v2925 = vrot.slane %v2924, 2
          %v2926 = vmax.f32 %v2924, %v2925
          %v2927 = vrot.slane %v2926, 1
          %v2928 = vmax.f32 %v2926, %v2927
          %v2929 = vsel %vm2529, %v2110, -inf
          %v2930 = vrot.slane %v2929, 4
          %v2931 = vmax.f32 %v2929, %v2930
          %v2932 = vrot.slane %v2931, 2
          %v2933 = vmax.f32 %v2931, %v2932
          %v2934 = vrot.slane %v2933, 1
          %v2935 = vmax.f32 %v2933, %v2934
          %v2936 = vsel %vm2529, %v2109, -inf
          %v2937 = vrot.slane %v2936, 4
          %v2938 = vmax.f32 %v2936, %v2937
          %v2939 = vrot.slane %v2938, 2
          %v2940 = vmax.f32 %v2938, %v2939
          %v2941 = vrot.slane %v2940, 1
          %v2942 = vmax.f32 %v2940, %v2941
          %v2943 = vsel %vm2529, %v2111, -inf
          %v2944 = vrot.slane %v2943, 4
          %v2945 = vmax.f32 %v2943, %v2944
          %v2946 = vrot.slane %v2945, 2
          %v2947 = vmax.f32 %v2945, %v2946
          %v2948 = vrot.slane %v2947, 1
          %v2949 = vmax.f32 %v2947, %v2948
          %v2950 = vsel %vm2529, %v2119, -inf
          %v2951 = vrot.slane %v2950, 4
          %v2952 = vmax.f32 %v2950, %v2951
          %v2953 = vrot.slane %v2952, 2
          %v2954 = vmax.f32 %v2952, %v2953
          %v2955 = vrot.slane %v2954, 1
          %v2956 = vmax.f32 %v2954, %v2955
          %v2957 = vsel %vm2529, %v2127, -inf
          %v2958 = vrot.slane %v2957, 4
          %v2959 = vmax.f32 %v2957, %v2958
          %v2960 = vrot.slane %v2959, 2
          %v2961 = vmax.f32 %v2959, %v2960
          %v2962 = vrot.slane %v2961, 1
          %v2963 = vmax.f32 %v2961, %v2962
          %v2964 = vsel %vm2529, %v2126, -inf
          %v2965 = vrot.slane %v2964, 4
          %v2966 = vmax.f32 %v2964, %v2965
          %v2967 = vrot.slane %v2966, 2
          %v2968 = vmax.f32 %v2966, %v2967
          %v2969 = vrot.slane %v2968, 1
          %v2970 = vmax.f32 %v2968, %v2969
          %v2971 = vsel %vm2529, %v2128, -inf
          %v2972 = vrot.slane %v2971, 4
          %v2973 = vmax.f32 %v2971, %v2972
          %v2974 = vrot.slane %v2973, 2
          %v2975 = vmax.f32 %v2973, %v2974
          %v2976 = vrot.slane %v2975, 1
          %v2977 = vmax.f32 %v2975, %v2976
          %v2978 = vsel %vm2529, %v2136, -inf
          %v2979 = vrot.slane %v2978, 4
          %v2980 = vmax.f32 %v2978, %v2979
          %v2981 = vrot.slane %v2980, 2
          %v2982 = vmax.f32 %v2980, %v2981
          %v2983 = vrot.slane %v2982, 1
          %v2984 = vmax.f32 %v2982, %v2983
          %v2985 = vsel %vm2529, %v2144, -inf
          %v2986 = vrot.slane %v2985, 4
          %v2987 = vmax.f32 %v2985, %v2986
          %v2988 = vrot.slane %v2987, 2
          %v2989 = vmax.f32 %v2987, %v2988
          %v2990 = vrot.slane %v2989, 1
          %v2991 = vmax.f32 %v2989, %v2990
          %v2992 = vsel %vm2529, %v2143, -inf
          %v2993 = vrot.slane %v2992, 4
          %v2994 = vmax.f32 %v2992, %v2993
          %v2995 = vrot.slane %v2994, 2
          %v2996 = vmax.f32 %v2994, %v2995
          %v2997 = vrot.slane %v2996, 1
          %v2998 = vmax.f32 %v2996, %v2997
          %v2999 = vsel %vm2529, %v2145, -inf
          %v3000 = vrot.slane %v2999, 4
          %v3001 = vmax.f32 %v2999, %v3000
          %v3002 = vrot.slane %v3001, 2
          %v3003 = vmax.f32 %v3001, %v3002
          %v3004 = vrot.slane %v3003, 1
          %v3005 = vmax.f32 %v3003, %v3004
          %v3006 = vsel %vm2529, %v2153, -inf
          %v3007 = vrot.slane %v3006, 4
          %v3008 = vmax.f32 %v3006, %v3007
          %v3009 = vrot.slane %v3008, 2
          %v3010 = vmax.f32 %v3008, %v3009
          %v3011 = vrot.slane %v3010, 1
          %v3012 = vmax.f32 %v3010, %v3011
          %v3013 = vsel %vm2529, %v2161, -inf
          %v3014 = vrot.slane %v3013, 4
          %v3015 = vmax.f32 %v3013, %v3014
          %v3016 = vrot.slane %v3015, 2
          %v3017 = vmax.f32 %v3015, %v3016
          %v3018 = vrot.slane %v3017, 1
          %v3019 = vmax.f32 %v3017, %v3018
          %v3020 = vsel %vm2529, %v2160, -inf
          %v3021 = vrot.slane %v3020, 4
          %v3022 = vmax.f32 %v3020, %v3021
          %v3023 = vrot.slane %v3022, 2
          %v3024 = vmax.f32 %v3022, %v3023
          %v3025 = vrot.slane %v3024, 1
          %v3026 = vmax.f32 %v3024, %v3025
          %v3027 = vsel %vm2529, %v2162, -inf
          %v3028 = vrot.slane %v3027, 4
          %v3029 = vmax.f32 %v3027, %v3028
          %v3030 = vrot.slane %v3029, 2
          %v3031 = vmax.f32 %v3029, %v3030
          %v3032 = vrot.slane %v3031, 1
          %v3033 = vmax.f32 %v3031, %v3032
          %v3034 = vsel %vm2529, %v2170, -inf
          %v3035 = vrot.slane %v3034, 4
          %v3036 = vmax.f32 %v3034, %v3035
          %v3037 = vrot.slane %v3036, 2
          %v3038 = vmax.f32 %v3036, %v3037
          %v3039 = vrot.slane %v3038, 1
          %v3040 = vmax.f32 %v3038, %v3039
          %v3041 = vsel %vm2529, %v2178, -inf
          %v3042 = vrot.slane %v3041, 4
          %v3043 = vmax.f32 %v3041, %v3042
          %v3044 = vrot.slane %v3043, 2
          %v3045 = vmax.f32 %v3043, %v3044
          %v3046 = vrot.slane %v3045, 1
          %v3047 = vmax.f32 %v3045, %v3046
          %v3048 = vsel %vm2529, %v2177, -inf
          %v3049 = vrot.slane %v3048, 4
          %v3050 = vmax.f32 %v3048, %v3049
          %v3051 = vrot.slane %v3050, 2
          %v3052 = vmax.f32 %v3050, %v3051
          %v3053 = vrot.slane %v3052, 1
          %v3054 = vmax.f32 %v3052, %v3053
          %v3055 = vsel %vm2529, %v2179, -inf
          %v3056 = vrot.slane %v3055, 4
          %v3057 = vmax.f32 %v3055, %v3056
          %v3058 = vrot.slane %v3057, 2
          %v3059 = vmax.f32 %v3057, %v3058
          %v3060 = vrot.slane %v3059, 1
          %v3061 = vmax.f32 %v3059, %v3060
          %v3062 = vsel %vm2529, %v2187, -inf
          %v3063 = vrot.slane %v3062, 4
          %v3064 = vmax.f32 %v3062, %v3063
          %v3065 = vrot.slane %v3064, 2
          %v3066 = vmax.f32 %v3064, %v3065
          %v3067 = vrot.slane %v3066, 1
          %v3068 = vmax.f32 %v3066, %v3067
          %v3069 = vsel %vm2529, %v2195, -inf
          %v3070 = vrot.slane %v3069, 4
          %v3071 = vmax.f32 %v3069, %v3070
          %v3072 = vrot.slane %v3071, 2
          %v3073 = vmax.f32 %v3071, %v3072
          %v3074 = vrot.slane %v3073, 1
          %v3075 = vmax.f32 %v3073, %v3074
          %v3076 = vsel %vm2529, %v2194, -inf
          %v3077 = vrot.slane %v3076, 4
          %v3078 = vmax.f32 %v3076, %v3077
          %v3079 = vrot.slane %v3078, 2
          %v3080 = vmax.f32 %v3078, %v3079
          %v3081 = vrot.slane %v3080, 1
          %v3082 = vmax.f32 %v3080, %v3081
          %v3083 = vsel %vm2529, %v2196, -inf
          %v3084 = vrot.slane %v3083, 4
          %v3085 = vmax.f32 %v3083, %v3084
          %v3086 = vrot.slane %v3085, 2
          %v3087 = vmax.f32 %v3085, %v3086
          %v3088 = vrot.slane %v3087, 1
          %v3089 = vmax.f32 %v3087, %v3088
          %v3090 = vsel %vm2529, %v2204, -inf
          %v3091 = vrot.slane %v3090, 4
          %v3092 = vmax.f32 %v3090, %v3091
          %v3093 = vrot.slane %v3092, 2
          %v3094 = vmax.f32 %v3092, %v3093
          %v3095 = vrot.slane %v3094, 1
          %v3096 = vmax.f32 %v3094, %v3095
          %v3097 = vsel %vm2529, %v2212, -inf
          %v3098 = vrot.slane %v3097, 4
          %v3099 = vmax.f32 %v3097, %v3098
          %v3100 = vrot.slane %v3099, 2
          %v3101 = vmax.f32 %v3099, %v3100
          %v3102 = vrot.slane %v3101, 1
          %v3103 = vmax.f32 %v3101, %v3102
          %v3104 = vsel %vm2529, %v2211, -inf
          %v3105 = vrot.slane %v3104, 4
          %v3106 = vmax.f32 %v3104, %v3105
          %v3107 = vrot.slane %v3106, 2
          %v3108 = vmax.f32 %v3106, %v3107
          %v3109 = vrot.slane %v3108, 1
          %v3110 = vmax.f32 %v3108, %v3109
          %v3111 = vsel %vm2529, %v2213, -inf
          %v3112 = vrot.slane %v3111, 4
          %v3113 = vmax.f32 %v3111, %v3112
          %v3114 = vrot.slane %v3113, 2
          %v3115 = vmax.f32 %v3113, %v3114
          %v3116 = vrot.slane %v3115, 1
          %v3117 = vmax.f32 %v3115, %v3116
          %v3118 = vsel %vm2529, %v2221, -inf
          %v3119 = vrot.slane %v3118, 4
          %v3120 = vmax.f32 %v3118, %v3119
          %v3121 = vrot.slane %v3120, 2
          %v3122 = vmax.f32 %v3120, %v3121
          %v3123 = vrot.slane %v3122, 1
          %v3124 = vmax.f32 %v3122, %v3123
          %v3125 = vsel %vm2529, %v2229, -inf
          %v3126 = vrot.slane %v3125, 4
          %v3127 = vmax.f32 %v3125, %v3126
          %v3128 = vrot.slane %v3127, 2
          %v3129 = vmax.f32 %v3127, %v3128
          %v3130 = vrot.slane %v3129, 1
          %v3131 = vmax.f32 %v3129, %v3130
          %v3132 = vsel %vm2529, %v2228, -inf
          %v3133 = vrot.slane %v3132, 4
          %v3134 = vmax.f32 %v3132, %v3133
          %v3135 = vrot.slane %v3134, 2
          %v3136 = vmax.f32 %v3134, %v3135
          %v3137 = vrot.slane %v3136, 1
          %v3138 = vmax.f32 %v3136, %v3137
          %v3139 = vsel %vm2529, %v2230, -inf
          %v3140 = vrot.slane %v3139, 4
          %v3141 = vmax.f32 %v3139, %v3140
          %v3142 = vrot.slane %v3141, 2
          %v3143 = vmax.f32 %v3141, %v3142
          %v3144 = vrot.slane %v3143, 1
          %v3145 = vmax.f32 %v3143, %v3144
          %v3146 = vsel %vm2529, %v2238, -inf
          %v3147 = vrot.slane %v3146, 4
          %v3148 = vmax.f32 %v3146, %v3147
          %v3149 = vrot.slane %v3148, 2
          %v3150 = vmax.f32 %v3148, %v3149
          %v3151 = vrot.slane %v3150, 1
          %v3152 = vmax.f32 %v3150, %v3151
          %v3153 = vsel %vm2529, %v2246, -inf
          %v3154 = vrot.slane %v3153, 4
          %v3155 = vmax.f32 %v3153, %v3154
          %v3156 = vrot.slane %v3155, 2
          %v3157 = vmax.f32 %v3155, %v3156
          %v3158 = vrot.slane %v3157, 1
          %v3159 = vmax.f32 %v3157, %v3158
          %v3160 = vsel %vm2529, %v2245, -inf
          %v3161 = vrot.slane %v3160, 4
          %v3162 = vmax.f32 %v3160, %v3161
          %v3163 = vrot.slane %v3162, 2
          %v3164 = vmax.f32 %v3162, %v3163
          %v3165 = vrot.slane %v3164, 1
          %v3166 = vmax.f32 %v3164, %v3165
          %v3167 = vsel %vm2529, %v2247, -inf
          %v3168 = vrot.slane %v3167, 4
          %v3169 = vmax.f32 %v3167, %v3168
          %v3170 = vrot.slane %v3169, 2
          %v3171 = vmax.f32 %v3169, %v3170
          %v3172 = vrot.slane %v3171, 1
          %v3173 = vmax.f32 %v3171, %v3172
          %v3174 = vsel %vm2529, %v2255, -inf
          %v3175 = vrot.slane %v3174, 4
          %v3176 = vmax.f32 %v3174, %v3175
          %v3177 = vrot.slane %v3176, 2
          %v3178 = vmax.f32 %v3176, %v3177
          %v3179 = vrot.slane %v3178, 1
          %v3180 = vmax.f32 %v3178, %v3179
          %v3181 = vsel %vm2529, %v2263, -inf
          %v3182 = vrot.slane %v3181, 4
          %v3183 = vmax.f32 %v3181, %v3182
          %v3184 = vrot.slane %v3183, 2
          %v3185 = vmax.f32 %v3183, %v3184
          %v3186 = vrot.slane %v3185, 1
          %v3187 = vmax.f32 %v3185, %v3186
          %v3188 = vsel %vm2529, %v2262, -inf
          %v3189 = vrot.slane %v3188, 4
          %v3190 = vmax.f32 %v3188, %v3189
          %v3191 = vrot.slane %v3190, 2
          %v3192 = vmax.f32 %v3190, %v3191
          %v3193 = vrot.slane %v3192, 1
          %v3194 = vmax.f32 %v3192, %v3193
          %v3195 = vsel %vm2529, %v2264, -inf
          %v3196 = vrot.slane %v3195, 4
          %v3197 = vmax.f32 %v3195, %v3196
          %v3198 = vrot.slane %v3197, 2
          %v3199 = vmax.f32 %v3197, %v3198
          %v3200 = vrot.slane %v3199, 1
          %v3201 = vmax.f32 %v3199, %v3200
          %v3202 = vsel %vm2529, %v2272, -inf
          %v3203 = vrot.slane %v3202, 4
          %v3204 = vmax.f32 %v3202, %v3203
          %v3205 = vrot.slane %v3204, 2
          %v3206 = vmax.f32 %v3204, %v3205
          %v3207 = vrot.slane %v3206, 1
          %v3208 = vmax.f32 %v3206, %v3207
          %v3209 = vsel %vm2529, %v2280, -inf
          %v3210 = vrot.slane %v3209, 4
          %v3211 = vmax.f32 %v3209, %v3210
          %v3212 = vrot.slane %v3211, 2
          %v3213 = vmax.f32 %v3211, %v3212
          %v3214 = vrot.slane %v3213, 1
          %v3215 = vmax.f32 %v3213, %v3214
          %v3216 = vsel %vm2529, %v2279, -inf
          %v3217 = vrot.slane %v3216, 4
          %v3218 = vmax.f32 %v3216, %v3217
          %v3219 = vrot.slane %v3218, 2
          %v3220 = vmax.f32 %v3218, %v3219
          %v3221 = vrot.slane %v3220, 1
          %v3222 = vmax.f32 %v3220, %v3221
          %v3223 = vsel %vm2529, %v2281, -inf
          %v3224 = vrot.slane %v3223, 4
          %v3225 = vmax.f32 %v3223, %v3224
          %v3226 = vrot.slane %v3225, 2
          %v3227 = vmax.f32 %v3225, %v3226
          %v3228 = vrot.slane %v3227, 1
          %v3229 = vmax.f32 %v3227, %v3228
          %v3230 = vsel %vm2529, %v2289, -inf
          %v3231 = vrot.slane %v3230, 4
          %v3232 = vmax.f32 %v3230, %v3231
          %v3233 = vrot.slane %v3232, 2
          %v3234 = vmax.f32 %v3232, %v3233
          %v3235 = vrot.slane %v3234, 1
          %v3236 = vmax.f32 %v3234, %v3235
          %v3237 = vsel %vm2529, %v2297, -inf
          %v3238 = vrot.slane %v3237, 4
          %v3239 = vmax.f32 %v3237, %v3238
          %v3240 = vrot.slane %v3239, 2
          %v3241 = vmax.f32 %v3239, %v3240
          %v3242 = vrot.slane %v3241, 1
          %v3243 = vmax.f32 %v3241, %v3242
          %v3244 = vsel %vm2529, %v2296, -inf
          %v3245 = vrot.slane %v3244, 4
          %v3246 = vmax.f32 %v3244, %v3245
          %v3247 = vrot.slane %v3246, 2
          %v3248 = vmax.f32 %v3246, %v3247
          %v3249 = vrot.slane %v3248, 1
          %v3250 = vmax.f32 %v3248, %v3249
          %v3251 = vsel %vm2529, %v2298, -inf
          %v3252 = vrot.slane %v3251, 4
          %v3253 = vmax.f32 %v3251, %v3252
          %v3254 = vrot.slane %v3253, 2
          %v3255 = vmax.f32 %v3253, %v3254
          %v3256 = vrot.slane %v3255, 1
          %v3257 = vmax.f32 %v3255, %v3256
          %v3258 = vsel %vm2529, %v2306, -inf
          %v3259 = vrot.slane %v3258, 4
          %v3260 = vmax.f32 %v3258, %v3259
          %v3261 = vrot.slane %v3260, 2
          %v3262 = vmax.f32 %v3260, %v3261
          %v3263 = vrot.slane %v3262, 1
          %v3264 = vmax.f32 %v3262, %v3263
          %v3265 = vsel %vm2529, %v2314, -inf
          %v3266 = vrot.slane %v3265, 4
          %v3267 = vmax.f32 %v3265, %v3266
          %v3268 = vrot.slane %v3267, 2
          %v3269 = vmax.f32 %v3267, %v3268
          %v3270 = vrot.slane %v3269, 1
          %v3271 = vmax.f32 %v3269, %v3270
          %v3272 = vsel %vm2529, %v2313, -inf
          %v3273 = vrot.slane %v3272, 4
          %v3274 = vmax.f32 %v3272, %v3273
          %v3275 = vrot.slane %v3274, 2
          %v3276 = vmax.f32 %v3274, %v3275
          %v3277 = vrot.slane %v3276, 1
          %v3278 = vmax.f32 %v3276, %v3277
          %v3279 = vsel %vm2529, %v2315, -inf
          %v3280 = vrot.slane %v3279, 4
          %v3281 = vmax.f32 %v3279, %v3280
          %v3282 = vrot.slane %v3281, 2
          %v3283 = vmax.f32 %v3281, %v3282
          %v3284 = vrot.slane %v3283, 1
          %v3285 = vmax.f32 %v3283, %v3284
          %v3286 = vsel %vm2529, %v2323, -inf
          %v3287 = vrot.slane %v3286, 4
          %v3288 = vmax.f32 %v3286, %v3287
          %v3289 = vrot.slane %v3288, 2
          %v3290 = vmax.f32 %v3288, %v3289
          %v3291 = vrot.slane %v3290, 1
          %v3292 = vmax.f32 %v3290, %v3291
          %v3293 = vsel %vm2529, %v2331, -inf
          %v3294 = vrot.slane %v3293, 4
          %v3295 = vmax.f32 %v3293, %v3294
          %v3296 = vrot.slane %v3295, 2
          %v3297 = vmax.f32 %v3295, %v3296
          %v3298 = vrot.slane %v3297, 1
          %v3299 = vmax.f32 %v3297, %v3298
          %v3300 = vsel %vm2529, %v2330, -inf
          %v3301 = vrot.slane %v3300, 4
          %v3302 = vmax.f32 %v3300, %v3301
          %v3303 = vrot.slane %v3302, 2
          %v3304 = vmax.f32 %v3302, %v3303
          %v3305 = vrot.slane %v3304, 1
          %v3306 = vmax.f32 %v3304, %v3305
          %v3307 = vsel %vm2529, %v2332, -inf
          %v3308 = vrot.slane %v3307, 4
          %v3309 = vmax.f32 %v3307, %v3308
          %v3310 = vrot.slane %v3309, 2
          %v3311 = vmax.f32 %v3309, %v3310
          %v3312 = vrot.slane %v3311, 1
          %v3313 = vmax.f32 %v3311, %v3312
          %v3314 = vsel %vm2529, %v2340, -inf
          %v3315 = vrot.slane %v3314, 4
          %v3316 = vmax.f32 %v3314, %v3315
          %v3317 = vrot.slane %v3316, 2
          %v3318 = vmax.f32 %v3316, %v3317
          %v3319 = vrot.slane %v3318, 1
          %v3320 = vmax.f32 %v3318, %v3319
          %v3321 = vsel %vm2529, %v2348, -inf
          %v3322 = vrot.slane %v3321, 4
          %v3323 = vmax.f32 %v3321, %v3322
          %v3324 = vrot.slane %v3323, 2
          %v3325 = vmax.f32 %v3323, %v3324
          %v3326 = vrot.slane %v3325, 1
          %v3327 = vmax.f32 %v3325, %v3326
          %v3328 = vsel %vm2529, %v2347, -inf
          %v3329 = vrot.slane %v3328, 4
          %v3330 = vmax.f32 %v3328, %v3329
          %v3331 = vrot.slane %v3330, 2
          %v3332 = vmax.f32 %v3330, %v3331
          %v3333 = vrot.slane %v3332, 1
          %v3334 = vmax.f32 %v3332, %v3333
          %v3335 = vsel %vm2529, %v2349, -inf
          %v3336 = vrot.slane %v3335, 4
          %v3337 = vmax.f32 %v3335, %v3336
          %v3338 = vrot.slane %v3337, 2
          %v3339 = vmax.f32 %v3337, %v3338
          %v3340 = vrot.slane %v3339, 1
          %v3341 = vmax.f32 %v3339, %v3340
          %v3342 = vsel %vm2529, %v2357, -inf
          %v3343 = vrot.slane %v3342, 4
          %v3344 = vmax.f32 %v3342, %v3343
          %v3345 = vrot.slane %v3344, 2
          %v3346 = vmax.f32 %v3344, %v3345
          %v3347 = vrot.slane %v3346, 1
          %v3348 = vmax.f32 %v3346, %v3347
          %v3349 = vsel %vm2529, %v2365, -inf
          %v3350 = vrot.slane %v3349, 4
          %v3351 = vmax.f32 %v3349, %v3350
          %v3352 = vrot.slane %v3351, 2
          %v3353 = vmax.f32 %v3351, %v3352
          %v3354 = vrot.slane %v3353, 1
          %v3355 = vmax.f32 %v3353, %v3354
          %v3356 = vsel %vm2529, %v2364, -inf
          %v3357 = vrot.slane %v3356, 4
          %v3358 = vmax.f32 %v3356, %v3357
          %v3359 = vrot.slane %v3358, 2
          %v3360 = vmax.f32 %v3358, %v3359
          %v3361 = vrot.slane %v3360, 1
          %v3362 = vmax.f32 %v3360, %v3361
          %v3363 = vsel %vm2529, %v2366, -inf
          %v3364 = vrot.slane %v3363, 4
          %v3365 = vmax.f32 %v3363, %v3364
          %v3366 = vrot.slane %v3365, 2
          %v3367 = vmax.f32 %v3365, %v3366
          %v3368 = vrot.slane %v3367, 1
          %v3369 = vmax.f32 %v3367, %v3368
          %v3370 = vsel %vm2529, %v2374, -inf
          %v3371 = vrot.slane %v3370, 4
          %v3372 = vmax.f32 %v3370, %v3371
          %v3373 = vrot.slane %v3372, 2
          %v3374 = vmax.f32 %v3372, %v3373
          %v3375 = vrot.slane %v3374, 1
          %v3376 = vmax.f32 %v3374, %v3375
          %v3377 = vsel %vm2529, %v2382, -inf
          %v3378 = vrot.slane %v3377, 4
          %v3379 = vmax.f32 %v3377, %v3378
          %v3380 = vrot.slane %v3379, 2
          %v3381 = vmax.f32 %v3379, %v3380
          %v3382 = vrot.slane %v3381, 1
          %v3383 = vmax.f32 %v3381, %v3382
          %v3384 = vsel %vm2529, %v2381, -inf
          %v3385 = vrot.slane %v3384, 4
          %v3386 = vmax.f32 %v3384, %v3385
          %v3387 = vrot.slane %v3386, 2
          %v3388 = vmax.f32 %v3386, %v3387
          %v3389 = vrot.slane %v3388, 1
          %v3390 = vmax.f32 %v3388, %v3389
          %v3391 = vsel %vm2529, %v2383, -inf
          %v3392 = vrot.slane %v3391, 4
          %v3393 = vmax.f32 %v3391, %v3392
          %v3394 = vrot.slane %v3393, 2
          %v3395 = vmax.f32 %v3393, %v3394
          %v3396 = vrot.slane %v3395, 1
          %v3397 = vmax.f32 %v3395, %v3396
          %v3398 = vsel %vm2529, %v2391, -inf
          %v3399 = vrot.slane %v3398, 4
          %v3400 = vmax.f32 %v3398, %v3399
          %v3401 = vrot.slane %v3400, 2
          %v3402 = vmax.f32 %v3400, %v3401
          %v3403 = vrot.slane %v3402, 1
          %v3404 = vmax.f32 %v3402, %v3403
          %v3405 = vsel %vm2529, %v2399, -inf
          %v3406 = vrot.slane %v3405, 4
          %v3407 = vmax.f32 %v3405, %v3406
          %v3408 = vrot.slane %v3407, 2
          %v3409 = vmax.f32 %v3407, %v3408
          %v3410 = vrot.slane %v3409, 1
          %v3411 = vmax.f32 %v3409, %v3410
          %v3412 = vsel %vm2529, %v2398, -inf
          %v3413 = vrot.slane %v3412, 4
          %v3414 = vmax.f32 %v3412, %v3413
          %v3415 = vrot.slane %v3414, 2
          %v3416 = vmax.f32 %v3414, %v3415
          %v3417 = vrot.slane %v3416, 1
          %v3418 = vmax.f32 %v3416, %v3417
          %v3419 = vsel %vm2529, %v2400, -inf
          %v3420 = vrot.slane %v3419, 4
          %v3421 = vmax.f32 %v3419, %v3420
          %v3422 = vrot.slane %v3421, 2
          %v3423 = vmax.f32 %v3421, %v3422
          %v3424 = vrot.slane %v3423, 1
          %v3425 = vmax.f32 %v3423, %v3424
          %vm3426 = vcmask 64512
          %v3427 = vsel %vm3426, %v2536, -inf
          %v3428 = vsel %vm3426, %v2592, -inf
          %v3429 = vmax.f32 %v3427, %v3428
          %v3430 = vsel %vm3426, %v2543, -inf
          %v3431 = vsel %vm3426, %v2599, -inf
          %v3432 = vmax.f32 %v3430, %v3431
          %v3433 = vsel %vm3426, %v2550, -inf
          %v3434 = vsel %vm3426, %v2606, -inf
          %v3435 = vmax.f32 %v3433, %v3434
          %v3436 = vsel %vm3426, %v2557, -inf
          %v3437 = vsel %vm3426, %v2613, -inf
          %v3438 = vmax.f32 %v3436, %v3437
          %v3439 = vsel %vm3426, %v2564, -inf
          %v3440 = vsel %vm3426, %v2620, -inf
          %v3441 = vmax.f32 %v3439, %v3440
          %v3442 = vsel %vm3426, %v2571, -inf
          %v3443 = vsel %vm3426, %v2627, -inf
          %v3444 = vmax.f32 %v3442, %v3443
          %v3445 = vsel %vm3426, %v2578, -inf
          %v3446 = vsel %vm3426, %v2634, -inf
          %v3447 = vmax.f32 %v3445, %v3446
          %v3448 = vsel %vm3426, %v2585, -inf
          %v3449 = vsel %vm3426, %v2641, -inf
          %v3450 = vmax.f32 %v3448, %v3449
          %v3451 = vsel %vm3426, %v2648, -inf
          %v3452 = vsel %vm3426, %v2704, -inf
          %v3453 = vmax.f32 %v3451, %v3452
          %v3454 = vsel %vm3426, %v2655, -inf
          %v3455 = vsel %vm3426, %v2711, -inf
          %v3456 = vmax.f32 %v3454, %v3455
          %v3457 = vsel %vm3426, %v2662, -inf
          %v3458 = vsel %vm3426, %v2718, -inf
          %v3459 = vmax.f32 %v3457, %v3458
          %v3460 = vsel %vm3426, %v2669, -inf
          %v3461 = vsel %vm3426, %v2725, -inf
          %v3462 = vmax.f32 %v3460, %v3461
          %v3463 = vsel %vm3426, %v2676, -inf
          %v3464 = vsel %vm3426, %v2732, -inf
          %v3465 = vmax.f32 %v3463, %v3464
          %v3466 = vsel %vm3426, %v2683, -inf
          %v3467 = vsel %vm3426, %v2739, -inf
          %v3468 = vmax.f32 %v3466, %v3467
          %v3469 = vsel %vm3426, %v2690, -inf
          %v3470 = vsel %vm3426, %v2746, -inf
          %v3471 = vmax.f32 %v3469, %v3470
          %v3472 = vsel %vm3426, %v2697, -inf
          %v3473 = vsel %vm3426, %v2753, -inf
          %v3474 = vmax.f32 %v3472, %v3473
          %v3475 = vsel %vm3426, %v2760, -inf
          %v3476 = vsel %vm3426, %v2816, -inf
          %v3477 = vmax.f32 %v3475, %v3476
          %v3478 = vsel %vm3426, %v2767, -inf
          %v3479 = vsel %vm3426, %v2823, -inf
          %v3480 = vmax.f32 %v3478, %v3479
          %v3481 = vsel %vm3426, %v2774, -inf
          %v3482 = vsel %vm3426, %v2830, -inf
          %v3483 = vmax.f32 %v3481, %v3482
          %v3484 = vsel %vm3426, %v2781, -inf
          %v3485 = vsel %vm3426, %v2837, -inf
          %v3486 = vmax.f32 %v3484, %v3485
          %v3487 = vsel %vm3426, %v2788, -inf
          %v3488 = vsel %vm3426, %v2844, -inf
          %v3489 = vmax.f32 %v3487, %v3488
          %v3490 = vsel %vm3426, %v2795, -inf
          %v3491 = vsel %vm3426, %v2851, -inf
          %v3492 = vmax.f32 %v3490, %v3491
          %v3493 = vsel %vm3426, %v2802, -inf
          %v3494 = vsel %vm3426, %v2858, -inf
          %v3495 = vmax.f32 %v3493, %v3494
          %v3496 = vsel %vm3426, %v2809, -inf
          %v3497 = vsel %vm3426, %v2865, -inf
          %v3498 = vmax.f32 %v3496, %v3497
          %v3499 = vsel %vm3426, %v2872, -inf
          %v3500 = vsel %vm3426, %v2928, -inf
          %v3501 = vmax.f32 %v3499, %v3500
          %v3502 = vsel %vm3426, %v2879, -inf
          %v3503 = vsel %vm3426, %v2935, -inf
          %v3504 = vmax.f32 %v3502, %v3503
          %v3505 = vsel %vm3426, %v2886, -inf
          %v3506 = vsel %vm3426, %v2942, -inf
          %v3507 = vmax.f32 %v3505, %v3506
          %v3508 = vsel %vm3426, %v2893, -inf
          %v3509 = vsel %vm3426, %v2949, -inf
          %v3510 = vmax.f32 %v3508, %v3509
          %v3511 = vsel %vm3426, %v2900, -inf
          %v3512 = vsel %vm3426, %v2956, -inf
          %v3513 = vmax.f32 %v3511, %v3512
          %v3514 = vsel %vm3426, %v2907, -inf
          %v3515 = vsel %vm3426, %v2963, -inf
          %v3516 = vmax.f32 %v3514, %v3515
          %v3517 = vsel %vm3426, %v2914, -inf
          %v3518 = vsel %vm3426, %v2970, -inf
          %v3519 = vmax.f32 %v3517, %v3518
          %v3520 = vsel %vm3426, %v2921, -inf
          %v3521 = vsel %vm3426, %v2977, -inf
          %v3522 = vmax.f32 %v3520, %v3521
          %v3523 = vsel %vm3426, %v2984, -inf
          %v3524 = vsel %vm3426, %v3040, -inf
          %v3525 = vmax.f32 %v3523, %v3524
          %v3526 = vsel %vm3426, %v2991, -inf
          %v3527 = vsel %vm3426, %v3047, -inf
          %v3528 = vmax.f32 %v3526, %v3527
          %v3529 = vsel %vm3426, %v2998, -inf
          %v3530 = vsel %vm3426, %v3054, -inf
          %v3531 = vmax.f32 %v3529, %v3530
          %v3532 = vsel %vm3426, %v3005, -inf
          %v3533 = vsel %vm3426, %v3061, -inf
          %v3534 = vmax.f32 %v3532, %v3533
          %v3535 = vsel %vm3426, %v3012, -inf
          %v3536 = vsel %vm3426, %v3068, -inf
          %v3537 = vmax.f32 %v3535, %v3536
          %v3538 = vsel %vm3426, %v3019, -inf
          %v3539 = vsel %vm3426, %v3075, -inf
          %v3540 = vmax.f32 %v3538, %v3539
          %v3541 = vsel %vm3426, %v3026, -inf
          %v3542 = vsel %vm3426, %v3082, -inf
          %v3543 = vmax.f32 %v3541, %v3542
          %v3544 = vsel %vm3426, %v3033, -inf
          %v3545 = vsel %vm3426, %v3089, -inf
          %v3546 = vmax.f32 %v3544, %v3545
          %v3547 = vsel %vm3426, %v3096, -inf
          %v3548 = vsel %vm3426, %v3152, -inf
          %v3549 = vmax.f32 %v3547, %v3548
          %v3550 = vsel %vm3426, %v3103, -inf
          %v3551 = vsel %vm3426, %v3159, -inf
          %v3552 = vmax.f32 %v3550, %v3551
          %v3553 = vsel %vm3426, %v3110, -inf
          %v3554 = vsel %vm3426, %v3166, -inf
          %v3555 = vmax.f32 %v3553, %v3554
          %v3556 = vsel %vm3426, %v3117, -inf
          %v3557 = vsel %vm3426, %v3173, -inf
          %v3558 = vmax.f32 %v3556, %v3557
          %v3559 = vsel %vm3426, %v3124, -inf
          %v3560 = vsel %vm3426, %v3180, -inf
          %v3561 = vmax.f32 %v3559, %v3560
          %v3562 = vsel %vm3426, %v3131, -inf
          %v3563 = vsel %vm3426, %v3187, -inf
          %v3564 = vmax.f32 %v3562, %v3563
          %v3565 = vsel %vm3426, %v3138, -inf
          %v3566 = vsel %vm3426, %v3194, -inf
          %v3567 = vmax.f32 %v3565, %v3566
          %v3568 = vsel %vm3426, %v3145, -inf
          %v3569 = vsel %vm3426, %v3201, -inf
          %v3570 = vmax.f32 %v3568, %v3569
          %v3571 = vsel %vm3426, %v3208, -inf
          %v3572 = vsel %vm3426, %v3264, -inf
          %v3573 = vmax.f32 %v3571, %v3572
          %v3574 = vsel %vm3426, %v3215, -inf
          %v3575 = vsel %vm3426, %v3271, -inf
          %v3576 = vmax.f32 %v3574, %v3575
          %v3577 = vsel %vm3426, %v3222, -inf
          %v3578 = vsel %vm3426, %v3278, -inf
          %v3579 = vmax.f32 %v3577, %v3578
          %v3580 = vsel %vm3426, %v3229, -inf
          %v3581 = vsel %vm3426, %v3285, -inf
          %v3582 = vmax.f32 %v3580, %v3581
          %v3583 = vsel %vm3426, %v3236, -inf
          %v3584 = vsel %vm3426, %v3292, -inf
          %v3585 = vmax.f32 %v3583, %v3584
          %v3586 = vsel %vm3426, %v3243, -inf
          %v3587 = vsel %vm3426, %v3299, -inf
          %v3588 = vmax.f32 %v3586, %v3587
          %v3589 = vsel %vm3426, %v3250, -inf
          %v3590 = vsel %vm3426, %v3306, -inf
          %v3591 = vmax.f32 %v3589, %v3590
          %v3592 = vsel %vm3426, %v3257, -inf
          %v3593 = vsel %vm3426, %v3313, -inf
          %v3594 = vmax.f32 %v3592, %v3593
          %v3595 = vsel %vm3426, %v3320, -inf
          %v3596 = vsel %vm3426, %v3376, -inf
          %v3597 = vmax.f32 %v3595, %v3596
          %v3598 = vsel %vm3426, %v3327, -inf
          %v3599 = vsel %vm3426, %v3383, -inf
          %v3600 = vmax.f32 %v3598, %v3599
          %v3601 = vsel %vm3426, %v3334, -inf
          %v3602 = vsel %vm3426, %v3390, -inf
          %v3603 = vmax.f32 %v3601, %v3602
          %v3604 = vsel %vm3426, %v3341, -inf
          %v3605 = vsel %vm3426, %v3397, -inf
          %v3606 = vmax.f32 %v3604, %v3605
          %v3607 = vsel %vm3426, %v3348, -inf
          %v3608 = vsel %vm3426, %v3404, -inf
          %v3609 = vmax.f32 %v3607, %v3608
          %v3610 = vsel %vm3426, %v3355, -inf
          %v3611 = vsel %vm3426, %v3411, -inf
          %v3612 = vmax.f32 %v3610, %v3611
          %v3613 = vsel %vm3426, %v3362, -inf
          %v3614 = vsel %vm3426, %v3418, -inf
          %v3615 = vmax.f32 %v3613, %v3614
          %v3616 = vsel %vm3426, %v3369, -inf
          %v3617 = vsel %vm3426, %v3425, -inf
          %v3618 = vmax.f32 %v3616, %v3617
          %vm3683 = vcmask 1041409
          %v3684 = vsel %vm3683, %v3432, %v3429
          %vm3685 = vcmask 1042434
          %v3686 = vsel %vm3685, %v3435, %v3684
          %vm3687 = vcmask 1043459
          %v3688 = vsel %vm3687, %v3438, %v3686
          %vm3689 = vcmask 1044484
          %v3690 = vsel %vm3689, %v3441, %v3688
          %vm3691 = vcmask 1045509
          %v3692 = vsel %vm3691, %v3444, %v3690
          %vm3693 = vcmask 1046534
          %v3694 = vsel %vm3693, %v3447, %v3692
          %vm3695 = vcmask 1047559
          %v3696 = vsel %vm3695, %v3450, %v3694
          %v3697 = vsel %vm3683, %v3456, %v3453
          %v3698 = vsel %vm3685, %v3459, %v3697
          %v3699 = vsel %vm3687, %v3462, %v3698
          %v3700 = vsel %vm3689, %v3465, %v3699
          %v3701 = vsel %vm3691, %v3468, %v3700
          %v3702 = vsel %vm3693, %v3471, %v3701
          %v3703 = vsel %vm3695, %v3474, %v3702
          %v3704 = vsel %vm3683, %v3480, %v3477
          %v3705 = vsel %vm3685, %v3483, %v3704
          %v3706 = vsel %vm3687, %v3486, %v3705
          %v3707 = vsel %vm3689, %v3489, %v3706
          %v3708 = vsel %vm3691, %v3492, %v3707
          %v3709 = vsel %vm3693, %v3495, %v3708
          %v3710 = vsel %vm3695, %v3498, %v3709
          %v3711 = vsel %vm3683, %v3504, %v3501
          %v3712 = vsel %vm3685, %v3507, %v3711
          %v3713 = vsel %vm3687, %v3510, %v3712
          %v3714 = vsel %vm3689, %v3513, %v3713
          %v3715 = vsel %vm3691, %v3516, %v3714
          %v3716 = vsel %vm3693, %v3519, %v3715
          %v3717 = vsel %vm3695, %v3522, %v3716
          %v3718 = vsel %vm3683, %v3528, %v3525
          %v3719 = vsel %vm3685, %v3531, %v3718
          %v3720 = vsel %vm3687, %v3534, %v3719
          %v3721 = vsel %vm3689, %v3537, %v3720
          %v3722 = vsel %vm3691, %v3540, %v3721
          %v3723 = vsel %vm3693, %v3543, %v3722
          %v3724 = vsel %vm3695, %v3546, %v3723
          %v3725 = vsel %vm3683, %v3552, %v3549
          %v3726 = vsel %vm3685, %v3555, %v3725
          %v3727 = vsel %vm3687, %v3558, %v3726
          %v3728 = vsel %vm3689, %v3561, %v3727
          %v3729 = vsel %vm3691, %v3564, %v3728
          %v3730 = vsel %vm3693, %v3567, %v3729
          %v3731 = vsel %vm3695, %v3570, %v3730
          %v3732 = vsel %vm3683, %v3576, %v3573
          %v3733 = vsel %vm3685, %v3579, %v3732
          %v3734 = vsel %vm3687, %v3582, %v3733
          %v3735 = vsel %vm3689, %v3585, %v3734
          %v3736 = vsel %vm3691, %v3588, %v3735
          %v3737 = vsel %vm3693, %v3591, %v3736
          %v3738 = vsel %vm3695, %v3594, %v3737
          %v3739 = vsel %vm3683, %v3600, %v3597
          %v3740 = vsel %vm3685, %v3603, %v3739
          %v3741 = vsel %vm3687, %v3606, %v3740
          %v3742 = vsel %vm3689, %v3609, %v3741
          %v3743 = vsel %vm3691, %v3612, %v3742
          %v3744 = vsel %vm3693, %v3615, %v3743
          %v3745 = vsel %vm3695, %v3618, %v3744
          %3754 = vst.msk [vmem:[%s219] sm:$0xff] %vm3426, %v3696
          %3755 = vst.msk [vmem:[%s219 + $0x8] sm:$0xff] %vm3426, %v3703
          %3756 = vst.msk [vmem:[%s219 + $0x10] sm:$0xff] %vm3426, %v3710
          %3757 = vst.msk [vmem:[%s219 + $0x18] sm:$0xff] %vm3426, %v3717
          %3758 = vst.msk [vmem:[%s219 + $0x20] sm:$0xff] %vm3426, %v3724
          %3759 = vst.msk [vmem:[%s219 + $0x28] sm:$0xff] %vm3426, %v3731
          %3760 = vst.msk [vmem:[%s219 + $0x30] sm:$0xff] %vm3426, %v3738
          %3761 = vst.msk [vmem:[%s219 + $0x38] sm:$0xff] %vm3426, %v3745
        $region48: #{tpu_custom_call.1} parent=35 // pred_fallthru
          _
        %s3762 = sand.u32 %s135, 1
        %s3763 = scalar_lea.sflag [#allocation8], %s3762
        %s3764 = sand.u32 %s135, 1
        %s3765 = smul.addr %s3764, 64
        %s3766 = scalar_lea.vmem [#allocation7], %s3765
        // Predicated region
        $region53: #{tpu_custom_call.1} parent=35 // pred_check
          %p3767 = pneg %p145
        $region54: #{tpu_custom_call.1} parent=35 // pred_check_branch
          %3769 = sbr.rel (%p3767) target = $region56
        $region55: #{tpu_custom_call.1} parent=35 // pred_region
          %s3770 = smul.u32 %s22, %s23
          %s3772 = ssub.s32 1024, 1024
          %3773 = vsyncadd %s3763, %s3772
          %s3774 = smul.addr %s3770, 8
          %s3775 = smul.addr %s3774, 128
          %s3776 = scalar_lea.hbm %s4, %s3775
          %s3777 = sshll.u32 %s3766, 4
          %s3778 = int_to_ptr.vmem [resolvable:$true] %s3777
          %3783 = dma.vmem_to_hbm [thread:$0]  %s3778, 1024, %s3776, %s3763, 128, 128, 8
        $region56: #{tpu_custom_call.1} parent=35 // pred_fallthru
          _
      $region36: #{tpu_custom_call.1} parent=5 // pred_fallthru
        _
      %p3784 = scmp.le.s32.totalorder 2, %s13
      // Predicated region
      $region57: #{tpu_custom_call.1} parent=5 // pred_check
        %p3785 = pneg %p3784
      $region58: #{tpu_custom_call.1} parent=5 // pred_check_branch
        %3787 = sbr.rel (%p3785) target = $region60
      $region59: #{tpu_custom_call.1} parent=5 // pred_region
        %s3788 = ssub.s32 %s13, 2
        // Predicated region
        $region61: #{tpu_custom_call.1} parent=59 // pred_check
          %p3789 = pneg %p151
        $region62: #{tpu_custom_call.1} parent=59 // pred_check_branch
          %3791 = sbr.rel (%p3789) target = $region64
        $region63: #{tpu_custom_call.1} parent=59 // pred_region
          %s3792 = sand.u32 %s136, 1
          %s3793 = scalar_lea.sflag [#allocation8], %s3792
          %s3794 = sand.u32 %s136, 1
          %s3795 = smul.addr %s3794, 64
          %s3796 = scalar_lea.vmem [#allocation7], %s3795
          %3797 = dma.done %s3793, 1024
        $region64: #{tpu_custom_call.1} parent=59 // pred_fallthru
          _
      $region60: #{tpu_custom_call.1} parent=5 // pred_fallthru
        _
    $region6: #{tpu_custom_call.1} parent=1 // loop_footer
      %s17 = sadd.s32 1, %s13
    $region7: #{tpu_custom_call.1} parent=1 // loop_footer_branch
      %12 = sbr.rel target = $region3
    $region8: #{tpu_custom_call.1} parent=1 // loop_exit
      _
    %3798 = vsyncpa [#allocation8], 1
    %s3799 = scalar_lea.sflag [#allocation8], 1
    %3800 = vsyncpa %s3799, 1

</llo_original>
